<compile_context>
chip_gen: v5e
topology: v5e:2x2
jax: 0.10.0
libtpu: 0.0.40
codegen_flags: <defaults>
</compile_context>

<pallas_src>
import jax
import jax.numpy as jnp
from jax.experimental import pallas as pl
from jax.experimental.pallas import tpu as pltpu


def lstm_model_kernel(x_ref, wih0_ref, wihr_ref, whh_ref, wfc1_ref, wfc2_ref,
                      out_ref):
    B, out_dim = out_ref.shape
    TB, S = x_ref.shape
    T = TB // B
    L, H, H4 = whh_ref.shape
    H3 = 3 * H

    # BatchNorm1d(seq_len), eval mode with default running stats / init params.
    bn_scale = 1.0 / jnp.sqrt(1.0 + 1e-5)
    layer_in = x_ref[...] * bn_scale                  # (T*B, S), time-major rows

    hn_list = []
    for l in range(L):                                # static: fully unrolled
        whh = whh_ref[l]                              # (H, 4H)
        wih = wih0_ref[...] if l == 0 else wihr_ref[l - 1]
        # Hoisted input projection for the whole sequence of this layer.
        xg = jnp.dot(layer_in, wih,
                     preferred_element_type=jnp.float32)             # (T*B, 4H)

        hs = []
        h = None
        c = None
        for t in range(T):                            # static: fully unrolled
            xg_t = xg[t * B:(t + 1) * B, :]           # (B, 4H)
            if t == 0:
                g = xg_t                              # h0 = 0 -> skip matmul
            else:
                g = xg_t + jnp.dot(h, whh, preferred_element_type=jnp.float32)
            # gate order (i, f, o, g): one sigmoid over 3H lanes, one tanh over H.
            sg = jax.nn.sigmoid(g[:, :H3])
            gg = jnp.tanh(g[:, H3:])
            if t == 0:
                c = sg[:, :H] * gg                    # c0 = 0 -> no forget term
            else:
                c = sg[:, H:2 * H] * c + sg[:, :H] * gg
            h = sg[:, 2 * H:H3] * jnp.tanh(c)
            hs.append(h)
        if l < L - 1:
            layer_in = jnp.concatenate(hs, axis=0)    # (T*B, H), stays in vregs
        hn_list.append(h)

    # hn normalization over ALL layers (torch: hn.mean(), hn.std() unbiased).
    hn_all = jnp.concatenate(hn_list, axis=0)         # (L*B, H)
    n = L * B * H
    mean = jnp.sum(hn_all) / n
    var = jnp.sum((hn_all - mean) ** 2) / (n - 1)
    inv_std = jax.lax.rsqrt(var)
    hn_out = (hn_list[-1] - mean) * inv_std           # (B, H)

    z = jnp.dot(hn_out, wfc1_ref[...], preferred_element_type=jnp.float32)
    z = z * jax.nn.sigmoid(z)                         # SiLU (dropout = identity)
    out_ref[...] = jnp.dot(z, wfc2_ref[...], preferred_element_type=jnp.float32)


def lstm_model_forward(x, wih0, wih_rest, whh_all, wfc1, wfc2):
    B, T, S = x.shape
    L, H, H4 = whh_all.shape
    out_dim = wfc2.shape[1]

    # time-major, flattened to (T*B, S) so timestep t is rows [t*B, (t+1)*B)
    x_tm = jnp.transpose(x, (1, 0, 2)).reshape(T * B, S)

    return pl.pallas_call(
        lstm_model_kernel,
        out_shape=jax.ShapeDtypeStruct((B, out_dim), jnp.float32),
        grid_spec=pltpu.PrefetchScalarGridSpec(
            num_scalar_prefetch=0,
            grid=(1,),                                # single step: no pipeline overhead
            in_specs=[
                pl.BlockSpec((T * B, S), lambda i: (0, 0)),
                pl.BlockSpec((S, H4), lambda i: (0, 0)),
                pl.BlockSpec((L - 1, H, H4), lambda i: (0, 0, 0)),
                pl.BlockSpec((L, H, H4), lambda i: (0, 0, 0)),
                pl.BlockSpec(wfc1.shape, lambda i: (0, 0)),
                pl.BlockSpec(wfc2.shape, lambda i: (0, 0)),
            ],
            out_specs=pl.BlockSpec((B, out_dim), lambda i: (0, 0)),
        ),
        compiler_params=pltpu.CompilerParams(
            dimension_semantics=("arbitrary",)),
    )(x_tm, wih0, wih_rest, whh_all, wfc1, wfc2)


if __name__ == "__main__":
    # small shapes consistent with the module's forward
    B, F, S = 2, 4, 8          # batch, num_features (LSTM seq len), seq_len (LSTM input size)
    INPUT_SIZE = 16            # fc2 output
    H = 32                     # hidden_size  (4H = 128, lane aligned)
    L = 8                      # num_layers

    key = jax.random.PRNGKey(0)
    keys = jax.random.split(key, 2 * L + 3)

    def xavier(k, shape):      # deterministic xavier_uniform_-style init
        fan_out, fan_in = shape
        limit = (6.0 / (fan_in + fan_out)) ** 0.5
        return jax.random.uniform(k, shape, jnp.float32, -limit, limit)

    def permute_gates_t(w):
        # w: torch layout (4H, in), gate blocks (i, f, g, o) -> kernel layout
        # (in, 4H) with gate blocks (i, f, o, g).
        i_b, f_b, g_b, o_b = jnp.split(w, 4, axis=0)
        return jnp.concatenate([i_b, f_b, o_b, g_b], axis=0).T

    w_ih_raw, w_hh_raw = [], []
    for layer in range(L):
        in_l = S if layer == 0 else H
        w_ih_raw.append(xavier(keys[2 * layer], (4 * H, in_l)))      # torch (4H, in)
        w_hh_raw.append(xavier(keys[2 * layer + 1], (4 * H, H)))     # torch (4H, H)

    wih0 = permute_gates_t(w_ih_raw[0])                              # (S, 4H)
    wih_rest = jnp.stack([permute_gates_t(w) for w in w_ih_raw[1:]]) # (L-1, H, 4H)
    whh_all = jnp.stack([permute_gates_t(w) for w in w_hh_raw])      # (L, H, 4H)
    wfc1 = xavier(keys[2 * L], (64, H)).T                            # (H, 64)
    wfc2 = xavier(keys[2 * L + 1], (INPUT_SIZE, 64)).T               # (64, INPUT_SIZE)
    # all biases are zero-initialized by the module -> omitted

    x = jax.random.normal(keys[2 * L + 2], (B, F, S), jnp.float32)

    out = jax.block_until_ready(
        lstm_model_forward(x, wih0, wih_rest, whh_all, wfc1, wfc2))

    # pure-JAX reference (original torch gate order i,f,g,o; checks the permutation too)
    def reference(x):
        inp = x * (1.0 / jnp.sqrt(1.0 + 1e-5))                       # (B, F, S)
        hn_list = []
        cur = inp
        for layer in range(L):
            wih = w_ih_raw[layer]                                    # (4H, in)
            whh = w_hh_raw[layer]                                    # (4H, H)
            h = jnp.zeros((B, H), jnp.float32)
            c = jnp.zeros((B, H), jnp.float32)
            outs = []
            for t in range(F):
                g = cur[:, t, :] @ wih.T + h @ whh.T
                i = jax.nn.sigmoid(g[:, :H]); f = jax.nn.sigmoid(g[:, H:2 * H])
                gg = jnp.tanh(g[:, 2 * H:3 * H]); o = jax.nn.sigmoid(g[:, 3 * H:])
                c = f * c + i * gg
                h = o * jnp.tanh(c)
                outs.append(h)
            cur = jnp.stack(outs, axis=1)
            hn_list.append(h)
        hn = jnp.stack(hn_list, 0)
        mean = hn.mean()
        std = jnp.sqrt(jnp.sum((hn - mean) ** 2) / (hn.size - 1))    # unbiased
        z = ((hn[-1] - mean) / std) @ wfc1
        z = z * jax.nn.sigmoid(z)
        return z @ wfc2

    ref = jax.block_until_ready(reference(x))
    assert out.shape == (B, INPUT_SIZE)
    assert jnp.allclose(out, ref, rtol=2e-3, atol=2e-3)
    print("KERNEL_OK")
</pallas_src>

<mosaic_0001>
module attributes {stable_mosaic.version = 11 : i64} {
  func.func @lstm_model_kernel(%arg0: i32, %arg1: memref<8x8xf32, #tpu.memory_space<vmem>>, %arg2: memref<8x128xf32, #tpu.memory_space<vmem>>, %arg3: memref<7x32x128xf32, #tpu.memory_space<vmem>>, %arg4: memref<8x32x128xf32, #tpu.memory_space<vmem>>, %arg5: memref<32x64xf32, #tpu.memory_space<vmem>>, %arg6: memref<64x16xf32, #tpu.memory_space<vmem>>, %arg7: memref<2x16xf32, #tpu.memory_space<vmem>>) attributes {dimension_semantics = [#tpu.dimension_semantics<arbitrary>], iteration_bounds = array<i64: 1>, scalar_prefetch = 0 : i64, scratch_operands = 0 : i64, tpu.core_type = #tpu.core_type<tc>, window_params = [{pipeline_mode = #tpu.pipeline_mode<synchronous>, transform_indices = @transform_0, window_bounds = array<i64: 8, 8>}, {pipeline_mode = #tpu.pipeline_mode<synchronous>, transform_indices = @transform_1, window_bounds = array<i64: 8, 128>}, {pipeline_mode = #tpu.pipeline_mode<synchronous>, transform_indices = @transform_2, window_bounds = array<i64: 7, 32, 128>}, {pipeline_mode = #tpu.pipeline_mode<synchronous>, transform_indices = @transform_3, window_bounds = array<i64: 8, 32, 128>}, {pipeline_mode = #tpu.pipeline_mode<synchronous>, transform_indices = @transform_4, window_bounds = array<i64: 32, 64>}, {pipeline_mode = #tpu.pipeline_mode<synchronous>, transform_indices = @transform_5, window_bounds = array<i64: 64, 16>}, {pipeline_mode = #tpu.pipeline_mode<synchronous>, transform_indices = @transform_6, window_bounds = array<i64: 2, 16>}]} {
    %cst = arith.constant 1.000010e+00 : f32
    %0 = math.sqrt %cst : f32
    %cst_0 = arith.constant 1.000000e+00 : f32
    %1 = arith.divf %cst_0, %0 : f32
    %c0 = arith.constant 0 : index
    %c0_1 = arith.constant 0 : index
    %2 = vector.load %arg1[%c0, %c0_1] : memref<8x8xf32, #tpu.memory_space<vmem>>, vector<8x8xf32>
    %3 = vector.broadcast %1 : f32 to vector<8x8xf32>
    %4 = arith.mulf %2, %3 : vector<8x8xf32>
    %c0_2 = arith.constant 0 : index
    %c0_3 = arith.constant 0 : index
    %c0_4 = arith.constant 0 : index
    %5 = vector.load %arg4[%c0_2, %c0_3, %c0_4] : memref<8x32x128xf32, #tpu.memory_space<vmem>>, vector<1x32x128xf32>
    %6 = vector.shape_cast %5 : vector<1x32x128xf32> to vector<32x128xf32>
    %c0_5 = arith.constant 0 : index
    %c0_6 = arith.constant 0 : index
    %7 = vector.load %arg2[%c0_5, %c0_6] : memref<8x128xf32, #tpu.memory_space<vmem>>, vector<8x128xf32>
    %cst_7 = arith.constant dense<0.000000e+00> : vector<8x128xf32>
    %8 = tpu.matmul %4, %7, %cst_7 {dimension_numbers = #tpu.dot_dimension_numbers<[1], [0], [0], [1], [0, 0, 1, 1], [], []>} : vector<8x8xf32>, vector<8x128xf32>, vector<8x128xf32> -> vector<8x128xf32>
    %9 = vector.extract_strided_slice %8 {offsets = [0, 0], sizes = [2, 128], strides = [1, 1]} : vector<8x128xf32> to vector<2x128xf32>
    %10 = vector.extract_strided_slice %9 {offsets = [0, 0], sizes = [2, 96], strides = [1, 1]} : vector<2x128xf32> to vector<2x96xf32>
    %11 = arith.negf %10 : vector<2x96xf32>
    %12 = math.exp %11 : vector<2x96xf32>
    %cst_8 = arith.constant 1.000000e+00 : f32
    %13 = vector.broadcast %cst_8 : f32 to vector<2x96xf32>
    %14 = arith.addf %13, %12 : vector<2x96xf32>
    %15 = arith.divf %13, %14 : vector<2x96xf32>
    %16 = vector.extract_strided_slice %9 {offsets = [0, 96], sizes = [2, 32], strides = [1, 1]} : vector<2x128xf32> to vector<2x32xf32>
    %17 = math.tanh %16 : vector<2x32xf32>
    %18 = vector.extract_strided_slice %15 {offsets = [0, 0], sizes = [2, 32], strides = [1, 1]} : vector<2x96xf32> to vector<2x32xf32>
    %19 = arith.mulf %18, %17 : vector<2x32xf32>
    %20 = vector.extract_strided_slice %15 {offsets = [0, 64], sizes = [2, 32], strides = [1, 1]} : vector<2x96xf32> to vector<2x32xf32>
    %21 = math.tanh %19 : vector<2x32xf32>
    %22 = arith.mulf %20, %21 : vector<2x32xf32>
    %23 = vector.extract_strided_slice %8 {offsets = [2, 0], sizes = [2, 128], strides = [1, 1]} : vector<8x128xf32> to vector<2x128xf32>
    %cst_9 = arith.constant dense<0.000000e+00> : vector<2x128xf32>
    %24 = tpu.matmul %22, %6, %cst_9 {dimension_numbers = #tpu.dot_dimension_numbers<[1], [0], [0], [1], [0, 0, 1, 1], [], []>} : vector<2x32xf32>, vector<32x128xf32>, vector<2x128xf32> -> vector<2x128xf32>
    %25 = arith.addf %23, %24 : vector<2x128xf32>
    %26 = vector.extract_strided_slice %25 {offsets = [0, 0], sizes = [2, 96], strides = [1, 1]} : vector<2x128xf32> to vector<2x96xf32>
    %27 = arith.negf %26 : vector<2x96xf32>
    %28 = math.exp %27 : vector<2x96xf32>
    %cst_10 = arith.constant 1.000000e+00 : f32
    %29 = vector.broadcast %cst_10 : f32 to vector<2x96xf32>
    %30 = arith.addf %29, %28 : vector<2x96xf32>
    %31 = arith.divf %29, %30 : vector<2x96xf32>
    %32 = vector.extract_strided_slice %25 {offsets = [0, 96], sizes = [2, 32], strides = [1, 1]} : vector<2x128xf32> to vector<2x32xf32>
    %33 = math.tanh %32 : vector<2x32xf32>
    %34 = vector.extract_strided_slice %31 {offsets = [0, 32], sizes = [2, 32], strides = [1, 1]} : vector<2x96xf32> to vector<2x32xf32>
    %35 = arith.mulf %34, %19 : vector<2x32xf32>
    %36 = vector.extract_strided_slice %31 {offsets = [0, 0], sizes = [2, 32], strides = [1, 1]} : vector<2x96xf32> to vector<2x32xf32>
    %37 = arith.mulf %36, %33 : vector<2x32xf32>
    %38 = arith.addf %35, %37 : vector<2x32xf32>
    %39 = vector.extract_strided_slice %31 {offsets = [0, 64], sizes = [2, 32], strides = [1, 1]} : vector<2x96xf32> to vector<2x32xf32>
    %40 = math.tanh %38 : vector<2x32xf32>
    %41 = arith.mulf %39, %40 : vector<2x32xf32>
    %42 = vector.extract_strided_slice %8 {offsets = [4, 0], sizes = [2, 128], strides = [1, 1]} : vector<8x128xf32> to vector<2x128xf32>
    %cst_11 = arith.constant dense<0.000000e+00> : vector<2x128xf32>
    %43 = tpu.matmul %41, %6, %cst_11 {dimension_numbers = #tpu.dot_dimension_numbers<[1], [0], [0], [1], [0, 0, 1, 1], [], []>} : vector<2x32xf32>, vector<32x128xf32>, vector<2x128xf32> -> vector<2x128xf32>
    %44 = arith.addf %42, %43 : vector<2x128xf32>
    %45 = vector.extract_strided_slice %44 {offsets = [0, 0], sizes = [2, 96], strides = [1, 1]} : vector<2x128xf32> to vector<2x96xf32>
    %46 = arith.negf %45 : vector<2x96xf32>
    %47 = math.exp %46 : vector<2x96xf32>
    %cst_12 = arith.constant 1.000000e+00 : f32
    %48 = vector.broadcast %cst_12 : f32 to vector<2x96xf32>
    %49 = arith.addf %48, %47 : vector<2x96xf32>
    %50 = arith.divf %48, %49 : vector<2x96xf32>
    %51 = vector.extract_strided_slice %44 {offsets = [0, 96], sizes = [2, 32], strides = [1, 1]} : vector<2x128xf32> to vector<2x32xf32>
    %52 = math.tanh %51 : vector<2x32xf32>
    %53 = vector.extract_strided_slice %50 {offsets = [0, 32], sizes = [2, 32], strides = [1, 1]} : vector<2x96xf32> to vector<2x32xf32>
    %54 = arith.mulf %53, %38 : vector<2x32xf32>
    %55 = vector.extract_strided_slice %50 {offsets = [0, 0], sizes = [2, 32], strides = [1, 1]} : vector<2x96xf32> to vector<2x32xf32>
    %56 = arith.mulf %55, %52 : vector<2x32xf32>
    %57 = arith.addf %54, %56 : vector<2x32xf32>
    %58 = vector.extract_strided_slice %50 {offsets = [0, 64], sizes = [2, 32], strides = [1, 1]} : vector<2x96xf32> to vector<2x32xf32>
    %59 = math.tanh %57 : vector<2x32xf32>
    %60 = arith.mulf %58, %59 : vector<2x32xf32>
    %61 = vector.extract_strided_slice %8 {offsets = [6, 0], sizes = [2, 128], strides = [1, 1]} : vector<8x128xf32> to vector<2x128xf32>
    %cst_13 = arith.constant dense<0.000000e+00> : vector<2x128xf32>
    %62 = tpu.matmul %60, %6, %cst_13 {dimension_numbers = #tpu.dot_dimension_numbers<[1], [0], [0], [1], [0, 0, 1, 1], [], []>} : vector<2x32xf32>, vector<32x128xf32>, vector<2x128xf32> -> vector<2x128xf32>
    %63 = arith.addf %61, %62 : vector<2x128xf32>
    %64 = vector.extract_strided_slice %63 {offsets = [0, 0], sizes = [2, 96], strides = [1, 1]} : vector<2x128xf32> to vector<2x96xf32>
    %65 = arith.negf %64 : vector<2x96xf32>
    %66 = math.exp %65 : vector<2x96xf32>
    %cst_14 = arith.constant 1.000000e+00 : f32
    %67 = vector.broadcast %cst_14 : f32 to vector<2x96xf32>
    %68 = arith.addf %67, %66 : vector<2x96xf32>
    %69 = arith.divf %67, %68 : vector<2x96xf32>
    %70 = vector.extract_strided_slice %63 {offsets = [0, 96], sizes = [2, 32], strides = [1, 1]} : vector<2x128xf32> to vector<2x32xf32>
    %71 = math.tanh %70 : vector<2x32xf32>
    %72 = vector.extract_strided_slice %69 {offsets = [0, 32], sizes = [2, 32], strides = [1, 1]} : vector<2x96xf32> to vector<2x32xf32>
    %73 = arith.mulf %72, %57 : vector<2x32xf32>
    %74 = vector.extract_strided_slice %69 {offsets = [0, 0], sizes = [2, 32], strides = [1, 1]} : vector<2x96xf32> to vector<2x32xf32>
    %75 = arith.mulf %74, %71 : vector<2x32xf32>
    %76 = arith.addf %73, %75 : vector<2x32xf32>
    %77 = vector.extract_strided_slice %69 {offsets = [0, 64], sizes = [2, 32], strides = [1, 1]} : vector<2x96xf32> to vector<2x32xf32>
    %78 = math.tanh %76 : vector<2x32xf32>
    %79 = arith.mulf %77, %78 : vector<2x32xf32>
    %80 = tpu.concatenate %22, %41, %60, %79 in 0 : vector<2x32xf32>, vector<2x32xf32>, vector<2x32xf32>, vector<2x32xf32> -> vector<8x32xf32>
    %c1 = arith.constant 1 : index
    %c0_15 = arith.constant 0 : index
    %c0_16 = arith.constant 0 : index
    %81 = vector.load %arg4[%c1, %c0_15, %c0_16] : memref<8x32x128xf32, #tpu.memory_space<vmem>>, vector<1x32x128xf32>
    %82 = vector.shape_cast %81 : vector<1x32x128xf32> to vector<32x128xf32>
    %c0_17 = arith.constant 0 : index
    %c0_18 = arith.constant 0 : index
    %c0_19 = arith.constant 0 : index
    %83 = vector.load %arg3[%c0_17, %c0_18, %c0_19] : memref<7x32x128xf32, #tpu.memory_space<vmem>>, vector<1x32x128xf32>
    %84 = vector.shape_cast %83 : vector<1x32x128xf32> to vector<32x128xf32>
    %cst_20 = arith.constant dense<0.000000e+00> : vector<8x128xf32>
    %85 = tpu.matmul %80, %84, %cst_20 {dimension_numbers = #tpu.dot_dimension_numbers<[1], [0], [0], [1], [0, 0, 1, 1], [], []>} : vector<8x32xf32>, vector<32x128xf32>, vector<8x128xf32> -> vector<8x128xf32>
    %86 = vector.extract_strided_slice %85 {offsets = [0, 0], sizes = [2, 128], strides = [1, 1]} : vector<8x128xf32> to vector<2x128xf32>
    %87 = vector.extract_strided_slice %86 {offsets = [0, 0], sizes = [2, 96], strides = [1, 1]} : vector<2x128xf32> to vector<2x96xf32>
    %88 = arith.negf %87 : vector<2x96xf32>
    %89 = math.exp %88 : vector<2x96xf32>
    %cst_21 = arith.constant 1.000000e+00 : f32
    %90 = vector.broadcast %cst_21 : f32 to vector<2x96xf32>
    %91 = arith.addf %90, %89 : vector<2x96xf32>
    %92 = arith.divf %90, %91 : vector<2x96xf32>
    %93 = vector.extract_strided_slice %86 {offsets = [0, 96], sizes = [2, 32], strides = [1, 1]} : vector<2x128xf32> to vector<2x32xf32>
    %94 = math.tanh %93 : vector<2x32xf32>
    %95 = vector.extract_strided_slice %92 {offsets = [0, 0], sizes = [2, 32], strides = [1, 1]} : vector<2x96xf32> to vector<2x32xf32>
    %96 = arith.mulf %95, %94 : vector<2x32xf32>
    %97 = vector.extract_strided_slice %92 {offsets = [0, 64], sizes = [2, 32], strides = [1, 1]} : vector<2x96xf32> to vector<2x32xf32>
    %98 = math.tanh %96 : vector<2x32xf32>
    %99 = arith.mulf %97, %98 : vector<2x32xf32>
    %100 = vector.extract_strided_slice %85 {offsets = [2, 0], sizes = [2, 128], strides = [1, 1]} : vector<8x128xf32> to vector<2x128xf32>
    %cst_22 = arith.constant dense<0.000000e+00> : vector<2x128xf32>
    %101 = tpu.matmul %99, %82, %cst_22 {dimension_numbers = #tpu.dot_dimension_numbers<[1], [0], [0], [1], [0, 0, 1, 1], [], []>} : vector<2x32xf32>, vector<32x128xf32>, vector<2x128xf32> -> vector<2x128xf32>
    %102 = arith.addf %100, %101 : vector<2x128xf32>
    %103 = vector.extract_strided_slice %102 {offsets = [0, 0], sizes = [2, 96], strides = [1, 1]} : vector<2x128xf32> to vector<2x96xf32>
    %104 = arith.negf %103 : vector<2x96xf32>
    %105 = math.exp %104 : vector<2x96xf32>
    %cst_23 = arith.constant 1.000000e+00 : f32
    %106 = vector.broadcast %cst_23 : f32 to vector<2x96xf32>
    %107 = arith.addf %106, %105 : vector<2x96xf32>
    %108 = arith.divf %106, %107 : vector<2x96xf32>
    %109 = vector.extract_strided_slice %102 {offsets = [0, 96], sizes = [2, 32], strides = [1, 1]} : vector<2x128xf32> to vector<2x32xf32>
    %110 = math.tanh %109 : vector<2x32xf32>
    %111 = vector.extract_strided_slice %108 {offsets = [0, 32], sizes = [2, 32], strides = [1, 1]} : vector<2x96xf32> to vector<2x32xf32>
    %112 = arith.mulf %111, %96 : vector<2x32xf32>
    %113 = vector.extract_strided_slice %108 {offsets = [0, 0], sizes = [2, 32], strides = [1, 1]} : vector<2x96xf32> to vector<2x32xf32>
    %114 = arith.mulf %113, %110 : vector<2x32xf32>
    %115 = arith.addf %112, %114 : vector<2x32xf32>
    %116 = vector.extract_strided_slice %108 {offsets = [0, 64], sizes = [2, 32], strides = [1, 1]} : vector<2x96xf32> to vector<2x32xf32>
    %117 = math.tanh %115 : vector<2x32xf32>
    %118 = arith.mulf %116, %117 : vector<2x32xf32>
    %119 = vector.extract_strided_slice %85 {offsets = [4, 0], sizes = [2, 128], strides = [1, 1]} : vector<8x128xf32> to vector<2x128xf32>
    %cst_24 = arith.constant dense<0.000000e+00> : vector<2x128xf32>
    %120 = tpu.matmul %118, %82, %cst_24 {dimension_numbers = #tpu.dot_dimension_numbers<[1], [0], [0], [1], [0, 0, 1, 1], [], []>} : vector<2x32xf32>, vector<32x128xf32>, vector<2x128xf32> -> vector<2x128xf32>
    %121 = arith.addf %119, %120 : vector<2x128xf32>
    %122 = vector.extract_strided_slice %121 {offsets = [0, 0], sizes = [2, 96], strides = [1, 1]} : vector<2x128xf32> to vector<2x96xf32>
    %123 = arith.negf %122 : vector<2x96xf32>
    %124 = math.exp %123 : vector<2x96xf32>
    %cst_25 = arith.constant 1.000000e+00 : f32
    %125 = vector.broadcast %cst_25 : f32 to vector<2x96xf32>
    %126 = arith.addf %125, %124 : vector<2x96xf32>
    %127 = arith.divf %125, %126 : vector<2x96xf32>
    %128 = vector.extract_strided_slice %121 {offsets = [0, 96], sizes = [2, 32], strides = [1, 1]} : vector<2x128xf32> to vector<2x32xf32>
    %129 = math.tanh %128 : vector<2x32xf32>
    %130 = vector.extract_strided_slice %127 {offsets = [0, 32], sizes = [2, 32], strides = [1, 1]} : vector<2x96xf32> to vector<2x32xf32>
    %131 = arith.mulf %130, %115 : vector<2x32xf32>
    %132 = vector.extract_strided_slice %127 {offsets = [0, 0], sizes = [2, 32], strides = [1, 1]} : vector<2x96xf32> to vector<2x32xf32>
    %133 = arith.mulf %132, %129 : vector<2x32xf32>
    %134 = arith.addf %131, %133 : vector<2x32xf32>
    %135 = vector.extract_strided_slice %127 {offsets = [0, 64], sizes = [2, 32], strides = [1, 1]} : vector<2x96xf32> to vector<2x32xf32>
    %136 = math.tanh %134 : vector<2x32xf32>
    %137 = arith.mulf %135, %136 : vector<2x32xf32>
    %138 = vector.extract_strided_slice %85 {offsets = [6, 0], sizes = [2, 128], strides = [1, 1]} : vector<8x128xf32> to vector<2x128xf32>
    %cst_26 = arith.constant dense<0.000000e+00> : vector<2x128xf32>
    %139 = tpu.matmul %137, %82, %cst_26 {dimension_numbers = #tpu.dot_dimension_numbers<[1], [0], [0], [1], [0, 0, 1, 1], [], []>} : vector<2x32xf32>, vector<32x128xf32>, vector<2x128xf32> -> vector<2x128xf32>
    %140 = arith.addf %138, %139 : vector<2x128xf32>
    %141 = vector.extract_strided_slice %140 {offsets = [0, 0], sizes = [2, 96], strides = [1, 1]} : vector<2x128xf32> to vector<2x96xf32>
    %142 = arith.negf %141 : vector<2x96xf32>
    %143 = math.exp %142 : vector<2x96xf32>
    %cst_27 = arith.constant 1.000000e+00 : f32
    %144 = vector.broadcast %cst_27 : f32 to vector<2x96xf32>
    %145 = arith.addf %144, %143 : vector<2x96xf32>
    %146 = arith.divf %144, %145 : vector<2x96xf32>
    %147 = vector.extract_strided_slice %140 {offsets = [0, 96], sizes = [2, 32], strides = [1, 1]} : vector<2x128xf32> to vector<2x32xf32>
    %148 = math.tanh %147 : vector<2x32xf32>
    %149 = vector.extract_strided_slice %146 {offsets = [0, 32], sizes = [2, 32], strides = [1, 1]} : vector<2x96xf32> to vector<2x32xf32>
    %150 = arith.mulf %149, %134 : vector<2x32xf32>
    %151 = vector.extract_strided_slice %146 {offsets = [0, 0], sizes = [2, 32], strides = [1, 1]} : vector<2x96xf32> to vector<2x32xf32>
    %152 = arith.mulf %151, %148 : vector<2x32xf32>
    %153 = arith.addf %150, %152 : vector<2x32xf32>
    %154 = vector.extract_strided_slice %146 {offsets = [0, 64], sizes = [2, 32], strides = [1, 1]} : vector<2x96xf32> to vector<2x32xf32>
    %155 = math.tanh %153 : vector<2x32xf32>
    %156 = arith.mulf %154, %155 : vector<2x32xf32>
    %157 = tpu.concatenate %99, %118, %137, %156 in 0 : vector<2x32xf32>, vector<2x32xf32>, vector<2x32xf32>, vector<2x32xf32> -> vector<8x32xf32>
    %c2 = arith.constant 2 : index
    %c0_28 = arith.constant 0 : index
    %c0_29 = arith.constant 0 : index
    %158 = vector.load %arg4[%c2, %c0_28, %c0_29] : memref<8x32x128xf32, #tpu.memory_space<vmem>>, vector<1x32x128xf32>
    %159 = vector.shape_cast %158 : vector<1x32x128xf32> to vector<32x128xf32>
    %c1_30 = arith.constant 1 : index
    %c0_31 = arith.constant 0 : index
    %c0_32 = arith.constant 0 : index
    %160 = vector.load %arg3[%c1_30, %c0_31, %c0_32] : memref<7x32x128xf32, #tpu.memory_space<vmem>>, vector<1x32x128xf32>
    %161 = vector.shape_cast %160 : vector<1x32x128xf32> to vector<32x128xf32>
    %cst_33 = arith.constant dense<0.000000e+00> : vector<8x128xf32>
    %162 = tpu.matmul %157, %161, %cst_33 {dimension_numbers = #tpu.dot_dimension_numbers<[1], [0], [0], [1], [0, 0, 1, 1], [], []>} : vector<8x32xf32>, vector<32x128xf32>, vector<8x128xf32> -> vector<8x128xf32>
    %163 = vector.extract_strided_slice %162 {offsets = [0, 0], sizes = [2, 128], strides = [1, 1]} : vector<8x128xf32> to vector<2x128xf32>
    %164 = vector.extract_strided_slice %163 {offsets = [0, 0], sizes = [2, 96], strides = [1, 1]} : vector<2x128xf32> to vector<2x96xf32>
    %165 = arith.negf %164 : vector<2x96xf32>
    %166 = math.exp %165 : vector<2x96xf32>
    %cst_34 = arith.constant 1.000000e+00 : f32
    %167 = vector.broadcast %cst_34 : f32 to vector<2x96xf32>
    %168 = arith.addf %167, %166 : vector<2x96xf32>
    %169 = arith.divf %167, %168 : vector<2x96xf32>
    %170 = vector.extract_strided_slice %163 {offsets = [0, 96], sizes = [2, 32], strides = [1, 1]} : vector<2x128xf32> to vector<2x32xf32>
    %171 = math.tanh %170 : vector<2x32xf32>
    %172 = vector.extract_strided_slice %169 {offsets = [0, 0], sizes = [2, 32], strides = [1, 1]} : vector<2x96xf32> to vector<2x32xf32>
    %173 = arith.mulf %172, %171 : vector<2x32xf32>
    %174 = vector.extract_strided_slice %169 {offsets = [0, 64], sizes = [2, 32], strides = [1, 1]} : vector<2x96xf32> to vector<2x32xf32>
    %175 = math.tanh %173 : vector<2x32xf32>
    %176 = arith.mulf %174, %175 : vector<2x32xf32>
    %177 = vector.extract_strided_slice %162 {offsets = [2, 0], sizes = [2, 128], strides = [1, 1]} : vector<8x128xf32> to vector<2x128xf32>
    %cst_35 = arith.constant dense<0.000000e+00> : vector<2x128xf32>
    %178 = tpu.matmul %176, %159, %cst_35 {dimension_numbers = #tpu.dot_dimension_numbers<[1], [0], [0], [1], [0, 0, 1, 1], [], []>} : vector<2x32xf32>, vector<32x128xf32>, vector<2x128xf32> -> vector<2x128xf32>
    %179 = arith.addf %177, %178 : vector<2x128xf32>
    %180 = vector.extract_strided_slice %179 {offsets = [0, 0], sizes = [2, 96], strides = [1, 1]} : vector<2x128xf32> to vector<2x96xf32>
    %181 = arith.negf %180 : vector<2x96xf32>
    %182 = math.exp %181 : vector<2x96xf32>
    %cst_36 = arith.constant 1.000000e+00 : f32
    %183 = vector.broadcast %cst_36 : f32 to vector<2x96xf32>
    %184 = arith.addf %183, %182 : vector<2x96xf32>
    %185 = arith.divf %183, %184 : vector<2x96xf32>
    %186 = vector.extract_strided_slice %179 {offsets = [0, 96], sizes = [2, 32], strides = [1, 1]} : vector<2x128xf32> to vector<2x32xf32>
    %187 = math.tanh %186 : vector<2x32xf32>
    %188 = vector.extract_strided_slice %185 {offsets = [0, 32], sizes = [2, 32], strides = [1, 1]} : vector<2x96xf32> to vector<2x32xf32>
    %189 = arith.mulf %188, %173 : vector<2x32xf32>
    %190 = vector.extract_strided_slice %185 {offsets = [0, 0], sizes = [2, 32], strides = [1, 1]} : vector<2x96xf32> to vector<2x32xf32>
    %191 = arith.mulf %190, %187 : vector<2x32xf32>
    %192 = arith.addf %189, %191 : vector<2x32xf32>
    %193 = vector.extract_strided_slice %185 {offsets = [0, 64], sizes = [2, 32], strides = [1, 1]} : vector<2x96xf32> to vector<2x32xf32>
    %194 = math.tanh %192 : vector<2x32xf32>
    %195 = arith.mulf %193, %194 : vector<2x32xf32>
    %196 = vector.extract_strided_slice %162 {offsets = [4, 0], sizes = [2, 128], strides = [1, 1]} : vector<8x128xf32> to vector<2x128xf32>
    %cst_37 = arith.constant dense<0.000000e+00> : vector<2x128xf32>
    %197 = tpu.matmul %195, %159, %cst_37 {dimension_numbers = #tpu.dot_dimension_numbers<[1], [0], [0], [1], [0, 0, 1, 1], [], []>} : vector<2x32xf32>, vector<32x128xf32>, vector<2x128xf32> -> vector<2x128xf32>
    %198 = arith.addf %196, %197 : vector<2x128xf32>
    %199 = vector.extract_strided_slice %198 {offsets = [0, 0], sizes = [2, 96], strides = [1, 1]} : vector<2x128xf32> to vector<2x96xf32>
    %200 = arith.negf %199 : vector<2x96xf32>
    %201 = math.exp %200 : vector<2x96xf32>
    %cst_38 = arith.constant 1.000000e+00 : f32
    %202 = vector.broadcast %cst_38 : f32 to vector<2x96xf32>
    %203 = arith.addf %202, %201 : vector<2x96xf32>
    %204 = arith.divf %202, %203 : vector<2x96xf32>
    %205 = vector.extract_strided_slice %198 {offsets = [0, 96], sizes = [2, 32], strides = [1, 1]} : vector<2x128xf32> to vector<2x32xf32>
    %206 = math.tanh %205 : vector<2x32xf32>
    %207 = vector.extract_strided_slice %204 {offsets = [0, 32], sizes = [2, 32], strides = [1, 1]} : vector<2x96xf32> to vector<2x32xf32>
    %208 = arith.mulf %207, %192 : vector<2x32xf32>
    %209 = vector.extract_strided_slice %204 {offsets = [0, 0], sizes = [2, 32], strides = [1, 1]} : vector<2x96xf32> to vector<2x32xf32>
    %210 = arith.mulf %209, %206 : vector<2x32xf32>
    %211 = arith.addf %208, %210 : vector<2x32xf32>
    %212 = vector.extract_strided_slice %204 {offsets = [0, 64], sizes = [2, 32], strides = [1, 1]} : vector<2x96xf32> to vector<2x32xf32>
    %213 = math.tanh %211 : vector<2x32xf32>
    %214 = arith.mulf %212, %213 : vector<2x32xf32>
    %215 = vector.extract_strided_slice %162 {offsets = [6, 0], sizes = [2, 128], strides = [1, 1]} : vector<8x128xf32> to vector<2x128xf32>
    %cst_39 = arith.constant dense<0.000000e+00> : vector<2x128xf32>
    %216 = tpu.matmul %214, %159, %cst_39 {dimension_numbers = #tpu.dot_dimension_numbers<[1], [0], [0], [1], [0, 0, 1, 1], [], []>} : vector<2x32xf32>, vector<32x128xf32>, vector<2x128xf32> -> vector<2x128xf32>
    %217 = arith.addf %215, %216 : vector<2x128xf32>
    %218 = vector.extract_strided_slice %217 {offsets = [0, 0], sizes = [2, 96], strides = [1, 1]} : vector<2x128xf32> to vector<2x96xf32>
    %219 = arith.negf %218 : vector<2x96xf32>
    %220 = math.exp %219 : vector<2x96xf32>
    %cst_40 = arith.constant 1.000000e+00 : f32
    %221 = vector.broadcast %cst_40 : f32 to vector<2x96xf32>
    %222 = arith.addf %221, %220 : vector<2x96xf32>
    %223 = arith.divf %221, %222 : vector<2x96xf32>
    %224 = vector.extract_strided_slice %217 {offsets = [0, 96], sizes = [2, 32], strides = [1, 1]} : vector<2x128xf32> to vector<2x32xf32>
    %225 = math.tanh %224 : vector<2x32xf32>
    %226 = vector.extract_strided_slice %223 {offsets = [0, 32], sizes = [2, 32], strides = [1, 1]} : vector<2x96xf32> to vector<2x32xf32>
    %227 = arith.mulf %226, %211 : vector<2x32xf32>
    %228 = vector.extract_strided_slice %223 {offsets = [0, 0], sizes = [2, 32], strides = [1, 1]} : vector<2x96xf32> to vector<2x32xf32>
    %229 = arith.mulf %228, %225 : vector<2x32xf32>
    %230 = arith.addf %227, %229 : vector<2x32xf32>
    %231 = vector.extract_strided_slice %223 {offsets = [0, 64], sizes = [2, 32], strides = [1, 1]} : vector<2x96xf32> to vector<2x32xf32>
    %232 = math.tanh %230 : vector<2x32xf32>
    %233 = arith.mulf %231, %232 : vector<2x32xf32>
    %234 = tpu.concatenate %176, %195, %214, %233 in 0 : vector<2x32xf32>, vector<2x32xf32>, vector<2x32xf32>, vector<2x32xf32> -> vector<8x32xf32>
    %c3 = arith.constant 3 : index
    %c0_41 = arith.constant 0 : index
    %c0_42 = arith.constant 0 : index
    %235 = vector.load %arg4[%c3, %c0_41, %c0_42] : memref<8x32x128xf32, #tpu.memory_space<vmem>>, vector<1x32x128xf32>
    %236 = vector.shape_cast %235 : vector<1x32x128xf32> to vector<32x128xf32>
    %c2_43 = arith.constant 2 : index
    %c0_44 = arith.constant 0 : index
    %c0_45 = arith.constant 0 : index
    %237 = vector.load %arg3[%c2_43, %c0_44, %c0_45] : memref<7x32x128xf32, #tpu.memory_space<vmem>>, vector<1x32x128xf32>
    %238 = vector.shape_cast %237 : vector<1x32x128xf32> to vector<32x128xf32>
    %cst_46 = arith.constant dense<0.000000e+00> : vector<8x128xf32>
    %239 = tpu.matmul %234, %238, %cst_46 {dimension_numbers = #tpu.dot_dimension_numbers<[1], [0], [0], [1], [0, 0, 1, 1], [], []>} : vector<8x32xf32>, vector<32x128xf32>, vector<8x128xf32> -> vector<8x128xf32>
    %240 = vector.extract_strided_slice %239 {offsets = [0, 0], sizes = [2, 128], strides = [1, 1]} : vector<8x128xf32> to vector<2x128xf32>
    %241 = vector.extract_strided_slice %240 {offsets = [0, 0], sizes = [2, 96], strides = [1, 1]} : vector<2x128xf32> to vector<2x96xf32>
    %242 = arith.negf %241 : vector<2x96xf32>
    %243 = math.exp %242 : vector<2x96xf32>
    %cst_47 = arith.constant 1.000000e+00 : f32
    %244 = vector.broadcast %cst_47 : f32 to vector<2x96xf32>
    %245 = arith.addf %244, %243 : vector<2x96xf32>
    %246 = arith.divf %244, %245 : vector<2x96xf32>
    %247 = vector.extract_strided_slice %240 {offsets = [0, 96], sizes = [2, 32], strides = [1, 1]} : vector<2x128xf32> to vector<2x32xf32>
    %248 = math.tanh %247 : vector<2x32xf32>
    %249 = vector.extract_strided_slice %246 {offsets = [0, 0], sizes = [2, 32], strides = [1, 1]} : vector<2x96xf32> to vector<2x32xf32>
    %250 = arith.mulf %249, %248 : vector<2x32xf32>
    %251 = vector.extract_strided_slice %246 {offsets = [0, 64], sizes = [2, 32], strides = [1, 1]} : vector<2x96xf32> to vector<2x32xf32>
    %252 = math.tanh %250 : vector<2x32xf32>
    %253 = arith.mulf %251, %252 : vector<2x32xf32>
    %254 = vector.extract_strided_slice %239 {offsets = [2, 0], sizes = [2, 128], strides = [1, 1]} : vector<8x128xf32> to vector<2x128xf32>
    %cst_48 = arith.constant dense<0.000000e+00> : vector<2x128xf32>
    %255 = tpu.matmul %253, %236, %cst_48 {dimension_numbers = #tpu.dot_dimension_numbers<[1], [0], [0], [1], [0, 0, 1, 1], [], []>} : vector<2x32xf32>, vector<32x128xf32>, vector<2x128xf32> -> vector<2x128xf32>
    %256 = arith.addf %254, %255 : vector<2x128xf32>
    %257 = vector.extract_strided_slice %256 {offsets = [0, 0], sizes = [2, 96], strides = [1, 1]} : vector<2x128xf32> to vector<2x96xf32>
    %258 = arith.negf %257 : vector<2x96xf32>
    %259 = math.exp %258 : vector<2x96xf32>
    %cst_49 = arith.constant 1.000000e+00 : f32
    %260 = vector.broadcast %cst_49 : f32 to vector<2x96xf32>
    %261 = arith.addf %260, %259 : vector<2x96xf32>
    %262 = arith.divf %260, %261 : vector<2x96xf32>
    %263 = vector.extract_strided_slice %256 {offsets = [0, 96], sizes = [2, 32], strides = [1, 1]} : vector<2x128xf32> to vector<2x32xf32>
    %264 = math.tanh %263 : vector<2x32xf32>
    %265 = vector.extract_strided_slice %262 {offsets = [0, 32], sizes = [2, 32], strides = [1, 1]} : vector<2x96xf32> to vector<2x32xf32>
    %266 = arith.mulf %265, %250 : vector<2x32xf32>
    %267 = vector.extract_strided_slice %262 {offsets = [0, 0], sizes = [2, 32], strides = [1, 1]} : vector<2x96xf32> to vector<2x32xf32>
    %268 = arith.mulf %267, %264 : vector<2x32xf32>
    %269 = arith.addf %266, %268 : vector<2x32xf32>
    %270 = vector.extract_strided_slice %262 {offsets = [0, 64], sizes = [2, 32], strides = [1, 1]} : vector<2x96xf32> to vector<2x32xf32>
    %271 = math.tanh %269 : vector<2x32xf32>
    %272 = arith.mulf %270, %271 : vector<2x32xf32>
    %273 = vector.extract_strided_slice %239 {offsets = [4, 0], sizes = [2, 128], strides = [1, 1]} : vector<8x128xf32> to vector<2x128xf32>
    %cst_50 = arith.constant dense<0.000000e+00> : vector<2x128xf32>
    %274 = tpu.matmul %272, %236, %cst_50 {dimension_numbers = #tpu.dot_dimension_numbers<[1], [0], [0], [1], [0, 0, 1, 1], [], []>} : vector<2x32xf32>, vector<32x128xf32>, vector<2x128xf32> -> vector<2x128xf32>
    %275 = arith.addf %273, %274 : vector<2x128xf32>
    %276 = vector.extract_strided_slice %275 {offsets = [0, 0], sizes = [2, 96], strides = [1, 1]} : vector<2x128xf32> to vector<2x96xf32>
    %277 = arith.negf %276 : vector<2x96xf32>
    %278 = math.exp %277 : vector<2x96xf32>
    %cst_51 = arith.constant 1.000000e+00 : f32
    %279 = vector.broadcast %cst_51 : f32 to vector<2x96xf32>
    %280 = arith.addf %279, %278 : vector<2x96xf32>
    %281 = arith.divf %279, %280 : vector<2x96xf32>
    %282 = vector.extract_strided_slice %275 {offsets = [0, 96], sizes = [2, 32], strides = [1, 1]} : vector<2x128xf32> to vector<2x32xf32>
    %283 = math.tanh %282 : vector<2x32xf32>
    %284 = vector.extract_strided_slice %281 {offsets = [0, 32], sizes = [2, 32], strides = [1, 1]} : vector<2x96xf32> to vector<2x32xf32>
    %285 = arith.mulf %284, %269 : vector<2x32xf32>
    %286 = vector.extract_strided_slice %281 {offsets = [0, 0], sizes = [2, 32], strides = [1, 1]} : vector<2x96xf32> to vector<2x32xf32>
    %287 = arith.mulf %286, %283 : vector<2x32xf32>
    %288 = arith.addf %285, %287 : vector<2x32xf32>
    %289 = vector.extract_strided_slice %281 {offsets = [0, 64], sizes = [2, 32], strides = [1, 1]} : vector<2x96xf32> to vector<2x32xf32>
    %290 = math.tanh %288 : vector<2x32xf32>
    %291 = arith.mulf %289, %290 : vector<2x32xf32>
    %292 = vector.extract_strided_slice %239 {offsets = [6, 0], sizes = [2, 128], strides = [1, 1]} : vector<8x128xf32> to vector<2x128xf32>
    %cst_52 = arith.constant dense<0.000000e+00> : vector<2x128xf32>
    %293 = tpu.matmul %291, %236, %cst_52 {dimension_numbers = #tpu.dot_dimension_numbers<[1], [0], [0], [1], [0, 0, 1, 1], [], []>} : vector<2x32xf32>, vector<32x128xf32>, vector<2x128xf32> -> vector<2x128xf32>
    %294 = arith.addf %292, %293 : vector<2x128xf32>
    %295 = vector.extract_strided_slice %294 {offsets = [0, 0], sizes = [2, 96], strides = [1, 1]} : vector<2x128xf32> to vector<2x96xf32>
    %296 = arith.negf %295 : vector<2x96xf32>
    %297 = math.exp %296 : vector<2x96xf32>
    %cst_53 = arith.constant 1.000000e+00 : f32
    %298 = vector.broadcast %cst_53 : f32 to vector<2x96xf32>
    %299 = arith.addf %298, %297 : vector<2x96xf32>
    %300 = arith.divf %298, %299 : vector<2x96xf32>
    %301 = vector.extract_strided_slice %294 {offsets = [0, 96], sizes = [2, 32], strides = [1, 1]} : vector<2x128xf32> to vector<2x32xf32>
    %302 = math.tanh %301 : vector<2x32xf32>
    %303 = vector.extract_strided_slice %300 {offsets = [0, 32], sizes = [2, 32], strides = [1, 1]} : vector<2x96xf32> to vector<2x32xf32>
    %304 = arith.mulf %303, %288 : vector<2x32xf32>
    %305 = vector.extract_strided_slice %300 {offsets = [0, 0], sizes = [2, 32], strides = [1, 1]} : vector<2x96xf32> to vector<2x32xf32>
    %306 = arith.mulf %305, %302 : vector<2x32xf32>
    %307 = arith.addf %304, %306 : vector<2x32xf32>
    %308 = vector.extract_strided_slice %300 {offsets = [0, 64], sizes = [2, 32], strides = [1, 1]} : vector<2x96xf32> to vector<2x32xf32>
    %309 = math.tanh %307 : vector<2x32xf32>
    %310 = arith.mulf %308, %309 : vector<2x32xf32>
    %311 = tpu.concatenate %253, %272, %291, %310 in 0 : vector<2x32xf32>, vector<2x32xf32>, vector<2x32xf32>, vector<2x32xf32> -> vector<8x32xf32>
    %c4 = arith.constant 4 : index
    %c0_54 = arith.constant 0 : index
    %c0_55 = arith.constant 0 : index
    %312 = vector.load %arg4[%c4, %c0_54, %c0_55] : memref<8x32x128xf32, #tpu.memory_space<vmem>>, vector<1x32x128xf32>
    %313 = vector.shape_cast %312 : vector<1x32x128xf32> to vector<32x128xf32>
    %c3_56 = arith.constant 3 : index
    %c0_57 = arith.constant 0 : index
    %c0_58 = arith.constant 0 : index
    %314 = vector.load %arg3[%c3_56, %c0_57, %c0_58] : memref<7x32x128xf32, #tpu.memory_space<vmem>>, vector<1x32x128xf32>
    %315 = vector.shape_cast %314 : vector<1x32x128xf32> to vector<32x128xf32>
    %cst_59 = arith.constant dense<0.000000e+00> : vector<8x128xf32>
    %316 = tpu.matmul %311, %315, %cst_59 {dimension_numbers = #tpu.dot_dimension_numbers<[1], [0], [0], [1], [0, 0, 1, 1], [], []>} : vector<8x32xf32>, vector<32x128xf32>, vector<8x128xf32> -> vector<8x128xf32>
    %317 = vector.extract_strided_slice %316 {offsets = [0, 0], sizes = [2, 128], strides = [1, 1]} : vector<8x128xf32> to vector<2x128xf32>
    %318 = vector.extract_strided_slice %317 {offsets = [0, 0], sizes = [2, 96], strides = [1, 1]} : vector<2x128xf32> to vector<2x96xf32>
    %319 = arith.negf %318 : vector<2x96xf32>
    %320 = math.exp %319 : vector<2x96xf32>
    %cst_60 = arith.constant 1.000000e+00 : f32
    %321 = vector.broadcast %cst_60 : f32 to vector<2x96xf32>
    %322 = arith.addf %321, %320 : vector<2x96xf32>
    %323 = arith.divf %321, %322 : vector<2x96xf32>
    %324 = vector.extract_strided_slice %317 {offsets = [0, 96], sizes = [2, 32], strides = [1, 1]} : vector<2x128xf32> to vector<2x32xf32>
    %325 = math.tanh %324 : vector<2x32xf32>
    %326 = vector.extract_strided_slice %323 {offsets = [0, 0], sizes = [2, 32], strides = [1, 1]} : vector<2x96xf32> to vector<2x32xf32>
    %327 = arith.mulf %326, %325 : vector<2x32xf32>
    %328 = vector.extract_strided_slice %323 {offsets = [0, 64], sizes = [2, 32], strides = [1, 1]} : vector<2x96xf32> to vector<2x32xf32>
    %329 = math.tanh %327 : vector<2x32xf32>
    %330 = arith.mulf %328, %329 : vector<2x32xf32>
    %331 = vector.extract_strided_slice %316 {offsets = [2, 0], sizes = [2, 128], strides = [1, 1]} : vector<8x128xf32> to vector<2x128xf32>
    %cst_61 = arith.constant dense<0.000000e+00> : vector<2x128xf32>
    %332 = tpu.matmul %330, %313, %cst_61 {dimension_numbers = #tpu.dot_dimension_numbers<[1], [0], [0], [1], [0, 0, 1, 1], [], []>} : vector<2x32xf32>, vector<32x128xf32>, vector<2x128xf32> -> vector<2x128xf32>
    %333 = arith.addf %331, %332 : vector<2x128xf32>
    %334 = vector.extract_strided_slice %333 {offsets = [0, 0], sizes = [2, 96], strides = [1, 1]} : vector<2x128xf32> to vector<2x96xf32>
    %335 = arith.negf %334 : vector<2x96xf32>
    %336 = math.exp %335 : vector<2x96xf32>
    %cst_62 = arith.constant 1.000000e+00 : f32
    %337 = vector.broadcast %cst_62 : f32 to vector<2x96xf32>
    %338 = arith.addf %337, %336 : vector<2x96xf32>
    %339 = arith.divf %337, %338 : vector<2x96xf32>
    %340 = vector.extract_strided_slice %333 {offsets = [0, 96], sizes = [2, 32], strides = [1, 1]} : vector<2x128xf32> to vector<2x32xf32>
    %341 = math.tanh %340 : vector<2x32xf32>
    %342 = vector.extract_strided_slice %339 {offsets = [0, 32], sizes = [2, 32], strides = [1, 1]} : vector<2x96xf32> to vector<2x32xf32>
    %343 = arith.mulf %342, %327 : vector<2x32xf32>
    %344 = vector.extract_strided_slice %339 {offsets = [0, 0], sizes = [2, 32], strides = [1, 1]} : vector<2x96xf32> to vector<2x32xf32>
    %345 = arith.mulf %344, %341 : vector<2x32xf32>
    %346 = arith.addf %343, %345 : vector<2x32xf32>
    %347 = vector.extract_strided_slice %339 {offsets = [0, 64], sizes = [2, 32], strides = [1, 1]} : vector<2x96xf32> to vector<2x32xf32>
    %348 = math.tanh %346 : vector<2x32xf32>
    %349 = arith.mulf %347, %348 : vector<2x32xf32>
    %350 = vector.extract_strided_slice %316 {offsets = [4, 0], sizes = [2, 128], strides = [1, 1]} : vector<8x128xf32> to vector<2x128xf32>
    %cst_63 = arith.constant dense<0.000000e+00> : vector<2x128xf32>
    %351 = tpu.matmul %349, %313, %cst_63 {dimension_numbers = #tpu.dot_dimension_numbers<[1], [0], [0], [1], [0, 0, 1, 1], [], []>} : vector<2x32xf32>, vector<32x128xf32>, vector<2x128xf32> -> vector<2x128xf32>
    %352 = arith.addf %350, %351 : vector<2x128xf32>
    %353 = vector.extract_strided_slice %352 {offsets = [0, 0], sizes = [2, 96], strides = [1, 1]} : vector<2x128xf32> to vector<2x96xf32>
    %354 = arith.negf %353 : vector<2x96xf32>
    %355 = math.exp %354 : vector<2x96xf32>
    %cst_64 = arith.constant 1.000000e+00 : f32
    %356 = vector.broadcast %cst_64 : f32 to vector<2x96xf32>
    %357 = arith.addf %356, %355 : vector<2x96xf32>
    %358 = arith.divf %356, %357 : vector<2x96xf32>
    %359 = vector.extract_strided_slice %352 {offsets = [0, 96], sizes = [2, 32], strides = [1, 1]} : vector<2x128xf32> to vector<2x32xf32>
    %360 = math.tanh %359 : vector<2x32xf32>
    %361 = vector.extract_strided_slice %358 {offsets = [0, 32], sizes = [2, 32], strides = [1, 1]} : vector<2x96xf32> to vector<2x32xf32>
    %362 = arith.mulf %361, %346 : vector<2x32xf32>
    %363 = vector.extract_strided_slice %358 {offsets = [0, 0], sizes = [2, 32], strides = [1, 1]} : vector<2x96xf32> to vector<2x32xf32>
    %364 = arith.mulf %363, %360 : vector<2x32xf32>
    %365 = arith.addf %362, %364 : vector<2x32xf32>
    %366 = vector.extract_strided_slice %358 {offsets = [0, 64], sizes = [2, 32], strides = [1, 1]} : vector<2x96xf32> to vector<2x32xf32>
    %367 = math.tanh %365 : vector<2x32xf32>
    %368 = arith.mulf %366, %367 : vector<2x32xf32>
    %369 = vector.extract_strided_slice %316 {offsets = [6, 0], sizes = [2, 128], strides = [1, 1]} : vector<8x128xf32> to vector<2x128xf32>
    %cst_65 = arith.constant dense<0.000000e+00> : vector<2x128xf32>
    %370 = tpu.matmul %368, %313, %cst_65 {dimension_numbers = #tpu.dot_dimension_numbers<[1], [0], [0], [1], [0, 0, 1, 1], [], []>} : vector<2x32xf32>, vector<32x128xf32>, vector<2x128xf32> -> vector<2x128xf32>
    %371 = arith.addf %369, %370 : vector<2x128xf32>
    %372 = vector.extract_strided_slice %371 {offsets = [0, 0], sizes = [2, 96], strides = [1, 1]} : vector<2x128xf32> to vector<2x96xf32>
    %373 = arith.negf %372 : vector<2x96xf32>
    %374 = math.exp %373 : vector<2x96xf32>
    %cst_66 = arith.constant 1.000000e+00 : f32
    %375 = vector.broadcast %cst_66 : f32 to vector<2x96xf32>
    %376 = arith.addf %375, %374 : vector<2x96xf32>
    %377 = arith.divf %375, %376 : vector<2x96xf32>
    %378 = vector.extract_strided_slice %371 {offsets = [0, 96], sizes = [2, 32], strides = [1, 1]} : vector<2x128xf32> to vector<2x32xf32>
    %379 = math.tanh %378 : vector<2x32xf32>
    %380 = vector.extract_strided_slice %377 {offsets = [0, 32], sizes = [2, 32], strides = [1, 1]} : vector<2x96xf32> to vector<2x32xf32>
    %381 = arith.mulf %380, %365 : vector<2x32xf32>
    %382 = vector.extract_strided_slice %377 {offsets = [0, 0], sizes = [2, 32], strides = [1, 1]} : vector<2x96xf32> to vector<2x32xf32>
    %383 = arith.mulf %382, %379 : vector<2x32xf32>
    %384 = arith.addf %381, %383 : vector<2x32xf32>
    %385 = vector.extract_strided_slice %377 {offsets = [0, 64], sizes = [2, 32], strides = [1, 1]} : vector<2x96xf32> to vector<2x32xf32>
    %386 = math.tanh %384 : vector<2x32xf32>
    %387 = arith.mulf %385, %386 : vector<2x32xf32>
    %388 = tpu.concatenate %330, %349, %368, %387 in 0 : vector<2x32xf32>, vector<2x32xf32>, vector<2x32xf32>, vector<2x32xf32> -> vector<8x32xf32>
    %c5 = arith.constant 5 : index
    %c0_67 = arith.constant 0 : index
    %c0_68 = arith.constant 0 : index
    %389 = vector.load %arg4[%c5, %c0_67, %c0_68] : memref<8x32x128xf32, #tpu.memory_space<vmem>>, vector<1x32x128xf32>
    %390 = vector.shape_cast %389 : vector<1x32x128xf32> to vector<32x128xf32>
    %c4_69 = arith.constant 4 : index
    %c0_70 = arith.constant 0 : index
    %c0_71 = arith.constant 0 : index
    %391 = vector.load %arg3[%c4_69, %c0_70, %c0_71] : memref<7x32x128xf32, #tpu.memory_space<vmem>>, vector<1x32x128xf32>
    %392 = vector.shape_cast %391 : vector<1x32x128xf32> to vector<32x128xf32>
    %cst_72 = arith.constant dense<0.000000e+00> : vector<8x128xf32>
    %393 = tpu.matmul %388, %392, %cst_72 {dimension_numbers = #tpu.dot_dimension_numbers<[1], [0], [0], [1], [0, 0, 1, 1], [], []>} : vector<8x32xf32>, vector<32x128xf32>, vector<8x128xf32> -> vector<8x128xf32>
    %394 = vector.extract_strided_slice %393 {offsets = [0, 0], sizes = [2, 128], strides = [1, 1]} : vector<8x128xf32> to vector<2x128xf32>
    %395 = vector.extract_strided_slice %394 {offsets = [0, 0], sizes = [2, 96], strides = [1, 1]} : vector<2x128xf32> to vector<2x96xf32>
    %396 = arith.negf %395 : vector<2x96xf32>
    %397 = math.exp %396 : vector<2x96xf32>
    %cst_73 = arith.constant 1.000000e+00 : f32
    %398 = vector.broadcast %cst_73 : f32 to vector<2x96xf32>
    %399 = arith.addf %398, %397 : vector<2x96xf32>
    %400 = arith.divf %398, %399 : vector<2x96xf32>
    %401 = vector.extract_strided_slice %394 {offsets = [0, 96], sizes = [2, 32], strides = [1, 1]} : vector<2x128xf32> to vector<2x32xf32>
    %402 = math.tanh %401 : vector<2x32xf32>
    %403 = vector.extract_strided_slice %400 {offsets = [0, 0], sizes = [2, 32], strides = [1, 1]} : vector<2x96xf32> to vector<2x32xf32>
    %404 = arith.mulf %403, %402 : vector<2x32xf32>
    %405 = vector.extract_strided_slice %400 {offsets = [0, 64], sizes = [2, 32], strides = [1, 1]} : vector<2x96xf32> to vector<2x32xf32>
    %406 = math.tanh %404 : vector<2x32xf32>
    %407 = arith.mulf %405, %406 : vector<2x32xf32>
    %408 = vector.extract_strided_slice %393 {offsets = [2, 0], sizes = [2, 128], strides = [1, 1]} : vector<8x128xf32> to vector<2x128xf32>
    %cst_74 = arith.constant dense<0.000000e+00> : vector<2x128xf32>
    %409 = tpu.matmul %407, %390, %cst_74 {dimension_numbers = #tpu.dot_dimension_numbers<[1], [0], [0], [1], [0, 0, 1, 1], [], []>} : vector<2x32xf32>, vector<32x128xf32>, vector<2x128xf32> -> vector<2x128xf32>
    %410 = arith.addf %408, %409 : vector<2x128xf32>
    %411 = vector.extract_strided_slice %410 {offsets = [0, 0], sizes = [2, 96], strides = [1, 1]} : vector<2x128xf32> to vector<2x96xf32>
    %412 = arith.negf %411 : vector<2x96xf32>
    %413 = math.exp %412 : vector<2x96xf32>
    %cst_75 = arith.constant 1.000000e+00 : f32
    %414 = vector.broadcast %cst_75 : f32 to vector<2x96xf32>
    %415 = arith.addf %414, %413 : vector<2x96xf32>
    %416 = arith.divf %414, %415 : vector<2x96xf32>
    %417 = vector.extract_strided_slice %410 {offsets = [0, 96], sizes = [2, 32], strides = [1, 1]} : vector<2x128xf32> to vector<2x32xf32>
    %418 = math.tanh %417 : vector<2x32xf32>
    %419 = vector.extract_strided_slice %416 {offsets = [0, 32], sizes = [2, 32], strides = [1, 1]} : vector<2x96xf32> to vector<2x32xf32>
    %420 = arith.mulf %419, %404 : vector<2x32xf32>
    %421 = vector.extract_strided_slice %416 {offsets = [0, 0], sizes = [2, 32], strides = [1, 1]} : vector<2x96xf32> to vector<2x32xf32>
    %422 = arith.mulf %421, %418 : vector<2x32xf32>
    %423 = arith.addf %420, %422 : vector<2x32xf32>
    %424 = vector.extract_strided_slice %416 {offsets = [0, 64], sizes = [2, 32], strides = [1, 1]} : vector<2x96xf32> to vector<2x32xf32>
    %425 = math.tanh %423 : vector<2x32xf32>
    %426 = arith.mulf %424, %425 : vector<2x32xf32>
    %427 = vector.extract_strided_slice %393 {offsets = [4, 0], sizes = [2, 128], strides = [1, 1]} : vector<8x128xf32> to vector<2x128xf32>
    %cst_76 = arith.constant dense<0.000000e+00> : vector<2x128xf32>
    %428 = tpu.matmul %426, %390, %cst_76 {dimension_numbers = #tpu.dot_dimension_numbers<[1], [0], [0], [1], [0, 0, 1, 1], [], []>} : vector<2x32xf32>, vector<32x128xf32>, vector<2x128xf32> -> vector<2x128xf32>
    %429 = arith.addf %427, %428 : vector<2x128xf32>
    %430 = vector.extract_strided_slice %429 {offsets = [0, 0], sizes = [2, 96], strides = [1, 1]} : vector<2x128xf32> to vector<2x96xf32>
    %431 = arith.negf %430 : vector<2x96xf32>
    %432 = math.exp %431 : vector<2x96xf32>
    %cst_77 = arith.constant 1.000000e+00 : f32
    %433 = vector.broadcast %cst_77 : f32 to vector<2x96xf32>
    %434 = arith.addf %433, %432 : vector<2x96xf32>
    %435 = arith.divf %433, %434 : vector<2x96xf32>
    %436 = vector.extract_strided_slice %429 {offsets = [0, 96], sizes = [2, 32], strides = [1, 1]} : vector<2x128xf32> to vector<2x32xf32>
    %437 = math.tanh %436 : vector<2x32xf32>
    %438 = vector.extract_strided_slice %435 {offsets = [0, 32], sizes = [2, 32], strides = [1, 1]} : vector<2x96xf32> to vector<2x32xf32>
    %439 = arith.mulf %438, %423 : vector<2x32xf32>
    %440 = vector.extract_strided_slice %435 {offsets = [0, 0], sizes = [2, 32], strides = [1, 1]} : vector<2x96xf32> to vector<2x32xf32>
    %441 = arith.mulf %440, %437 : vector<2x32xf32>
    %442 = arith.addf %439, %441 : vector<2x32xf32>
    %443 = vector.extract_strided_slice %435 {offsets = [0, 64], sizes = [2, 32], strides = [1, 1]} : vector<2x96xf32> to vector<2x32xf32>
    %444 = math.tanh %442 : vector<2x32xf32>
    %445 = arith.mulf %443, %444 : vector<2x32xf32>
    %446 = vector.extract_strided_slice %393 {offsets = [6, 0], sizes = [2, 128], strides = [1, 1]} : vector<8x128xf32> to vector<2x128xf32>
    %cst_78 = arith.constant dense<0.000000e+00> : vector<2x128xf32>
    %447 = tpu.matmul %445, %390, %cst_78 {dimension_numbers = #tpu.dot_dimension_numbers<[1], [0], [0], [1], [0, 0, 1, 1], [], []>} : vector<2x32xf32>, vector<32x128xf32>, vector<2x128xf32> -> vector<2x128xf32>
    %448 = arith.addf %446, %447 : vector<2x128xf32>
    %449 = vector.extract_strided_slice %448 {offsets = [0, 0], sizes = [2, 96], strides = [1, 1]} : vector<2x128xf32> to vector<2x96xf32>
    %450 = arith.negf %449 : vector<2x96xf32>
    %451 = math.exp %450 : vector<2x96xf32>
    %cst_79 = arith.constant 1.000000e+00 : f32
    %452 = vector.broadcast %cst_79 : f32 to vector<2x96xf32>
    %453 = arith.addf %452, %451 : vector<2x96xf32>
    %454 = arith.divf %452, %453 : vector<2x96xf32>
    %455 = vector.extract_strided_slice %448 {offsets = [0, 96], sizes = [2, 32], strides = [1, 1]} : vector<2x128xf32> to vector<2x32xf32>
    %456 = math.tanh %455 : vector<2x32xf32>
    %457 = vector.extract_strided_slice %454 {offsets = [0, 32], sizes = [2, 32], strides = [1, 1]} : vector<2x96xf32> to vector<2x32xf32>
    %458 = arith.mulf %457, %442 : vector<2x32xf32>
    %459 = vector.extract_strided_slice %454 {offsets = [0, 0], sizes = [2, 32], strides = [1, 1]} : vector<2x96xf32> to vector<2x32xf32>
    %460 = arith.mulf %459, %456 : vector<2x32xf32>
    %461 = arith.addf %458, %460 : vector<2x32xf32>
    %462 = vector.extract_strided_slice %454 {offsets = [0, 64], sizes = [2, 32], strides = [1, 1]} : vector<2x96xf32> to vector<2x32xf32>
    %463 = math.tanh %461 : vector<2x32xf32>
    %464 = arith.mulf %462, %463 : vector<2x32xf32>
    %465 = tpu.concatenate %407, %426, %445, %464 in 0 : vector<2x32xf32>, vector<2x32xf32>, vector<2x32xf32>, vector<2x32xf32> -> vector<8x32xf32>
    %c6 = arith.constant 6 : index
    %c0_80 = arith.constant 0 : index
    %c0_81 = arith.constant 0 : index
    %466 = vector.load %arg4[%c6, %c0_80, %c0_81] : memref<8x32x128xf32, #tpu.memory_space<vmem>>, vector<1x32x128xf32>
    %467 = vector.shape_cast %466 : vector<1x32x128xf32> to vector<32x128xf32>
    %c5_82 = arith.constant 5 : index
    %c0_83 = arith.constant 0 : index
    %c0_84 = arith.constant 0 : index
    %468 = vector.load %arg3[%c5_82, %c0_83, %c0_84] : memref<7x32x128xf32, #tpu.memory_space<vmem>>, vector<1x32x128xf32>
    %469 = vector.shape_cast %468 : vector<1x32x128xf32> to vector<32x128xf32>
    %cst_85 = arith.constant dense<0.000000e+00> : vector<8x128xf32>
    %470 = tpu.matmul %465, %469, %cst_85 {dimension_numbers = #tpu.dot_dimension_numbers<[1], [0], [0], [1], [0, 0, 1, 1], [], []>} : vector<8x32xf32>, vector<32x128xf32>, vector<8x128xf32> -> vector<8x128xf32>
    %471 = vector.extract_strided_slice %470 {offsets = [0, 0], sizes = [2, 128], strides = [1, 1]} : vector<8x128xf32> to vector<2x128xf32>
    %472 = vector.extract_strided_slice %471 {offsets = [0, 0], sizes = [2, 96], strides = [1, 1]} : vector<2x128xf32> to vector<2x96xf32>
    %473 = arith.negf %472 : vector<2x96xf32>
    %474 = math.exp %473 : vector<2x96xf32>
    %cst_86 = arith.constant 1.000000e+00 : f32
    %475 = vector.broadcast %cst_86 : f32 to vector<2x96xf32>
    %476 = arith.addf %475, %474 : vector<2x96xf32>
    %477 = arith.divf %475, %476 : vector<2x96xf32>
    %478 = vector.extract_strided_slice %471 {offsets = [0, 96], sizes = [2, 32], strides = [1, 1]} : vector<2x128xf32> to vector<2x32xf32>
    %479 = math.tanh %478 : vector<2x32xf32>
    %480 = vector.extract_strided_slice %477 {offsets = [0, 0], sizes = [2, 32], strides = [1, 1]} : vector<2x96xf32> to vector<2x32xf32>
    %481 = arith.mulf %480, %479 : vector<2x32xf32>
    %482 = vector.extract_strided_slice %477 {offsets = [0, 64], sizes = [2, 32], strides = [1, 1]} : vector<2x96xf32> to vector<2x32xf32>
    %483 = math.tanh %481 : vector<2x32xf32>
    %484 = arith.mulf %482, %483 : vector<2x32xf32>
    %485 = vector.extract_strided_slice %470 {offsets = [2, 0], sizes = [2, 128], strides = [1, 1]} : vector<8x128xf32> to vector<2x128xf32>
    %cst_87 = arith.constant dense<0.000000e+00> : vector<2x128xf32>
    %486 = tpu.matmul %484, %467, %cst_87 {dimension_numbers = #tpu.dot_dimension_numbers<[1], [0], [0], [1], [0, 0, 1, 1], [], []>} : vector<2x32xf32>, vector<32x128xf32>, vector<2x128xf32> -> vector<2x128xf32>
    %487 = arith.addf %485, %486 : vector<2x128xf32>
    %488 = vector.extract_strided_slice %487 {offsets = [0, 0], sizes = [2, 96], strides = [1, 1]} : vector<2x128xf32> to vector<2x96xf32>
    %489 = arith.negf %488 : vector<2x96xf32>
    %490 = math.exp %489 : vector<2x96xf32>
    %cst_88 = arith.constant 1.000000e+00 : f32
    %491 = vector.broadcast %cst_88 : f32 to vector<2x96xf32>
    %492 = arith.addf %491, %490 : vector<2x96xf32>
    %493 = arith.divf %491, %492 : vector<2x96xf32>
    %494 = vector.extract_strided_slice %487 {offsets = [0, 96], sizes = [2, 32], strides = [1, 1]} : vector<2x128xf32> to vector<2x32xf32>
    %495 = math.tanh %494 : vector<2x32xf32>
    %496 = vector.extract_strided_slice %493 {offsets = [0, 32], sizes = [2, 32], strides = [1, 1]} : vector<2x96xf32> to vector<2x32xf32>
    %497 = arith.mulf %496, %481 : vector<2x32xf32>
    %498 = vector.extract_strided_slice %493 {offsets = [0, 0], sizes = [2, 32], strides = [1, 1]} : vector<2x96xf32> to vector<2x32xf32>
    %499 = arith.mulf %498, %495 : vector<2x32xf32>
    %500 = arith.addf %497, %499 : vector<2x32xf32>
    %501 = vector.extract_strided_slice %493 {offsets = [0, 64], sizes = [2, 32], strides = [1, 1]} : vector<2x96xf32> to vector<2x32xf32>
    %502 = math.tanh %500 : vector<2x32xf32>
    %503 = arith.mulf %501, %502 : vector<2x32xf32>
    %504 = vector.extract_strided_slice %470 {offsets = [4, 0], sizes = [2, 128], strides = [1, 1]} : vector<8x128xf32> to vector<2x128xf32>
    %cst_89 = arith.constant dense<0.000000e+00> : vector<2x128xf32>
    %505 = tpu.matmul %503, %467, %cst_89 {dimension_numbers = #tpu.dot_dimension_numbers<[1], [0], [0], [1], [0, 0, 1, 1], [], []>} : vector<2x32xf32>, vector<32x128xf32>, vector<2x128xf32> -> vector<2x128xf32>
    %506 = arith.addf %504, %505 : vector<2x128xf32>
    %507 = vector.extract_strided_slice %506 {offsets = [0, 0], sizes = [2, 96], strides = [1, 1]} : vector<2x128xf32> to vector<2x96xf32>
    %508 = arith.negf %507 : vector<2x96xf32>
    %509 = math.exp %508 : vector<2x96xf32>
    %cst_90 = arith.constant 1.000000e+00 : f32
    %510 = vector.broadcast %cst_90 : f32 to vector<2x96xf32>
    %511 = arith.addf %510, %509 : vector<2x96xf32>
    %512 = arith.divf %510, %511 : vector<2x96xf32>
    %513 = vector.extract_strided_slice %506 {offsets = [0, 96], sizes = [2, 32], strides = [1, 1]} : vector<2x128xf32> to vector<2x32xf32>
    %514 = math.tanh %513 : vector<2x32xf32>
    %515 = vector.extract_strided_slice %512 {offsets = [0, 32], sizes = [2, 32], strides = [1, 1]} : vector<2x96xf32> to vector<2x32xf32>
    %516 = arith.mulf %515, %500 : vector<2x32xf32>
    %517 = vector.extract_strided_slice %512 {offsets = [0, 0], sizes = [2, 32], strides = [1, 1]} : vector<2x96xf32> to vector<2x32xf32>
    %518 = arith.mulf %517, %514 : vector<2x32xf32>
    %519 = arith.addf %516, %518 : vector<2x32xf32>
    %520 = vector.extract_strided_slice %512 {offsets = [0, 64], sizes = [2, 32], strides = [1, 1]} : vector<2x96xf32> to vector<2x32xf32>
    %521 = math.tanh %519 : vector<2x32xf32>
    %522 = arith.mulf %520, %521 : vector<2x32xf32>
    %523 = vector.extract_strided_slice %470 {offsets = [6, 0], sizes = [2, 128], strides = [1, 1]} : vector<8x128xf32> to vector<2x128xf32>
    %cst_91 = arith.constant dense<0.000000e+00> : vector<2x128xf32>
    %524 = tpu.matmul %522, %467, %cst_91 {dimension_numbers = #tpu.dot_dimension_numbers<[1], [0], [0], [1], [0, 0, 1, 1], [], []>} : vector<2x32xf32>, vector<32x128xf32>, vector<2x128xf32> -> vector<2x128xf32>
    %525 = arith.addf %523, %524 : vector<2x128xf32>
    %526 = vector.extract_strided_slice %525 {offsets = [0, 0], sizes = [2, 96], strides = [1, 1]} : vector<2x128xf32> to vector<2x96xf32>
    %527 = arith.negf %526 : vector<2x96xf32>
    %528 = math.exp %527 : vector<2x96xf32>
    %cst_92 = arith.constant 1.000000e+00 : f32
    %529 = vector.broadcast %cst_92 : f32 to vector<2x96xf32>
    %530 = arith.addf %529, %528 : vector<2x96xf32>
    %531 = arith.divf %529, %530 : vector<2x96xf32>
    %532 = vector.extract_strided_slice %525 {offsets = [0, 96], sizes = [2, 32], strides = [1, 1]} : vector<2x128xf32> to vector<2x32xf32>
    %533 = math.tanh %532 : vector<2x32xf32>
    %534 = vector.extract_strided_slice %531 {offsets = [0, 32], sizes = [2, 32], strides = [1, 1]} : vector<2x96xf32> to vector<2x32xf32>
    %535 = arith.mulf %534, %519 : vector<2x32xf32>
    %536 = vector.extract_strided_slice %531 {offsets = [0, 0], sizes = [2, 32], strides = [1, 1]} : vector<2x96xf32> to vector<2x32xf32>
    %537 = arith.mulf %536, %533 : vector<2x32xf32>
    %538 = arith.addf %535, %537 : vector<2x32xf32>
    %539 = vector.extract_strided_slice %531 {offsets = [0, 64], sizes = [2, 32], strides = [1, 1]} : vector<2x96xf32> to vector<2x32xf32>
    %540 = math.tanh %538 : vector<2x32xf32>
    %541 = arith.mulf %539, %540 : vector<2x32xf32>
    %542 = tpu.concatenate %484, %503, %522, %541 in 0 : vector<2x32xf32>, vector<2x32xf32>, vector<2x32xf32>, vector<2x32xf32> -> vector<8x32xf32>
    %c7 = arith.constant 7 : index
    %c0_93 = arith.constant 0 : index
    %c0_94 = arith.constant 0 : index
    %543 = vector.load %arg4[%c7, %c0_93, %c0_94] : memref<8x32x128xf32, #tpu.memory_space<vmem>>, vector<1x32x128xf32>
    %544 = vector.shape_cast %543 : vector<1x32x128xf32> to vector<32x128xf32>
    %c6_95 = arith.constant 6 : index
    %c0_96 = arith.constant 0 : index
    %c0_97 = arith.constant 0 : index
    %545 = vector.load %arg3[%c6_95, %c0_96, %c0_97] : memref<7x32x128xf32, #tpu.memory_space<vmem>>, vector<1x32x128xf32>
    %546 = vector.shape_cast %545 : vector<1x32x128xf32> to vector<32x128xf32>
    %cst_98 = arith.constant dense<0.000000e+00> : vector<8x128xf32>
    %547 = tpu.matmul %542, %546, %cst_98 {dimension_numbers = #tpu.dot_dimension_numbers<[1], [0], [0], [1], [0, 0, 1, 1], [], []>} : vector<8x32xf32>, vector<32x128xf32>, vector<8x128xf32> -> vector<8x128xf32>
    %548 = vector.extract_strided_slice %547 {offsets = [0, 0], sizes = [2, 128], strides = [1, 1]} : vector<8x128xf32> to vector<2x128xf32>
    %549 = vector.extract_strided_slice %548 {offsets = [0, 0], sizes = [2, 96], strides = [1, 1]} : vector<2x128xf32> to vector<2x96xf32>
    %550 = arith.negf %549 : vector<2x96xf32>
    %551 = math.exp %550 : vector<2x96xf32>
    %cst_99 = arith.constant 1.000000e+00 : f32
    %552 = vector.broadcast %cst_99 : f32 to vector<2x96xf32>
    %553 = arith.addf %552, %551 : vector<2x96xf32>
    %554 = arith.divf %552, %553 : vector<2x96xf32>
    %555 = vector.extract_strided_slice %548 {offsets = [0, 96], sizes = [2, 32], strides = [1, 1]} : vector<2x128xf32> to vector<2x32xf32>
    %556 = math.tanh %555 : vector<2x32xf32>
    %557 = vector.extract_strided_slice %554 {offsets = [0, 0], sizes = [2, 32], strides = [1, 1]} : vector<2x96xf32> to vector<2x32xf32>
    %558 = arith.mulf %557, %556 : vector<2x32xf32>
    %559 = vector.extract_strided_slice %554 {offsets = [0, 64], sizes = [2, 32], strides = [1, 1]} : vector<2x96xf32> to vector<2x32xf32>
    %560 = math.tanh %558 : vector<2x32xf32>
    %561 = arith.mulf %559, %560 : vector<2x32xf32>
    %562 = vector.extract_strided_slice %547 {offsets = [2, 0], sizes = [2, 128], strides = [1, 1]} : vector<8x128xf32> to vector<2x128xf32>
    %cst_100 = arith.constant dense<0.000000e+00> : vector<2x128xf32>
    %563 = tpu.matmul %561, %544, %cst_100 {dimension_numbers = #tpu.dot_dimension_numbers<[1], [0], [0], [1], [0, 0, 1, 1], [], []>} : vector<2x32xf32>, vector<32x128xf32>, vector<2x128xf32> -> vector<2x128xf32>
    %564 = arith.addf %562, %563 : vector<2x128xf32>
    %565 = vector.extract_strided_slice %564 {offsets = [0, 0], sizes = [2, 96], strides = [1, 1]} : vector<2x128xf32> to vector<2x96xf32>
    %566 = arith.negf %565 : vector<2x96xf32>
    %567 = math.exp %566 : vector<2x96xf32>
    %cst_101 = arith.constant 1.000000e+00 : f32
    %568 = vector.broadcast %cst_101 : f32 to vector<2x96xf32>
    %569 = arith.addf %568, %567 : vector<2x96xf32>
    %570 = arith.divf %568, %569 : vector<2x96xf32>
    %571 = vector.extract_strided_slice %564 {offsets = [0, 96], sizes = [2, 32], strides = [1, 1]} : vector<2x128xf32> to vector<2x32xf32>
    %572 = math.tanh %571 : vector<2x32xf32>
    %573 = vector.extract_strided_slice %570 {offsets = [0, 32], sizes = [2, 32], strides = [1, 1]} : vector<2x96xf32> to vector<2x32xf32>
    %574 = arith.mulf %573, %558 : vector<2x32xf32>
    %575 = vector.extract_strided_slice %570 {offsets = [0, 0], sizes = [2, 32], strides = [1, 1]} : vector<2x96xf32> to vector<2x32xf32>
    %576 = arith.mulf %575, %572 : vector<2x32xf32>
    %577 = arith.addf %574, %576 : vector<2x32xf32>
    %578 = vector.extract_strided_slice %570 {offsets = [0, 64], sizes = [2, 32], strides = [1, 1]} : vector<2x96xf32> to vector<2x32xf32>
    %579 = math.tanh %577 : vector<2x32xf32>
    %580 = arith.mulf %578, %579 : vector<2x32xf32>
    %581 = vector.extract_strided_slice %547 {offsets = [4, 0], sizes = [2, 128], strides = [1, 1]} : vector<8x128xf32> to vector<2x128xf32>
    %cst_102 = arith.constant dense<0.000000e+00> : vector<2x128xf32>
    %582 = tpu.matmul %580, %544, %cst_102 {dimension_numbers = #tpu.dot_dimension_numbers<[1], [0], [0], [1], [0, 0, 1, 1], [], []>} : vector<2x32xf32>, vector<32x128xf32>, vector<2x128xf32> -> vector<2x128xf32>
    %583 = arith.addf %581, %582 : vector<2x128xf32>
    %584 = vector.extract_strided_slice %583 {offsets = [0, 0], sizes = [2, 96], strides = [1, 1]} : vector<2x128xf32> to vector<2x96xf32>
    %585 = arith.negf %584 : vector<2x96xf32>
    %586 = math.exp %585 : vector<2x96xf32>
    %cst_103 = arith.constant 1.000000e+00 : f32
    %587 = vector.broadcast %cst_103 : f32 to vector<2x96xf32>
    %588 = arith.addf %587, %586 : vector<2x96xf32>
    %589 = arith.divf %587, %588 : vector<2x96xf32>
    %590 = vector.extract_strided_slice %583 {offsets = [0, 96], sizes = [2, 32], strides = [1, 1]} : vector<2x128xf32> to vector<2x32xf32>
    %591 = math.tanh %590 : vector<2x32xf32>
    %592 = vector.extract_strided_slice %589 {offsets = [0, 32], sizes = [2, 32], strides = [1, 1]} : vector<2x96xf32> to vector<2x32xf32>
    %593 = arith.mulf %592, %577 : vector<2x32xf32>
    %594 = vector.extract_strided_slice %589 {offsets = [0, 0], sizes = [2, 32], strides = [1, 1]} : vector<2x96xf32> to vector<2x32xf32>
    %595 = arith.mulf %594, %591 : vector<2x32xf32>
    %596 = arith.addf %593, %595 : vector<2x32xf32>
    %597 = vector.extract_strided_slice %589 {offsets = [0, 64], sizes = [2, 32], strides = [1, 1]} : vector<2x96xf32> to vector<2x32xf32>
    %598 = math.tanh %596 : vector<2x32xf32>
    %599 = arith.mulf %597, %598 : vector<2x32xf32>
    %600 = vector.extract_strided_slice %547 {offsets = [6, 0], sizes = [2, 128], strides = [1, 1]} : vector<8x128xf32> to vector<2x128xf32>
    %cst_104 = arith.constant dense<0.000000e+00> : vector<2x128xf32>
    %601 = tpu.matmul %599, %544, %cst_104 {dimension_numbers = #tpu.dot_dimension_numbers<[1], [0], [0], [1], [0, 0, 1, 1], [], []>} : vector<2x32xf32>, vector<32x128xf32>, vector<2x128xf32> -> vector<2x128xf32>
    %602 = arith.addf %600, %601 : vector<2x128xf32>
    %603 = vector.extract_strided_slice %602 {offsets = [0, 0], sizes = [2, 96], strides = [1, 1]} : vector<2x128xf32> to vector<2x96xf32>
    %604 = arith.negf %603 : vector<2x96xf32>
    %605 = math.exp %604 : vector<2x96xf32>
    %cst_105 = arith.constant 1.000000e+00 : f32
    %606 = vector.broadcast %cst_105 : f32 to vector<2x96xf32>
    %607 = arith.addf %606, %605 : vector<2x96xf32>
    %608 = arith.divf %606, %607 : vector<2x96xf32>
    %609 = vector.extract_strided_slice %602 {offsets = [0, 96], sizes = [2, 32], strides = [1, 1]} : vector<2x128xf32> to vector<2x32xf32>
    %610 = math.tanh %609 : vector<2x32xf32>
    %611 = vector.extract_strided_slice %608 {offsets = [0, 32], sizes = [2, 32], strides = [1, 1]} : vector<2x96xf32> to vector<2x32xf32>
    %612 = arith.mulf %611, %596 : vector<2x32xf32>
    %613 = vector.extract_strided_slice %608 {offsets = [0, 0], sizes = [2, 32], strides = [1, 1]} : vector<2x96xf32> to vector<2x32xf32>
    %614 = arith.mulf %613, %610 : vector<2x32xf32>
    %615 = arith.addf %612, %614 : vector<2x32xf32>
    %616 = vector.extract_strided_slice %608 {offsets = [0, 64], sizes = [2, 32], strides = [1, 1]} : vector<2x96xf32> to vector<2x32xf32>
    %617 = math.tanh %615 : vector<2x32xf32>
    %618 = arith.mulf %616, %617 : vector<2x32xf32>
    %619 = tpu.concatenate %79, %156, %233, %310, %387, %464, %541, %618 in 0 : vector<2x32xf32>, vector<2x32xf32>, vector<2x32xf32>, vector<2x32xf32>, vector<2x32xf32>, vector<2x32xf32>, vector<2x32xf32>, vector<2x32xf32> -> vector<16x32xf32>
    %620 = vector.shape_cast %619 : vector<16x32xf32> to vector<1x16x32xf32>
    %cst_106 = arith.constant dense<0.000000e+00> : vector<1xf32>
    %621 = vector.multi_reduction <add>, %620, %cst_106 [1, 2] : vector<1x16x32xf32> to vector<1xf32>
    %622 = vector.shape_cast %621 : vector<1xf32> to vector<1x1x1xf32>
    %623 = vector.extract %622[0, 0, 0] : f32 from vector<1x1x1xf32>
    %cst_107 = arith.constant 5.120000e+02 : f32
    %624 = arith.divf %623, %cst_107 : f32
    %625 = vector.broadcast %624 : f32 to vector<16x32xf32>
    %626 = arith.subf %619, %625 : vector<16x32xf32>
    %627 = arith.mulf %626, %626 : vector<16x32xf32>
    %628 = vector.shape_cast %627 : vector<16x32xf32> to vector<1x16x32xf32>
    %cst_108 = arith.constant dense<0.000000e+00> : vector<1xf32>
    %629 = vector.multi_reduction <add>, %628, %cst_108 [1, 2] : vector<1x16x32xf32> to vector<1xf32>
    %630 = vector.shape_cast %629 : vector<1xf32> to vector<1x1x1xf32>
    %631 = vector.extract %630[0, 0, 0] : f32 from vector<1x1x1xf32>
    %cst_109 = arith.constant 5.110000e+02 : f32
    %632 = arith.divf %631, %cst_109 : f32
    %633 = math.rsqrt %632 : f32
    %634 = vector.broadcast %624 : f32 to vector<2x32xf32>
    %635 = arith.subf %618, %634 : vector<2x32xf32>
    %636 = vector.broadcast %633 : f32 to vector<2x32xf32>
    %637 = arith.mulf %635, %636 : vector<2x32xf32>
    %c0_110 = arith.constant 0 : index
    %c0_111 = arith.constant 0 : index
    %638 = vector.load %arg5[%c0_110, %c0_111] : memref<32x64xf32, #tpu.memory_space<vmem>>, vector<32x64xf32>
    %cst_112 = arith.constant dense<0.000000e+00> : vector<2x64xf32>
    %639 = tpu.matmul %637, %638, %cst_112 {dimension_numbers = #tpu.dot_dimension_numbers<[1], [0], [0], [1], [0, 0, 1, 1], [], []>} : vector<2x32xf32>, vector<32x64xf32>, vector<2x64xf32> -> vector<2x64xf32>
    %640 = arith.negf %639 : vector<2x64xf32>
    %641 = math.exp %640 : vector<2x64xf32>
    %cst_113 = arith.constant 1.000000e+00 : f32
    %642 = vector.broadcast %cst_113 : f32 to vector<2x64xf32>
    %643 = arith.addf %642, %641 : vector<2x64xf32>
    %644 = arith.divf %642, %643 : vector<2x64xf32>
    %645 = arith.mulf %639, %644 : vector<2x64xf32>
    %c0_114 = arith.constant 0 : index
    %c0_115 = arith.constant 0 : index
    %646 = vector.load %arg6[%c0_114, %c0_115] : memref<64x16xf32, #tpu.memory_space<vmem>>, vector<64x16xf32>
    %cst_116 = arith.constant dense<0.000000e+00> : vector<2x16xf32>
    %647 = tpu.matmul %645, %646, %cst_116 {dimension_numbers = #tpu.dot_dimension_numbers<[1], [0], [0], [1], [0, 0, 1, 1], [], []>} : vector<2x64xf32>, vector<64x16xf32>, vector<2x16xf32> -> vector<2x16xf32>
    %c0_117 = arith.constant 0 : index
    %c0_118 = arith.constant 0 : index
    %648 = vector.load %arg7[%c0_117, %c0_118] : memref<2x16xf32, #tpu.memory_space<vmem>>, vector<2x16xf32>
    tpu.vector_store %arg7[%c0_117, %c0_118], %647 {strides = array<i32>} : memref<2x16xf32, #tpu.memory_space<vmem>>, vector<2x16xf32>,
    return
  }
  func.func @transform_0(%arg0: i32) -> (i32, i32) {
    %c0_i32 = arith.constant 0 : i32
    %c0_i32_0 = arith.constant 0 : i32
    %c0_i32_1 = arith.constant 0 : i32
    return %c0_i32, %c0_i32_0 : i32, i32
  }
  func.func @transform_1(%arg0: i32) -> (i32, i32) {
    %c0_i32 = arith.constant 0 : i32
    %c0_i32_0 = arith.constant 0 : i32
    %c0_i32_1 = arith.constant 0 : i32
    return %c0_i32, %c0_i32_0 : i32, i32
  }
  func.func @transform_2(%arg0: i32) -> (i32, i32, i32) {
    %c0_i32 = arith.constant 0 : i32
    %c0_i32_0 = arith.constant 0 : i32
    %c0_i32_1 = arith.constant 0 : i32
    %c0_i32_2 = arith.constant 0 : i32
    return %c0_i32, %c0_i32_0, %c0_i32_1 : i32, i32, i32
  }
  func.func @transform_3(%arg0: i32) -> (i32, i32, i32) {
    %c0_i32 = arith.constant 0 : i32
    %c0_i32_0 = arith.constant 0 : i32
    %c0_i32_1 = arith.constant 0 : i32
    %c0_i32_2 = arith.constant 0 : i32
    return %c0_i32, %c0_i32_0, %c0_i32_1 : i32, i32, i32
  }
  func.func @transform_4(%arg0: i32) -> (i32, i32) {
    %c0_i32 = arith.constant 0 : i32
    %c0_i32_0 = arith.constant 0 : i32
    %c0_i32_1 = arith.constant 0 : i32
    return %c0_i32, %c0_i32_0 : i32, i32
  }
  func.func @transform_5(%arg0: i32) -> (i32, i32) {
    %c0_i32 = arith.constant 0 : i32
    %c0_i32_0 = arith.constant 0 : i32
    %c0_i32_1 = arith.constant 0 : i32
    return %c0_i32, %c0_i32_0 : i32, i32
  }
  func.func @transform_6(%arg0: i32) -> (i32, i32) {
    %c0_i32 = arith.constant 0 : i32
    %c0_i32_0 = arith.constant 0 : i32
    %c0_i32_1 = arith.constant 0 : i32
    return %c0_i32, %c0_i32_0 : i32, i32
  }
}

</mosaic_0001>

<llo_original>
// kernel: tpu_custom_call.1
$region0: #{tpu_custom_call.1}
  #allocation0 [shape = 'u32[]', space=smem, size = 0x4, offset = 0x4, fixed_abs, tag = 'smem constant byte address 0x4 - core index']
  #allocation1 [shape = 'u32[72,128]{1,0:T(1,128)}', space=vmem, size = 0x9000, scoped, tag = 'internal scratch']
  %s0 = inlined_call_operand.vmem [shape: f32[8,8], index: 0, kind: input, shape index: {}]
  %s1 = inlined_call_operand.vmem [shape: f32[8,128], index: 1, kind: input, shape index: {}]
  %s2 = inlined_call_operand.hbm [shape: f32[7,32,128], index: 2, kind: input, shape index: {}]
  %s3 = inlined_call_operand.hbm [shape: f32[8,32,128], index: 3, kind: input, shape index: {}]
  %s4 = inlined_call_operand.vmem [shape: f32[32,64], index: 4, kind: input, shape index: {}]
  %s5 = inlined_call_operand.vmem [shape: f32[64,16], index: 5, kind: input, shape index: {}]
  %s6 = inlined_call_operand.hbm [shape: f32[2,16], index: 6, kind: output, shape index: {}]
  %s7 = sld [smem:[#allocation0]]
  $region42: #{tpu_custom_call.1} parent=0
    _
  %s9 = ssub.s32 1, %s7
  %s10 = scalar_select 0, %s9, %s7
  $region1: #{tpu_custom_call.1} parent=0
    #allocation2 [shape = 'u8[114688]{0}', space=vmem, size = 0x1c000, scoped, tag = 'input window, operand 2, single buffered']
    #allocation3 [shape = 's32[1]{0}', space=sflag, size = 0x4, scoped, tag = 'scoped memory for tpu_custom_call.1']
    #allocation4 [shape = 's32[1]{0}', space=sflag, size = 0x4, scoped, tag = 'scoped memory for tpu_custom_call.1']
    #allocation5 [shape = 'u8[131072]{0}', space=vmem, size = 0x20000, scoped, tag = 'input window, operand 3, single buffered']
    #allocation6 [shape = 's32[1]{0}', space=sflag, size = 0x4, scoped, tag = 'scoped memory for tpu_custom_call.1']
    #allocation7 [shape = 'u8[1024]{0}', space=vmem, size = 0x400, scoped, tag = 'output window, operand 0, single buffered']
    %11 = vsyncpa [#allocation3], 0
    %12 = vsyncpa [#allocation6], 0
    %13 = vsyncpa [#allocation4], 0
    // Predicated region
    $region2: #{tpu_custom_call.1} parent=1 // pred_check
      _
    $region3: #{tpu_custom_call.1} parent=1 // pred_check_branch
      %15 = sbr.rel (0) target = $region5
    $region4: #{tpu_custom_call.1} parent=1 // pred_region
      _
    $region5: #{tpu_custom_call.1} parent=1 // pred_fallthru
      _
    // Predicated region
    $region6: #{tpu_custom_call.1} parent=1 // pred_check
      _
    $region7: #{tpu_custom_call.1} parent=1 // pred_check_branch
      %17 = sbr.rel (0) target = $region9
    $region8: #{tpu_custom_call.1} parent=1 // pred_region
      _
    $region9: #{tpu_custom_call.1} parent=1 // pred_fallthru
      _
    // Predicated region
    $region10: #{tpu_custom_call.1} parent=1 // pred_check
      _
    $region11: #{tpu_custom_call.1} parent=1 // pred_check_branch
      %19 = sbr.rel (0) target = $region13
    $region12: #{tpu_custom_call.1} parent=1 // pred_region
      %21 = vsyncadd [#allocation3], 0
      %s22 = sshll.u32 %s2, 4
      %s23 = int_to_ptr.hbm [resolvable:$true] %s22
      %s24 = sshll.u32 [#allocation2], 4
      %s25 = int_to_ptr.vmem [resolvable:$true] %s24
      %30 = dma.hbm_to_vmem [thread:$0]  %s23, 3584, %s25, [#allocation3], 128, 128, 8
    $region13: #{tpu_custom_call.1} parent=1 // pred_fallthru
      _
    // Predicated region
    $region14: #{tpu_custom_call.1} parent=1 // pred_check
      _
    $region15: #{tpu_custom_call.1} parent=1 // pred_check_branch
      %32 = sbr.rel (0) target = $region17
    $region16: #{tpu_custom_call.1} parent=1 // pred_region
      %34 = vsyncadd [#allocation6], 0
      %s35 = sshll.u32 %s3, 4
      %s36 = int_to_ptr.hbm [resolvable:$true] %s35
      %s37 = sshll.u32 [#allocation5], 4
      %s38 = int_to_ptr.vmem [resolvable:$true] %s37
      %43 = dma.hbm_to_vmem [thread:$0]  %s36, 4096, %s38, [#allocation6], 128, 128, 8
    $region17: #{tpu_custom_call.1} parent=1 // pred_fallthru
      _
    // Predicated region
    $region18: #{tpu_custom_call.1} parent=1 // pred_check
      _
    $region19: #{tpu_custom_call.1} parent=1 // pred_check_branch
      %45 = sbr.rel (0) target = $region21
    $region20: #{tpu_custom_call.1} parent=1 // pred_region
      _
    $region21: #{tpu_custom_call.1} parent=1 // pred_fallthru
      _
    // Predicated region
    $region22: #{tpu_custom_call.1} parent=1 // pred_check
      _
    $region23: #{tpu_custom_call.1} parent=1 // pred_check_branch
      %47 = sbr.rel (0) target = $region25
    $region24: #{tpu_custom_call.1} parent=1 // pred_region
      _
    $region25: #{tpu_custom_call.1} parent=1 // pred_fallthru
      _
    // Predicated region
    $region26: #{tpu_custom_call.1} parent=1 // pred_check
      _
    $region27: #{tpu_custom_call.1} parent=1 // pred_check_branch
      %49 = sbr.rel (0) target = $region29
    $region28: #{tpu_custom_call.1} parent=1 // pred_region
      %51 = dma.done [#allocation3], 3584
    $region29: #{tpu_custom_call.1} parent=1 // pred_fallthru
      _
    // Predicated region
    $region30: #{tpu_custom_call.1} parent=1 // pred_check
      _
    $region31: #{tpu_custom_call.1} parent=1 // pred_check_branch
      %53 = sbr.rel (0) target = $region33
    $region32: #{tpu_custom_call.1} parent=1 // pred_region
      %55 = dma.done [#allocation6], 4096
    $region33: #{tpu_custom_call.1} parent=1 // pred_fallthru
      _
    %v56 = vld [vmem:[%s0] sm:$0xff]
    %v57 = vmul.f32 %v56, 0.999995
    %v58 = vld [vmem:[#allocation5] sm:$0xff]
    %v59 = vld [vmem:[#allocation5 + $0x8] sm:$0xff]
    %v60 = vld [vmem:[#allocation5 + $0x10] sm:$0xff]
    %v61 = vld [vmem:[#allocation5 + $0x18] sm:$0xff]
    %v62 = vld [vmem:[%s1] sm:$0xff]
    %vm63 = vcmask 64512
    %v65 = vsel %vm63, %v57, 0
    %67 = vmatpush.msra.mxu0 0.0
    %68 = vmatpush.msra.mxu0 0.0
    %69 = vmatpush.msra.mxu0 0.0
    %70 = vmatpush.msra.mxu0 0.0
    %71 = vmatpush.msra.mxu0 0.0
    %72 = vmatpush.msra.mxu0 0.0
    %73 = vmatpush.msra.mxu0 0.0
    %74 = vmatpush.msra.mxu0 0.0
    %75 = vmatpush.msra.mxu0 0.0
    %76 = vmatpush.msra.mxu0 0.0
    %77 = vmatpush.msra.mxu0 0.0
    %78 = vmatpush.msra.mxu0 0.0
    %79 = vmatpush.msra.mxu0 0.0
    %80 = vmatpush.msra.mxu0 0.0
    %81 = vmatpush.msra.mxu0 0.0
    %82 = vmatpush.msra.mxu0 %v62
    %83 = vmatmul.f32.gmra.mxu0 %v65
    %v84 = vpop.f32.mrf.mxu0
    %v85 = vadd.f32 0.0, %v84
    %86 = vdwg.mxu0
    %v87 = vxor.u32 %v85, 2147483648
    %v88 = vmul.f32 %v87, 1.442695
    %v89 = vpow.pop %v88
    %v90 = vadd.f32 %v89, 1.0
    %v91 = vrcp.pop %v90
    %v92 = vmul.f32 %v90, %v91
    %v93 = vsub.f32 1.0, %v92
    %v94 = vmul.f32 %v91, %v93
    %v95 = vadd.f32 %v91, %v94
    %vm96 = vweird.f32 %v90
    %vm97 = vweird.f32 %v91
    %vm98 = vmor %vm96, %vm97
    %v99 = vsel %vm98, %v91, %v95
    %v100 = vand.u32 2147483647, %v90
    %vm101 = vcmp.eq.f32.partialorder %v100, 8.507059e+37
    %v102 = vand.u32 %v90, 2147483648
    %v103 = vor.u32 1.1754944e-38, %v102
    %v104 = vsel %vm101, %v103, %v99
    %v105 = vmul.f32 1.0, %v104
    %v106 = vtanh.pop %v85
    %108 = vrot.lane.b32.xlu0 %v106, 32
    %v109 = vpop.permute.xlu0 %108
    %v111 = vmul.f32 %v105, %v109
    %v112 = vtanh.pop %v111
    %114 = vrot.lane.b32.xlu0 %v112, 64
    %v115 = vpop.permute.xlu0 %114
    %v117 = vmul.f32 %v105, %v115
    %119 = vrot.lane.b32.xlu0 %v117, 64
    %v120 = vpop.permute.xlu0 %119
    %vm121 = vcmask 261120
    %v122 = vsel %vm121, %v120, 0
    %124 = vmatpush.msra.mxu0 0.0
    %125 = vmatpush.msra.mxu0 0.0
    %126 = vmatpush.msra.mxu0 0.0
    %127 = vmatpush.msra.mxu0 0.0
    %128 = vmatpush.msra.mxu0 0.0
    %129 = vmatpush.msra.mxu0 0.0
    %130 = vmatpush.msra.mxu0 0.0
    %131 = vmatpush.msra.mxu0 0.0
    %132 = vmatpush.msra.mxu0 0.0
    %133 = vmatpush.msra.mxu0 0.0
    %134 = vmatpush.msra.mxu0 0.0
    %135 = vmatpush.msra.mxu0 0.0
    %136 = vmatpush.msra.mxu0 %v61
    %137 = vmatpush.msra.mxu0 %v60
    %138 = vmatpush.msra.mxu0 %v59
    %139 = vmatpush.msra.mxu0 %v58
    %140 = vmatmul.f32.gmra.mxu0 %v122
    %v141 = vpop.f32.mrf.mxu0
    %v142 = vadd.f32 0.0, %v141
    %143 = vdwg.mxu0
    %v145 = vrot.slane %v142, 6
    %v147 = vadd.f32 %v85, %v145
    %v148 = vxor.u32 %v147, 2147483648
    %v149 = vmul.f32 %v148, 1.442695
    %v150 = vpow.pop %v149
    %v151 = vadd.f32 %v150, 1.0
    %v152 = vrcp.pop %v151
    %v153 = vmul.f32 %v151, %v152
    %v154 = vsub.f32 1.0, %v153
    %v155 = vmul.f32 %v152, %v154
    %v156 = vadd.f32 %v152, %v155
    %vm157 = vweird.f32 %v151
    %vm158 = vweird.f32 %v152
    %vm159 = vmor %vm157, %vm158
    %v160 = vsel %vm159, %v152, %v156
    %v161 = vand.u32 2147483647, %v151
    %vm162 = vcmp.eq.f32.partialorder %v161, 8.507059e+37
    %v163 = vand.u32 %v151, 2147483648
    %v164 = vor.u32 1.1754944e-38, %v163
    %v165 = vsel %vm162, %v164, %v160
    %v166 = vmul.f32 1.0, %v165
    %v167 = vtanh.pop %v147
    %v169 = vrot.slane %v111, 6
    %170 = vrot.lane.b32.xlu0 %v169, 32
    %v171 = vpop.permute.xlu0 %170
    %v173 = vmul.f32 %v166, %v171
    %175 = vrot.lane.b32.xlu0 %v167, 32
    %v176 = vpop.permute.xlu0 %175
    %v178 = vmul.f32 %v166, %v176
    %180 = vrot.lane.b32.xlu0 %v178, 32
    %v181 = vpop.permute.xlu0 %180
    %v183 = vadd.f32 %v173, %v181
    %v184 = vtanh.pop %v183
    %186 = vrot.lane.b32.xlu0 %v184, 32
    %v187 = vpop.permute.xlu0 %186
    %v189 = vmul.f32 %v166, %v187
    %v191 = vrot.slane %v189, 2
    %192 = vrot.lane.b32.xlu0 %v191, 64
    %v193 = vpop.permute.xlu0 %192
    %v194 = vsel %vm121, %v193, 0
    %196 = vmatpush.msra.mxu0 0.0
    %197 = vmatpush.msra.mxu0 0.0
    %198 = vmatpush.msra.mxu0 0.0
    %199 = vmatpush.msra.mxu0 0.0
    %200 = vmatpush.msra.mxu0 0.0
    %201 = vmatpush.msra.mxu0 0.0
    %202 = vmatpush.msra.mxu0 0.0
    %203 = vmatpush.msra.mxu0 0.0
    %204 = vmatpush.msra.mxu0 0.0
    %205 = vmatpush.msra.mxu0 0.0
    %206 = vmatpush.msra.mxu0 0.0
    %207 = vmatpush.msra.mxu0 0.0
    %208 = vmatpush.msra.mxu0 %v61
    %209 = vmatpush.msra.mxu0 %v60
    %210 = vmatpush.msra.mxu0 %v59
    %211 = vmatpush.msra.mxu0 %v58
    %212 = vmatmul.f32.gmra.mxu0 %v194
    %v213 = vpop.f32.mrf.mxu0
    %v214 = vadd.f32 0.0, %v213
    %215 = vdwg.mxu0
    %v217 = vrot.slane %v214, 4
    %v219 = vadd.f32 %v85, %v217
    %v220 = vxor.u32 %v219, 2147483648
    %v221 = vmul.f32 %v220, 1.442695
    %v222 = vpow.pop %v221
    %v223 = vadd.f32 %v222, 1.0
    %v224 = vrcp.pop %v223
    %v225 = vmul.f32 %v223, %v224
    %v226 = vsub.f32 1.0, %v225
    %v227 = vmul.f32 %v224, %v226
    %v228 = vadd.f32 %v224, %v227
    %vm229 = vweird.f32 %v223
    %vm230 = vweird.f32 %v224
    %vm231 = vmor %vm229, %vm230
    %v232 = vsel %vm231, %v224, %v228
    %v233 = vand.u32 2147483647, %v223
    %vm234 = vcmp.eq.f32.partialorder %v233, 8.507059e+37
    %v235 = vand.u32 %v223, 2147483648
    %v236 = vor.u32 1.1754944e-38, %v235
    %v237 = vsel %vm234, %v236, %v232
    %v238 = vmul.f32 1.0, %v237
    %v239 = vtanh.pop %v219
    %v241 = vrot.slane %v183, 6
    %v243 = vmul.f32 %v238, %v241
    %245 = vrot.lane.b32.xlu0 %v239, 32
    %v246 = vpop.permute.xlu0 %245
    %v248 = vmul.f32 %v238, %v246
    %250 = vrot.lane.b32.xlu0 %v248, 32
    %v251 = vpop.permute.xlu0 %250
    %v253 = vadd.f32 %v243, %v251
    %v254 = vtanh.pop %v253
    %256 = vrot.lane.b32.xlu0 %v254, 32
    %v257 = vpop.permute.xlu0 %256
    %v259 = vmul.f32 %v238, %v257
    %v261 = vrot.slane %v259, 4
    %262 = vrot.lane.b32.xlu0 %v261, 64
    %v263 = vpop.permute.xlu0 %262
    %v264 = vsel %vm121, %v263, 0
    %266 = vmatpush.msra.mxu0 0.0
    %267 = vmatpush.msra.mxu0 0.0
    %268 = vmatpush.msra.mxu0 0.0
    %269 = vmatpush.msra.mxu0 0.0
    %270 = vmatpush.msra.mxu0 0.0
    %271 = vmatpush.msra.mxu0 0.0
    %272 = vmatpush.msra.mxu0 0.0
    %273 = vmatpush.msra.mxu0 0.0
    %274 = vmatpush.msra.mxu0 0.0
    %275 = vmatpush.msra.mxu0 0.0
    %276 = vmatpush.msra.mxu0 0.0
    %277 = vmatpush.msra.mxu0 0.0
    %278 = vmatpush.msra.mxu0 %v61
    %279 = vmatpush.msra.mxu0 %v60
    %280 = vmatpush.msra.mxu0 %v59
    %281 = vmatpush.msra.mxu0 %v58
    %282 = vmatmul.f32.gmra.mxu0 %v264
    %v283 = vpop.f32.mrf.mxu0
    %v284 = vadd.f32 0.0, %v283
    %285 = vdwg.mxu0
    %v287 = vrot.slane %v284, 2
    %v289 = vadd.f32 %v85, %v287
    %v290 = vxor.u32 %v289, 2147483648
    %v291 = vmul.f32 %v290, 1.442695
    %v292 = vpow.pop %v291
    %v293 = vadd.f32 %v292, 1.0
    %v294 = vrcp.pop %v293
    %v295 = vmul.f32 %v293, %v294
    %v296 = vsub.f32 1.0, %v295
    %v297 = vmul.f32 %v294, %v296
    %v298 = vadd.f32 %v294, %v297
    %vm299 = vweird.f32 %v293
    %vm300 = vweird.f32 %v294
    %vm301 = vmor %vm299, %vm300
    %v302 = vsel %vm301, %v294, %v298
    %v303 = vand.u32 2147483647, %v293
    %vm304 = vcmp.eq.f32.partialorder %v303, 8.507059e+37
    %v305 = vand.u32 %v293, 2147483648
    %v306 = vor.u32 1.1754944e-38, %v305
    %v307 = vsel %vm304, %v306, %v302
    %v308 = vmul.f32 1.0, %v307
    %v309 = vtanh.pop %v289
    %v311 = vrot.slane %v253, 6
    %v313 = vmul.f32 %v308, %v311
    %315 = vrot.lane.b32.xlu0 %v309, 32
    %v316 = vpop.permute.xlu0 %315
    %v318 = vmul.f32 %v308, %v316
    %320 = vrot.lane.b32.xlu0 %v318, 32
    %v321 = vpop.permute.xlu0 %320
    %v323 = vadd.f32 %v313, %v321
    %v324 = vtanh.pop %v323
    %326 = vrot.lane.b32.xlu0 %v324, 32
    %v327 = vpop.permute.xlu0 %326
    %v329 = vmul.f32 %v308, %v327
    %vm330 = vcmask 1041408
    %v331 = vsel %vm330, %v117, %v189
    %vm332 = vcmask 1043456
    %v333 = vsel %vm332, %v331, %v259
    %vm334 = vcmask 1045504
    %v335 = vsel %vm334, %v333, %v329
    %s336 = scalar_lea.vmem [#allocation5], 32
    %v337 = vld [vmem:[%s336] sm:$0xff]
    %v338 = vld [vmem:[%s336 + $0x8] sm:$0xff]
    %v339 = vld [vmem:[%s336 + $0x10] sm:$0xff]
    %v340 = vld [vmem:[%s336 + $0x18] sm:$0xff]
    %v341 = vld [vmem:[#allocation2] sm:$0xff]
    %v342 = vld [vmem:[#allocation2 + $0x8] sm:$0xff]
    %v343 = vld [vmem:[#allocation2 + $0x10] sm:$0xff]
    %v344 = vld [vmem:[#allocation2 + $0x18] sm:$0xff]
    %346 = vrot.lane.b32.xlu0 %v335, 64
    %v347 = vpop.permute.xlu0 %346
    %v348 = vsel %vm121, %v347, 0
    %350 = vmatpush.msra.mxu0 0.0
    %351 = vmatpush.msra.mxu0 0.0
    %352 = vmatpush.msra.mxu0 0.0
    %353 = vmatpush.msra.mxu0 0.0
    %354 = vmatpush.msra.mxu0 0.0
    %355 = vmatpush.msra.mxu0 0.0
    %356 = vmatpush.msra.mxu0 0.0
    %357 = vmatpush.msra.mxu0 0.0
    %358 = vmatpush.msra.mxu0 0.0
    %359 = vmatpush.msra.mxu0 0.0
    %360 = vmatpush.msra.mxu0 0.0
    %361 = vmatpush.msra.mxu0 0.0
    %362 = vmatpush.msra.mxu0 %v344
    %363 = vmatpush.msra.mxu0 %v343
    %364 = vmatpush.msra.mxu0 %v342
    %365 = vmatpush.msra.mxu0 %v341
    %366 = vmatmul.f32.gmra.mxu0 %v348
    %v367 = vpop.f32.mrf.mxu0
    %v368 = vadd.f32 0.0, %v367
    %369 = vdwg.mxu0
    %v370 = vxor.u32 %v368, 2147483648
    %v371 = vmul.f32 %v370, 1.442695
    %v372 = vpow.pop %v371
    %v373 = vadd.f32 %v372, 1.0
    %v374 = vrcp.pop %v373
    %v375 = vmul.f32 %v373, %v374
    %v376 = vsub.f32 1.0, %v375
    %v377 = vmul.f32 %v374, %v376
    %v378 = vadd.f32 %v374, %v377
    %vm379 = vweird.f32 %v373
    %vm380 = vweird.f32 %v374
    %vm381 = vmor %vm379, %vm380
    %v382 = vsel %vm381, %v374, %v378
    %v383 = vand.u32 2147483647, %v373
    %vm384 = vcmp.eq.f32.partialorder %v383, 8.507059e+37
    %v385 = vand.u32 %v373, 2147483648
    %v386 = vor.u32 1.1754944e-38, %v385
    %v387 = vsel %vm384, %v386, %v382
    %v388 = vmul.f32 1.0, %v387
    %v389 = vtanh.pop %v368
    %391 = vrot.lane.b32.xlu0 %v389, 32
    %v392 = vpop.permute.xlu0 %391
    %v394 = vmul.f32 %v388, %v392
    %v395 = vtanh.pop %v394
    %397 = vrot.lane.b32.xlu0 %v395, 64
    %v398 = vpop.permute.xlu0 %397
    %v400 = vmul.f32 %v388, %v398
    %402 = vrot.lane.b32.xlu0 %v400, 64
    %v403 = vpop.permute.xlu0 %402
    %v404 = vsel %vm121, %v403, 0
    %406 = vmatpush.msra.mxu0 0.0
    %407 = vmatpush.msra.mxu0 0.0
    %408 = vmatpush.msra.mxu0 0.0
    %409 = vmatpush.msra.mxu0 0.0
    %410 = vmatpush.msra.mxu0 0.0
    %411 = vmatpush.msra.mxu0 0.0
    %412 = vmatpush.msra.mxu0 0.0
    %413 = vmatpush.msra.mxu0 0.0
    %414 = vmatpush.msra.mxu0 0.0
    %415 = vmatpush.msra.mxu0 0.0
    %416 = vmatpush.msra.mxu0 0.0
    %417 = vmatpush.msra.mxu0 0.0
    %418 = vmatpush.msra.mxu0 %v340
    %419 = vmatpush.msra.mxu0 %v339
    %420 = vmatpush.msra.mxu0 %v338
    %421 = vmatpush.msra.mxu0 %v337
    %422 = vmatmul.f32.gmra.mxu0 %v404
    %v423 = vpop.f32.mrf.mxu0
    %v424 = vadd.f32 0.0, %v423
    %425 = vdwg.mxu0
    %v427 = vrot.slane %v424, 6
    %v429 = vadd.f32 %v368, %v427
    %v430 = vxor.u32 %v429, 2147483648
    %v431 = vmul.f32 %v430, 1.442695
    %v432 = vpow.pop %v431
    %v433 = vadd.f32 %v432, 1.0
    %v434 = vrcp.pop %v433
    %v435 = vmul.f32 %v433, %v434
    %v436 = vsub.f32 1.0, %v435
    %v437 = vmul.f32 %v434, %v436
    %v438 = vadd.f32 %v434, %v437
    %vm439 = vweird.f32 %v433
    %vm440 = vweird.f32 %v434
    %vm441 = vmor %vm439, %vm440
    %v442 = vsel %vm441, %v434, %v438
    %v443 = vand.u32 2147483647, %v433
    %vm444 = vcmp.eq.f32.partialorder %v443, 8.507059e+37
    %v445 = vand.u32 %v433, 2147483648
    %v446 = vor.u32 1.1754944e-38, %v445
    %v447 = vsel %vm444, %v446, %v442
    %v448 = vmul.f32 1.0, %v447
    %v449 = vtanh.pop %v429
    %v451 = vrot.slane %v394, 6
    %452 = vrot.lane.b32.xlu0 %v451, 32
    %v453 = vpop.permute.xlu0 %452
    %v455 = vmul.f32 %v448, %v453
    %457 = vrot.lane.b32.xlu0 %v449, 32
    %v458 = vpop.permute.xlu0 %457
    %v460 = vmul.f32 %v448, %v458
    %462 = vrot.lane.b32.xlu0 %v460, 32
    %v463 = vpop.permute.xlu0 %462
    %v465 = vadd.f32 %v455, %v463
    %v466 = vtanh.pop %v465
    %468 = vrot.lane.b32.xlu0 %v466, 32
    %v469 = vpop.permute.xlu0 %468
    %v471 = vmul.f32 %v448, %v469
    %v473 = vrot.slane %v471, 2
    %474 = vrot.lane.b32.xlu0 %v473, 64
    %v475 = vpop.permute.xlu0 %474
    %v476 = vsel %vm121, %v475, 0
    %478 = vmatpush.msra.mxu0 0.0
    %479 = vmatpush.msra.mxu0 0.0
    %480 = vmatpush.msra.mxu0 0.0
    %481 = vmatpush.msra.mxu0 0.0
    %482 = vmatpush.msra.mxu0 0.0
    %483 = vmatpush.msra.mxu0 0.0
    %484 = vmatpush.msra.mxu0 0.0
    %485 = vmatpush.msra.mxu0 0.0
    %486 = vmatpush.msra.mxu0 0.0
    %487 = vmatpush.msra.mxu0 0.0
    %488 = vmatpush.msra.mxu0 0.0
    %489 = vmatpush.msra.mxu0 0.0
    %490 = vmatpush.msra.mxu0 %v340
    %491 = vmatpush.msra.mxu0 %v339
    %492 = vmatpush.msra.mxu0 %v338
    %493 = vmatpush.msra.mxu0 %v337
    %494 = vmatmul.f32.gmra.mxu0 %v476
    %v495 = vpop.f32.mrf.mxu0
    %v496 = vadd.f32 0.0, %v495
    %497 = vdwg.mxu0
    %v499 = vrot.slane %v496, 4
    %v501 = vadd.f32 %v368, %v499
    %v502 = vxor.u32 %v501, 2147483648
    %v503 = vmul.f32 %v502, 1.442695
    %v504 = vpow.pop %v503
    %v505 = vadd.f32 %v504, 1.0
    %v506 = vrcp.pop %v505
    %v507 = vmul.f32 %v505, %v506
    %v508 = vsub.f32 1.0, %v507
    %v509 = vmul.f32 %v506, %v508
    %v510 = vadd.f32 %v506, %v509
    %vm511 = vweird.f32 %v505
    %vm512 = vweird.f32 %v506
    %vm513 = vmor %vm511, %vm512
    %v514 = vsel %vm513, %v506, %v510
    %v515 = vand.u32 2147483647, %v505
    %vm516 = vcmp.eq.f32.partialorder %v515, 8.507059e+37
    %v517 = vand.u32 %v505, 2147483648
    %v518 = vor.u32 1.1754944e-38, %v517
    %v519 = vsel %vm516, %v518, %v514
    %v520 = vmul.f32 1.0, %v519
    %v521 = vtanh.pop %v501
    %v523 = vrot.slane %v465, 6
    %v525 = vmul.f32 %v520, %v523
    %527 = vrot.lane.b32.xlu0 %v521, 32
    %v528 = vpop.permute.xlu0 %527
    %v530 = vmul.f32 %v520, %v528
    %532 = vrot.lane.b32.xlu0 %v530, 32
    %v533 = vpop.permute.xlu0 %532
    %v535 = vadd.f32 %v525, %v533
    %v536 = vtanh.pop %v535
    %538 = vrot.lane.b32.xlu0 %v536, 32
    %v539 = vpop.permute.xlu0 %538
    %v541 = vmul.f32 %v520, %v539
    %v543 = vrot.slane %v541, 4
    %544 = vrot.lane.b32.xlu0 %v543, 64
    %v545 = vpop.permute.xlu0 %544
    %v546 = vsel %vm121, %v545, 0
    %548 = vmatpush.msra.mxu0 0.0
    %549 = vmatpush.msra.mxu0 0.0
    %550 = vmatpush.msra.mxu0 0.0
    %551 = vmatpush.msra.mxu0 0.0
    %552 = vmatpush.msra.mxu0 0.0
    %553 = vmatpush.msra.mxu0 0.0
    %554 = vmatpush.msra.mxu0 0.0
    %555 = vmatpush.msra.mxu0 0.0
    %556 = vmatpush.msra.mxu0 0.0
    %557 = vmatpush.msra.mxu0 0.0
    %558 = vmatpush.msra.mxu0 0.0
    %559 = vmatpush.msra.mxu0 0.0
    %560 = vmatpush.msra.mxu0 %v340
    %561 = vmatpush.msra.mxu0 %v339
    %562 = vmatpush.msra.mxu0 %v338
    %563 = vmatpush.msra.mxu0 %v337
    %564 = vmatmul.f32.gmra.mxu0 %v546
    %v565 = vpop.f32.mrf.mxu0
    %v566 = vadd.f32 0.0, %v565
    %567 = vdwg.mxu0
    %v569 = vrot.slane %v566, 2
    %v571 = vadd.f32 %v368, %v569
    %v572 = vxor.u32 %v571, 2147483648
    %v573 = vmul.f32 %v572, 1.442695
    %v574 = vpow.pop %v573
    %v575 = vadd.f32 %v574, 1.0
    %v576 = vrcp.pop %v575
    %v577 = vmul.f32 %v575, %v576
    %v578 = vsub.f32 1.0, %v577
    %v579 = vmul.f32 %v576, %v578
    %v580 = vadd.f32 %v576, %v579
    %vm581 = vweird.f32 %v575
    %vm582 = vweird.f32 %v576
    %vm583 = vmor %vm581, %vm582
    %v584 = vsel %vm583, %v576, %v580
    %v585 = vand.u32 2147483647, %v575
    %vm586 = vcmp.eq.f32.partialorder %v585, 8.507059e+37
    %v587 = vand.u32 %v575, 2147483648
    %v588 = vor.u32 1.1754944e-38, %v587
    %v589 = vsel %vm586, %v588, %v584
    %v590 = vmul.f32 1.0, %v589
    %v591 = vtanh.pop %v571
    %v593 = vrot.slane %v535, 6
    %v595 = vmul.f32 %v590, %v593
    %597 = vrot.lane.b32.xlu0 %v591, 32
    %v598 = vpop.permute.xlu0 %597
    %v600 = vmul.f32 %v590, %v598
    %602 = vrot.lane.b32.xlu0 %v600, 32
    %v603 = vpop.permute.xlu0 %602
    %v605 = vadd.f32 %v595, %v603
    %v606 = vtanh.pop %v605
    %608 = vrot.lane.b32.xlu0 %v606, 32
    %v609 = vpop.permute.xlu0 %608
    %v611 = vmul.f32 %v590, %v609
    %v612 = vsel %vm330, %v400, %v471
    %v613 = vsel %vm332, %v612, %v541
    %v614 = vsel %vm334, %v613, %v611
    %s615 = scalar_lea.vmem [#allocation5], 64
    %v616 = vld [vmem:[%s615] sm:$0xff]
    %v617 = vld [vmem:[%s615 + $0x8] sm:$0xff]
    %v618 = vld [vmem:[%s615 + $0x10] sm:$0xff]
    %v619 = vld [vmem:[%s615 + $0x18] sm:$0xff]
    %s620 = scalar_lea.vmem [#allocation2], 32
    %v621 = vld [vmem:[%s620] sm:$0xff]
    %v622 = vld [vmem:[%s620 + $0x8] sm:$0xff]
    %v623 = vld [vmem:[%s620 + $0x10] sm:$0xff]
    %v624 = vld [vmem:[%s620 + $0x18] sm:$0xff]
    %626 = vrot.lane.b32.xlu0 %v614, 64
    %v627 = vpop.permute.xlu0 %626
    %v628 = vsel %vm121, %v627, 0
    %630 = vmatpush.msra.mxu0 0.0
    %631 = vmatpush.msra.mxu0 0.0
    %632 = vmatpush.msra.mxu0 0.0
    %633 = vmatpush.msra.mxu0 0.0
    %634 = vmatpush.msra.mxu0 0.0
    %635 = vmatpush.msra.mxu0 0.0
    %636 = vmatpush.msra.mxu0 0.0
    %637 = vmatpush.msra.mxu0 0.0
    %638 = vmatpush.msra.mxu0 0.0
    %639 = vmatpush.msra.mxu0 0.0
    %640 = vmatpush.msra.mxu0 0.0
    %641 = vmatpush.msra.mxu0 0.0
    %642 = vmatpush.msra.mxu0 %v624
    %643 = vmatpush.msra.mxu0 %v623
    %644 = vmatpush.msra.mxu0 %v622
    %645 = vmatpush.msra.mxu0 %v621
    %646 = vmatmul.f32.gmra.mxu0 %v628
    %v647 = vpop.f32.mrf.mxu0
    %v648 = vadd.f32 0.0, %v647
    %649 = vdwg.mxu0
    %v650 = vxor.u32 %v648, 2147483648
    %v651 = vmul.f32 %v650, 1.442695
    %v652 = vpow.pop %v651
    %v653 = vadd.f32 %v652, 1.0
    %v654 = vrcp.pop %v653
    %v655 = vmul.f32 %v653, %v654
    %v656 = vsub.f32 1.0, %v655
    %v657 = vmul.f32 %v654, %v656
    %v658 = vadd.f32 %v654, %v657
    %vm659 = vweird.f32 %v653
    %vm660 = vweird.f32 %v654
    %vm661 = vmor %vm659, %vm660
    %v662 = vsel %vm661, %v654, %v658
    %v663 = vand.u32 2147483647, %v653
    %vm664 = vcmp.eq.f32.partialorder %v663, 8.507059e+37
    %v665 = vand.u32 %v653, 2147483648
    %v666 = vor.u32 1.1754944e-38, %v665
    %v667 = vsel %vm664, %v666, %v662
    %v668 = vmul.f32 1.0, %v667
    %v669 = vtanh.pop %v648
    %671 = vrot.lane.b32.xlu0 %v669, 32
    %v672 = vpop.permute.xlu0 %671
    %v674 = vmul.f32 %v668, %v672
    %v675 = vtanh.pop %v674
    %677 = vrot.lane.b32.xlu0 %v675, 64
    %v678 = vpop.permute.xlu0 %677
    %v680 = vmul.f32 %v668, %v678
    %682 = vrot.lane.b32.xlu0 %v680, 64
    %v683 = vpop.permute.xlu0 %682
    %v684 = vsel %vm121, %v683, 0
    %686 = vmatpush.msra.mxu0 0.0
    %687 = vmatpush.msra.mxu0 0.0
    %688 = vmatpush.msra.mxu0 0.0
    %689 = vmatpush.msra.mxu0 0.0
    %690 = vmatpush.msra.mxu0 0.0
    %691 = vmatpush.msra.mxu0 0.0
    %692 = vmatpush.msra.mxu0 0.0
    %693 = vmatpush.msra.mxu0 0.0
    %694 = vmatpush.msra.mxu0 0.0
    %695 = vmatpush.msra.mxu0 0.0
    %696 = vmatpush.msra.mxu0 0.0
    %697 = vmatpush.msra.mxu0 0.0
    %698 = vmatpush.msra.mxu0 %v619
    %699 = vmatpush.msra.mxu0 %v618
    %700 = vmatpush.msra.mxu0 %v617
    %701 = vmatpush.msra.mxu0 %v616
    %702 = vmatmul.f32.gmra.mxu0 %v684
    %v703 = vpop.f32.mrf.mxu0
    %v704 = vadd.f32 0.0, %v703
    %705 = vdwg.mxu0
    %v707 = vrot.slane %v704, 6
    %v709 = vadd.f32 %v648, %v707
    %v710 = vxor.u32 %v709, 2147483648
    %v711 = vmul.f32 %v710, 1.442695
    %v712 = vpow.pop %v711
    %v713 = vadd.f32 %v712, 1.0
    %v714 = vrcp.pop %v713
    %v715 = vmul.f32 %v713, %v714
    %v716 = vsub.f32 1.0, %v715
    %v717 = vmul.f32 %v714, %v716
    %v718 = vadd.f32 %v714, %v717
    %vm719 = vweird.f32 %v713
    %vm720 = vweird.f32 %v714
    %vm721 = vmor %vm719, %vm720
    %v722 = vsel %vm721, %v714, %v718
    %v723 = vand.u32 2147483647, %v713
    %vm724 = vcmp.eq.f32.partialorder %v723, 8.507059e+37
    %v725 = vand.u32 %v713, 2147483648
    %v726 = vor.u32 1.1754944e-38, %v725
    %v727 = vsel %vm724, %v726, %v722
    %v728 = vmul.f32 1.0, %v727
    %v729 = vtanh.pop %v709
    %v731 = vrot.slane %v674, 6
    %732 = vrot.lane.b32.xlu0 %v731, 32
    %v733 = vpop.permute.xlu0 %732
    %v735 = vmul.f32 %v728, %v733
    %737 = vrot.lane.b32.xlu0 %v729, 32
    %v738 = vpop.permute.xlu0 %737
    %v740 = vmul.f32 %v728, %v738
    %742 = vrot.lane.b32.xlu0 %v740, 32
    %v743 = vpop.permute.xlu0 %742
    %v745 = vadd.f32 %v735, %v743
    %v746 = vtanh.pop %v745
    %748 = vrot.lane.b32.xlu0 %v746, 32
    %v749 = vpop.permute.xlu0 %748
    %v751 = vmul.f32 %v728, %v749
    %v753 = vrot.slane %v751, 2
    %754 = vrot.lane.b32.xlu0 %v753, 64
    %v755 = vpop.permute.xlu0 %754
    %v756 = vsel %vm121, %v755, 0
    %758 = vmatpush.msra.mxu0 0.0
    %759 = vmatpush.msra.mxu0 0.0
    %760 = vmatpush.msra.mxu0 0.0
    %761 = vmatpush.msra.mxu0 0.0
    %762 = vmatpush.msra.mxu0 0.0
    %763 = vmatpush.msra.mxu0 0.0
    %764 = vmatpush.msra.mxu0 0.0
    %765 = vmatpush.msra.mxu0 0.0
    %766 = vmatpush.msra.mxu0 0.0
    %767 = vmatpush.msra.mxu0 0.0
    %768 = vmatpush.msra.mxu0 0.0
    %769 = vmatpush.msra.mxu0 0.0
    %770 = vmatpush.msra.mxu0 %v619
    %771 = vmatpush.msra.mxu0 %v618
    %772 = vmatpush.msra.mxu0 %v617
    %773 = vmatpush.msra.mxu0 %v616
    %774 = vmatmul.f32.gmra.mxu0 %v756
    %v775 = vpop.f32.mrf.mxu0
    %v776 = vadd.f32 0.0, %v775
    %777 = vdwg.mxu0
    %v779 = vrot.slane %v776, 4
    %v781 = vadd.f32 %v648, %v779
    %v782 = vxor.u32 %v781, 2147483648
    %v783 = vmul.f32 %v782, 1.442695
    %v784 = vpow.pop %v783
    %v785 = vadd.f32 %v784, 1.0
    %v786 = vrcp.pop %v785
    %v787 = vmul.f32 %v785, %v786
    %v788 = vsub.f32 1.0, %v787
    %v789 = vmul.f32 %v786, %v788
    %v790 = vadd.f32 %v786, %v789
    %vm791 = vweird.f32 %v785
    %vm792 = vweird.f32 %v786
    %vm793 = vmor %vm791, %vm792
    %v794 = vsel %vm793, %v786, %v790
    %v795 = vand.u32 2147483647, %v785
    %vm796 = vcmp.eq.f32.partialorder %v795, 8.507059e+37
    %v797 = vand.u32 %v785, 2147483648
    %v798 = vor.u32 1.1754944e-38, %v797
    %v799 = vsel %vm796, %v798, %v794
    %v800 = vmul.f32 1.0, %v799
    %v801 = vtanh.pop %v781
    %v803 = vrot.slane %v745, 6
    %v805 = vmul.f32 %v800, %v803
    %807 = vrot.lane.b32.xlu0 %v801, 32
    %v808 = vpop.permute.xlu0 %807
    %v810 = vmul.f32 %v800, %v808
    %812 = vrot.lane.b32.xlu0 %v810, 32
    %v813 = vpop.permute.xlu0 %812
    %v815 = vadd.f32 %v805, %v813
    %v816 = vtanh.pop %v815
    %818 = vrot.lane.b32.xlu0 %v816, 32
    %v819 = vpop.permute.xlu0 %818
    %v821 = vmul.f32 %v800, %v819
    %v823 = vrot.slane %v821, 4
    %824 = vrot.lane.b32.xlu0 %v823, 64
    %v825 = vpop.permute.xlu0 %824
    %v826 = vsel %vm121, %v825, 0
    %828 = vmatpush.msra.mxu0 0.0
    %829 = vmatpush.msra.mxu0 0.0
    %830 = vmatpush.msra.mxu0 0.0
    %831 = vmatpush.msra.mxu0 0.0
    %832 = vmatpush.msra.mxu0 0.0
    %833 = vmatpush.msra.mxu0 0.0
    %834 = vmatpush.msra.mxu0 0.0
    %835 = vmatpush.msra.mxu0 0.0
    %836 = vmatpush.msra.mxu0 0.0
    %837 = vmatpush.msra.mxu0 0.0
    %838 = vmatpush.msra.mxu0 0.0
    %839 = vmatpush.msra.mxu0 0.0
    %840 = vmatpush.msra.mxu0 %v619
    %841 = vmatpush.msra.mxu0 %v618
    %842 = vmatpush.msra.mxu0 %v617
    %843 = vmatpush.msra.mxu0 %v616
    %844 = vmatmul.f32.gmra.mxu0 %v826
    %v845 = vpop.f32.mrf.mxu0
    %v846 = vadd.f32 0.0, %v845
    %847 = vdwg.mxu0
    %v849 = vrot.slane %v846, 2
    %v851 = vadd.f32 %v648, %v849
    %v852 = vxor.u32 %v851, 2147483648
    %v853 = vmul.f32 %v852, 1.442695
    %v854 = vpow.pop %v853
    %v855 = vadd.f32 %v854, 1.0
    %v856 = vrcp.pop %v855
    %v857 = vmul.f32 %v855, %v856
    %v858 = vsub.f32 1.0, %v857
    %v859 = vmul.f32 %v856, %v858
    %v860 = vadd.f32 %v856, %v859
    %vm861 = vweird.f32 %v855
    %vm862 = vweird.f32 %v856
    %vm863 = vmor %vm861, %vm862
    %v864 = vsel %vm863, %v856, %v860
    %v865 = vand.u32 2147483647, %v855
    %vm866 = vcmp.eq.f32.partialorder %v865, 8.507059e+37
    %v867 = vand.u32 %v855, 2147483648
    %v868 = vor.u32 1.1754944e-38, %v867
    %v869 = vsel %vm866, %v868, %v864
    %v870 = vmul.f32 1.0, %v869
    %v871 = vtanh.pop %v851
    %v873 = vrot.slane %v815, 6
    %v875 = vmul.f32 %v870, %v873
    %877 = vrot.lane.b32.xlu0 %v871, 32
    %v878 = vpop.permute.xlu0 %877
    %v880 = vmul.f32 %v870, %v878
    %882 = vrot.lane.b32.xlu0 %v880, 32
    %v883 = vpop.permute.xlu0 %882
    %v885 = vadd.f32 %v875, %v883
    %v886 = vtanh.pop %v885
    %888 = vrot.lane.b32.xlu0 %v886, 32
    %v889 = vpop.permute.xlu0 %888
    %v891 = vmul.f32 %v870, %v889
    %v892 = vsel %vm330, %v680, %v751
    %v893 = vsel %vm332, %v892, %v821
    %v894 = vsel %vm334, %v893, %v891
    %s895 = scalar_lea.vmem [#allocation5], 96
    %v896 = vld [vmem:[%s895] sm:$0xff]
    %v897 = vld [vmem:[%s895 + $0x8] sm:$0xff]
    %v898 = vld [vmem:[%s895 + $0x10] sm:$0xff]
    %v899 = vld [vmem:[%s895 + $0x18] sm:$0xff]
    %s900 = scalar_lea.vmem [#allocation2], 64
    %v901 = vld [vmem:[%s900] sm:$0xff]
    %v902 = vld [vmem:[%s900 + $0x8] sm:$0xff]
    %v903 = vld [vmem:[%s900 + $0x10] sm:$0xff]
    %v904 = vld [vmem:[%s900 + $0x18] sm:$0xff]
    %906 = vrot.lane.b32.xlu0 %v894, 64
    %v907 = vpop.permute.xlu0 %906
    %v908 = vsel %vm121, %v907, 0
    %910 = vmatpush.msra.mxu0 0.0
    %911 = vmatpush.msra.mxu0 0.0
    %912 = vmatpush.msra.mxu0 0.0
    %913 = vmatpush.msra.mxu0 0.0
    %914 = vmatpush.msra.mxu0 0.0
    %915 = vmatpush.msra.mxu0 0.0
    %916 = vmatpush.msra.mxu0 0.0
    %917 = vmatpush.msra.mxu0 0.0
    %918 = vmatpush.msra.mxu0 0.0
    %919 = vmatpush.msra.mxu0 0.0
    %920 = vmatpush.msra.mxu0 0.0
    %921 = vmatpush.msra.mxu0 0.0
    %922 = vmatpush.msra.mxu0 %v904
    %923 = vmatpush.msra.mxu0 %v903
    %924 = vmatpush.msra.mxu0 %v902
    %925 = vmatpush.msra.mxu0 %v901
    %926 = vmatmul.f32.gmra.mxu0 %v908
    %v927 = vpop.f32.mrf.mxu0
    %v928 = vadd.f32 0.0, %v927
    %929 = vdwg.mxu0
    %v930 = vxor.u32 %v928, 2147483648
    %v931 = vmul.f32 %v930, 1.442695
    %v932 = vpow.pop %v931
    %v933 = vadd.f32 %v932, 1.0
    %v934 = vrcp.pop %v933
    %v935 = vmul.f32 %v933, %v934
    %v936 = vsub.f32 1.0, %v935
    %v937 = vmul.f32 %v934, %v936
    %v938 = vadd.f32 %v934, %v937
    %vm939 = vweird.f32 %v933
    %vm940 = vweird.f32 %v934
    %vm941 = vmor %vm939, %vm940
    %v942 = vsel %vm941, %v934, %v938
    %v943 = vand.u32 2147483647, %v933
    %vm944 = vcmp.eq.f32.partialorder %v943, 8.507059e+37
    %v945 = vand.u32 %v933, 2147483648
    %v946 = vor.u32 1.1754944e-38, %v945
    %v947 = vsel %vm944, %v946, %v942
    %v948 = vmul.f32 1.0, %v947
    %v949 = vtanh.pop %v928
    %951 = vrot.lane.b32.xlu0 %v949, 32
    %v952 = vpop.permute.xlu0 %951
    %v954 = vmul.f32 %v948, %v952
    %v955 = vtanh.pop %v954
    %957 = vrot.lane.b32.xlu0 %v955, 64
    %v958 = vpop.permute.xlu0 %957
    %v960 = vmul.f32 %v948, %v958
    %962 = vrot.lane.b32.xlu0 %v960, 64
    %v963 = vpop.permute.xlu0 %962
    %v964 = vsel %vm121, %v963, 0
    %966 = vmatpush.msra.mxu0 0.0
    %967 = vmatpush.msra.mxu0 0.0
    %968 = vmatpush.msra.mxu0 0.0
    %969 = vmatpush.msra.mxu0 0.0
    %970 = vmatpush.msra.mxu0 0.0
    %971 = vmatpush.msra.mxu0 0.0
    %972 = vmatpush.msra.mxu0 0.0
    %973 = vmatpush.msra.mxu0 0.0
    %974 = vmatpush.msra.mxu0 0.0
    %975 = vmatpush.msra.mxu0 0.0
    %976 = vmatpush.msra.mxu0 0.0
    %977 = vmatpush.msra.mxu0 0.0
    %978 = vmatpush.msra.mxu0 %v899
    %979 = vmatpush.msra.mxu0 %v898
    %980 = vmatpush.msra.mxu0 %v897
    %981 = vmatpush.msra.mxu0 %v896
    %982 = vmatmul.f32.gmra.mxu0 %v964
    %v983 = vpop.f32.mrf.mxu0
    %v984 = vadd.f32 0.0, %v983
    %985 = vdwg.mxu0
    %v987 = vrot.slane %v984, 6
    %v989 = vadd.f32 %v928, %v987
    %v990 = vxor.u32 %v989, 2147483648
    %v991 = vmul.f32 %v990, 1.442695
    %v992 = vpow.pop %v991
    %v993 = vadd.f32 %v992, 1.0
    %v994 = vrcp.pop %v993
    %v995 = vmul.f32 %v993, %v994
    %v996 = vsub.f32 1.0, %v995
    %v997 = vmul.f32 %v994, %v996
    %v998 = vadd.f32 %v994, %v997
    %vm999 = vweird.f32 %v993
    %vm1000 = vweird.f32 %v994
    %vm1001 = vmor %vm999, %vm1000
    %v1002 = vsel %vm1001, %v994, %v998
    %v1003 = vand.u32 2147483647, %v993
    %vm1004 = vcmp.eq.f32.partialorder %v1003, 8.507059e+37
    %v1005 = vand.u32 %v993, 2147483648
    %v1006 = vor.u32 1.1754944e-38, %v1005
    %v1007 = vsel %vm1004, %v1006, %v1002
    %v1008 = vmul.f32 1.0, %v1007
    %v1009 = vtanh.pop %v989
    %v1011 = vrot.slane %v954, 6
    %1012 = vrot.lane.b32.xlu0 %v1011, 32
    %v1013 = vpop.permute.xlu0 %1012
    %v1015 = vmul.f32 %v1008, %v1013
    %1017 = vrot.lane.b32.xlu0 %v1009, 32
    %v1018 = vpop.permute.xlu0 %1017
    %v1020 = vmul.f32 %v1008, %v1018
    %1022 = vrot.lane.b32.xlu0 %v1020, 32
    %v1023 = vpop.permute.xlu0 %1022
    %v1025 = vadd.f32 %v1015, %v1023
    %v1026 = vtanh.pop %v1025
    %1028 = vrot.lane.b32.xlu0 %v1026, 32
    %v1029 = vpop.permute.xlu0 %1028
    %v1031 = vmul.f32 %v1008, %v1029
    %v1033 = vrot.slane %v1031, 2
    %1034 = vrot.lane.b32.xlu0 %v1033, 64
    %v1035 = vpop.permute.xlu0 %1034
    %v1036 = vsel %vm121, %v1035, 0
    %1038 = vmatpush.msra.mxu0 0.0
    %1039 = vmatpush.msra.mxu0 0.0
    %1040 = vmatpush.msra.mxu0 0.0
    %1041 = vmatpush.msra.mxu0 0.0
    %1042 = vmatpush.msra.mxu0 0.0
    %1043 = vmatpush.msra.mxu0 0.0
    %1044 = vmatpush.msra.mxu0 0.0
    %1045 = vmatpush.msra.mxu0 0.0
    %1046 = vmatpush.msra.mxu0 0.0
    %1047 = vmatpush.msra.mxu0 0.0
    %1048 = vmatpush.msra.mxu0 0.0
    %1049 = vmatpush.msra.mxu0 0.0
    %1050 = vmatpush.msra.mxu0 %v899
    %1051 = vmatpush.msra.mxu0 %v898
    %1052 = vmatpush.msra.mxu0 %v897
    %1053 = vmatpush.msra.mxu0 %v896
    %1054 = vmatmul.f32.gmra.mxu0 %v1036
    %v1055 = vpop.f32.mrf.mxu0
    %v1056 = vadd.f32 0.0, %v1055
    %1057 = vdwg.mxu0
    %v1059 = vrot.slane %v1056, 4
    %v1061 = vadd.f32 %v928, %v1059
    %v1062 = vxor.u32 %v1061, 2147483648
    %v1063 = vmul.f32 %v1062, 1.442695
    %v1064 = vpow.pop %v1063
    %v1065 = vadd.f32 %v1064, 1.0
    %v1066 = vrcp.pop %v1065
    %v1067 = vmul.f32 %v1065, %v1066
    %v1068 = vsub.f32 1.0, %v1067
    %v1069 = vmul.f32 %v1066, %v1068
    %v1070 = vadd.f32 %v1066, %v1069
    %vm1071 = vweird.f32 %v1065
    %vm1072 = vweird.f32 %v1066
    %vm1073 = vmor %vm1071, %vm1072
    %v1074 = vsel %vm1073, %v1066, %v1070
    %v1075 = vand.u32 2147483647, %v1065
    %vm1076 = vcmp.eq.f32.partialorder %v1075, 8.507059e+37
    %v1077 = vand.u32 %v1065, 2147483648
    %v1078 = vor.u32 1.1754944e-38, %v1077
    %v1079 = vsel %vm1076, %v1078, %v1074
    %v1080 = vmul.f32 1.0, %v1079
    %v1081 = vtanh.pop %v1061
    %v1083 = vrot.slane %v1025, 6
    %v1085 = vmul.f32 %v1080, %v1083
    %1087 = vrot.lane.b32.xlu0 %v1081, 32
    %v1088 = vpop.permute.xlu0 %1087
    %v1090 = vmul.f32 %v1080, %v1088
    %1092 = vrot.lane.b32.xlu0 %v1090, 32
    %v1093 = vpop.permute.xlu0 %1092
    %v1095 = vadd.f32 %v1085, %v1093
    %v1096 = vtanh.pop %v1095
    %1098 = vrot.lane.b32.xlu0 %v1096, 32
    %v1099 = vpop.permute.xlu0 %1098
    %v1101 = vmul.f32 %v1080, %v1099
    %v1103 = vrot.slane %v1101, 4
    %1104 = vrot.lane.b32.xlu0 %v1103, 64
    %v1105 = vpop.permute.xlu0 %1104
    %v1106 = vsel %vm121, %v1105, 0
    %1108 = vmatpush.msra.mxu0 0.0
    %1109 = vmatpush.msra.mxu0 0.0
    %1110 = vmatpush.msra.mxu0 0.0
    %1111 = vmatpush.msra.mxu0 0.0
    %1112 = vmatpush.msra.mxu0 0.0
    %1113 = vmatpush.msra.mxu0 0.0
    %1114 = vmatpush.msra.mxu0 0.0
    %1115 = vmatpush.msra.mxu0 0.0
    %1116 = vmatpush.msra.mxu0 0.0
    %1117 = vmatpush.msra.mxu0 0.0
    %1118 = vmatpush.msra.mxu0 0.0
    %1119 = vmatpush.msra.mxu0 0.0
    %1120 = vmatpush.msra.mxu0 %v899
    %1121 = vmatpush.msra.mxu0 %v898
    %1122 = vmatpush.msra.mxu0 %v897
    %1123 = vmatpush.msra.mxu0 %v896
    %1124 = vmatmul.f32.gmra.mxu0 %v1106
    %v1125 = vpop.f32.mrf.mxu0
    %v1126 = vadd.f32 0.0, %v1125
    %1127 = vdwg.mxu0
    %v1129 = vrot.slane %v1126, 2
    %v1131 = vadd.f32 %v928, %v1129
    %v1132 = vxor.u32 %v1131, 2147483648
    %v1133 = vmul.f32 %v1132, 1.442695
    %v1134 = vpow.pop %v1133
    %v1135 = vadd.f32 %v1134, 1.0
    %v1136 = vrcp.pop %v1135
    %v1137 = vmul.f32 %v1135, %v1136
    %v1138 = vsub.f32 1.0, %v1137
    %v1139 = vmul.f32 %v1136, %v1138
    %v1140 = vadd.f32 %v1136, %v1139
    %vm1141 = vweird.f32 %v1135
    %vm1142 = vweird.f32 %v1136
    %vm1143 = vmor %vm1141, %vm1142
    %v1144 = vsel %vm1143, %v1136, %v1140
    %v1145 = vand.u32 2147483647, %v1135
    %vm1146 = vcmp.eq.f32.partialorder %v1145, 8.507059e+37
    %v1147 = vand.u32 %v1135, 2147483648
    %v1148 = vor.u32 1.1754944e-38, %v1147
    %v1149 = vsel %vm1146, %v1148, %v1144
    %v1150 = vmul.f32 1.0, %v1149
    %v1151 = vtanh.pop %v1131
    %v1153 = vrot.slane %v1095, 6
    %v1155 = vmul.f32 %v1150, %v1153
    %1157 = vrot.lane.b32.xlu0 %v1151, 32
    %v1158 = vpop.permute.xlu0 %1157
    %v1160 = vmul.f32 %v1150, %v1158
    %1162 = vrot.lane.b32.xlu0 %v1160, 32
    %v1163 = vpop.permute.xlu0 %1162
    %v1165 = vadd.f32 %v1155, %v1163
    %v1166 = vtanh.pop %v1165
    %1168 = vrot.lane.b32.xlu0 %v1166, 32
    %v1169 = vpop.permute.xlu0 %1168
    %v1171 = vmul.f32 %v1150, %v1169
    %v1172 = vsel %vm330, %v960, %v1031
    %v1173 = vsel %vm332, %v1172, %v1101
    %v1174 = vsel %vm334, %v1173, %v1171
    %s1175 = scalar_lea.vmem [#allocation5], 128
    %v1176 = vld [vmem:[%s1175] sm:$0xff]
    %v1177 = vld [vmem:[%s1175 + $0x8] sm:$0xff]
    %v1178 = vld [vmem:[%s1175 + $0x10] sm:$0xff]
    %v1179 = vld [vmem:[%s1175 + $0x18] sm:$0xff]
    %s1180 = scalar_lea.vmem [#allocation2], 96
    %v1181 = vld [vmem:[%s1180] sm:$0xff]
    %v1182 = vld [vmem:[%s1180 + $0x8] sm:$0xff]
    %v1183 = vld [vmem:[%s1180 + $0x10] sm:$0xff]
    %v1184 = vld [vmem:[%s1180 + $0x18] sm:$0xff]
    %1186 = vrot.lane.b32.xlu0 %v1174, 64
    %v1187 = vpop.permute.xlu0 %1186
    %v1188 = vsel %vm121, %v1187, 0
    %1190 = vmatpush.msra.mxu0 0.0
    %1191 = vmatpush.msra.mxu0 0.0
    %1192 = vmatpush.msra.mxu0 0.0
    %1193 = vmatpush.msra.mxu0 0.0
    %1194 = vmatpush.msra.mxu0 0.0
    %1195 = vmatpush.msra.mxu0 0.0
    %1196 = vmatpush.msra.mxu0 0.0
    %1197 = vmatpush.msra.mxu0 0.0
    %1198 = vmatpush.msra.mxu0 0.0
    %1199 = vmatpush.msra.mxu0 0.0
    %1200 = vmatpush.msra.mxu0 0.0
    %1201 = vmatpush.msra.mxu0 0.0
    %1202 = vmatpush.msra.mxu0 %v1184
    %1203 = vmatpush.msra.mxu0 %v1183
    %1204 = vmatpush.msra.mxu0 %v1182
    %1205 = vmatpush.msra.mxu0 %v1181
    %1206 = vmatmul.f32.gmra.mxu0 %v1188
    %v1207 = vpop.f32.mrf.mxu0
    %v1208 = vadd.f32 0.0, %v1207
    %1209 = vdwg.mxu0
    %v1210 = vxor.u32 %v1208, 2147483648
    %v1211 = vmul.f32 %v1210, 1.442695
    %v1212 = vpow.pop %v1211
    %v1213 = vadd.f32 %v1212, 1.0
    %v1214 = vrcp.pop %v1213
    %v1215 = vmul.f32 %v1213, %v1214
    %v1216 = vsub.f32 1.0, %v1215
    %v1217 = vmul.f32 %v1214, %v1216
    %v1218 = vadd.f32 %v1214, %v1217
    %vm1219 = vweird.f32 %v1213
    %vm1220 = vweird.f32 %v1214
    %vm1221 = vmor %vm1219, %vm1220
    %v1222 = vsel %vm1221, %v1214, %v1218
    %v1223 = vand.u32 2147483647, %v1213
    %vm1224 = vcmp.eq.f32.partialorder %v1223, 8.507059e+37
    %v1225 = vand.u32 %v1213, 2147483648
    %v1226 = vor.u32 1.1754944e-38, %v1225
    %v1227 = vsel %vm1224, %v1226, %v1222
    %v1228 = vmul.f32 1.0, %v1227
    %v1229 = vtanh.pop %v1208
    %1231 = vrot.lane.b32.xlu0 %v1229, 32
    %v1232 = vpop.permute.xlu0 %1231
    %v1234 = vmul.f32 %v1228, %v1232
    %v1235 = vtanh.pop %v1234
    %1237 = vrot.lane.b32.xlu0 %v1235, 64
    %v1238 = vpop.permute.xlu0 %1237
    %v1240 = vmul.f32 %v1228, %v1238
    %1242 = vrot.lane.b32.xlu0 %v1240, 64
    %v1243 = vpop.permute.xlu0 %1242
    %v1244 = vsel %vm121, %v1243, 0
    %1246 = vmatpush.msra.mxu0 0.0
    %1247 = vmatpush.msra.mxu0 0.0
    %1248 = vmatpush.msra.mxu0 0.0
    %1249 = vmatpush.msra.mxu0 0.0
    %1250 = vmatpush.msra.mxu0 0.0
    %1251 = vmatpush.msra.mxu0 0.0
    %1252 = vmatpush.msra.mxu0 0.0
    %1253 = vmatpush.msra.mxu0 0.0
    %1254 = vmatpush.msra.mxu0 0.0
    %1255 = vmatpush.msra.mxu0 0.0
    %1256 = vmatpush.msra.mxu0 0.0
    %1257 = vmatpush.msra.mxu0 0.0
    %1258 = vmatpush.msra.mxu0 %v1179
    %1259 = vmatpush.msra.mxu0 %v1178
    %1260 = vmatpush.msra.mxu0 %v1177
    %1261 = vmatpush.msra.mxu0 %v1176
    %1262 = vmatmul.f32.gmra.mxu0 %v1244
    %v1263 = vpop.f32.mrf.mxu0
    %v1264 = vadd.f32 0.0, %v1263
    %1265 = vdwg.mxu0
    %v1267 = vrot.slane %v1264, 6
    %v1269 = vadd.f32 %v1208, %v1267
    %v1270 = vxor.u32 %v1269, 2147483648
    %v1271 = vmul.f32 %v1270, 1.442695
    %v1272 = vpow.pop %v1271
    %v1273 = vadd.f32 %v1272, 1.0
    %v1274 = vrcp.pop %v1273
    %v1275 = vmul.f32 %v1273, %v1274
    %v1276 = vsub.f32 1.0, %v1275
    %v1277 = vmul.f32 %v1274, %v1276
    %v1278 = vadd.f32 %v1274, %v1277
    %vm1279 = vweird.f32 %v1273
    %vm1280 = vweird.f32 %v1274
    %vm1281 = vmor %vm1279, %vm1280
    %v1282 = vsel %vm1281, %v1274, %v1278
    %v1283 = vand.u32 2147483647, %v1273
    %vm1284 = vcmp.eq.f32.partialorder %v1283, 8.507059e+37
    %v1285 = vand.u32 %v1273, 2147483648
    %v1286 = vor.u32 1.1754944e-38, %v1285
    %v1287 = vsel %vm1284, %v1286, %v1282
    %v1288 = vmul.f32 1.0, %v1287
    %v1289 = vtanh.pop %v1269
    %v1291 = vrot.slane %v1234, 6
    %1292 = vrot.lane.b32.xlu0 %v1291, 32
    %v1293 = vpop.permute.xlu0 %1292
    %v1295 = vmul.f32 %v1288, %v1293
    %1297 = vrot.lane.b32.xlu0 %v1289, 32
    %v1298 = vpop.permute.xlu0 %1297
    %v1300 = vmul.f32 %v1288, %v1298
    %1302 = vrot.lane.b32.xlu0 %v1300, 32
    %v1303 = vpop.permute.xlu0 %1302
    %v1305 = vadd.f32 %v1295, %v1303
    %v1306 = vtanh.pop %v1305
    %1308 = vrot.lane.b32.xlu0 %v1306, 32
    %v1309 = vpop.permute.xlu0 %1308
    %v1311 = vmul.f32 %v1288, %v1309
    %v1313 = vrot.slane %v1311, 2
    %1314 = vrot.lane.b32.xlu0 %v1313, 64
    %v1315 = vpop.permute.xlu0 %1314
    %v1316 = vsel %vm121, %v1315, 0
    %1318 = vmatpush.msra.mxu0 0.0
    %1319 = vmatpush.msra.mxu0 0.0
    %1320 = vmatpush.msra.mxu0 0.0
    %1321 = vmatpush.msra.mxu0 0.0
    %1322 = vmatpush.msra.mxu0 0.0
    %1323 = vmatpush.msra.mxu0 0.0
    %1324 = vmatpush.msra.mxu0 0.0
    %1325 = vmatpush.msra.mxu0 0.0
    %1326 = vmatpush.msra.mxu0 0.0
    %1327 = vmatpush.msra.mxu0 0.0
    %1328 = vmatpush.msra.mxu0 0.0
    %1329 = vmatpush.msra.mxu0 0.0
    %1330 = vmatpush.msra.mxu0 %v1179
    %1331 = vmatpush.msra.mxu0 %v1178
    %1332 = vmatpush.msra.mxu0 %v1177
    %1333 = vmatpush.msra.mxu0 %v1176
    %1334 = vmatmul.f32.gmra.mxu0 %v1316
    %v1335 = vpop.f32.mrf.mxu0
    %v1336 = vadd.f32 0.0, %v1335
    %1337 = vdwg.mxu0
    %v1339 = vrot.slane %v1336, 4
    %v1341 = vadd.f32 %v1208, %v1339
    %v1342 = vxor.u32 %v1341, 2147483648
    %v1343 = vmul.f32 %v1342, 1.442695
    %v1344 = vpow.pop %v1343
    %v1345 = vadd.f32 %v1344, 1.0
    %v1346 = vrcp.pop %v1345
    %v1347 = vmul.f32 %v1345, %v1346
    %v1348 = vsub.f32 1.0, %v1347
    %v1349 = vmul.f32 %v1346, %v1348
    %v1350 = vadd.f32 %v1346, %v1349
    %vm1351 = vweird.f32 %v1345
    %vm1352 = vweird.f32 %v1346
    %vm1353 = vmor %vm1351, %vm1352
    %v1354 = vsel %vm1353, %v1346, %v1350
    %v1355 = vand.u32 2147483647, %v1345
    %vm1356 = vcmp.eq.f32.partialorder %v1355, 8.507059e+37
    %v1357 = vand.u32 %v1345, 2147483648
    %v1358 = vor.u32 1.1754944e-38, %v1357
    %v1359 = vsel %vm1356, %v1358, %v1354
    %v1360 = vmul.f32 1.0, %v1359
    %v1361 = vtanh.pop %v1341
    %v1363 = vrot.slane %v1305, 6
    %v1365 = vmul.f32 %v1360, %v1363
    %1367 = vrot.lane.b32.xlu0 %v1361, 32
    %v1368 = vpop.permute.xlu0 %1367
    %v1370 = vmul.f32 %v1360, %v1368
    %1372 = vrot.lane.b32.xlu0 %v1370, 32
    %v1373 = vpop.permute.xlu0 %1372
    %v1375 = vadd.f32 %v1365, %v1373
    %v1376 = vtanh.pop %v1375
    %1378 = vrot.lane.b32.xlu0 %v1376, 32
    %v1379 = vpop.permute.xlu0 %1378
    %v1381 = vmul.f32 %v1360, %v1379
    %v1383 = vrot.slane %v1381, 4
    %1384 = vrot.lane.b32.xlu0 %v1383, 64
    %v1385 = vpop.permute.xlu0 %1384
    %v1386 = vsel %vm121, %v1385, 0
    %1388 = vmatpush.msra.mxu0 0.0
    %1389 = vmatpush.msra.mxu0 0.0
    %1390 = vmatpush.msra.mxu0 0.0
    %1391 = vmatpush.msra.mxu0 0.0
    %1392 = vmatpush.msra.mxu0 0.0
    %1393 = vmatpush.msra.mxu0 0.0
    %1394 = vmatpush.msra.mxu0 0.0
    %1395 = vmatpush.msra.mxu0 0.0
    %1396 = vmatpush.msra.mxu0 0.0
    %1397 = vmatpush.msra.mxu0 0.0
    %1398 = vmatpush.msra.mxu0 0.0
    %1399 = vmatpush.msra.mxu0 0.0
    %1400 = vmatpush.msra.mxu0 %v1179
    %1401 = vmatpush.msra.mxu0 %v1178
    %1402 = vmatpush.msra.mxu0 %v1177
    %1403 = vmatpush.msra.mxu0 %v1176
    %1404 = vmatmul.f32.gmra.mxu0 %v1386
    %v1405 = vpop.f32.mrf.mxu0
    %v1406 = vadd.f32 0.0, %v1405
    %1407 = vdwg.mxu0
    %v1409 = vrot.slane %v1406, 2
    %v1411 = vadd.f32 %v1208, %v1409
    %v1412 = vxor.u32 %v1411, 2147483648
    %v1413 = vmul.f32 %v1412, 1.442695
    %v1414 = vpow.pop %v1413
    %v1415 = vadd.f32 %v1414, 1.0
    %v1416 = vrcp.pop %v1415
    %v1417 = vmul.f32 %v1415, %v1416
    %v1418 = vsub.f32 1.0, %v1417
    %v1419 = vmul.f32 %v1416, %v1418
    %v1420 = vadd.f32 %v1416, %v1419
    %vm1421 = vweird.f32 %v1415
    %vm1422 = vweird.f32 %v1416
    %vm1423 = vmor %vm1421, %vm1422
    %v1424 = vsel %vm1423, %v1416, %v1420
    %v1425 = vand.u32 2147483647, %v1415
    %vm1426 = vcmp.eq.f32.partialorder %v1425, 8.507059e+37
    %v1427 = vand.u32 %v1415, 2147483648
    %v1428 = vor.u32 1.1754944e-38, %v1427
    %v1429 = vsel %vm1426, %v1428, %v1424
    %v1430 = vmul.f32 1.0, %v1429
    %v1431 = vtanh.pop %v1411
    %v1433 = vrot.slane %v1375, 6
    %v1435 = vmul.f32 %v1430, %v1433
    %1437 = vrot.lane.b32.xlu0 %v1431, 32
    %v1438 = vpop.permute.xlu0 %1437
    %v1440 = vmul.f32 %v1430, %v1438
    %1442 = vrot.lane.b32.xlu0 %v1440, 32
    %v1443 = vpop.permute.xlu0 %1442
    %v1445 = vadd.f32 %v1435, %v1443
    %v1446 = vtanh.pop %v1445
    %1448 = vrot.lane.b32.xlu0 %v1446, 32
    %v1449 = vpop.permute.xlu0 %1448
    %v1451 = vmul.f32 %v1430, %v1449
    %v1452 = vsel %vm330, %v1240, %v1311
    %v1453 = vsel %vm332, %v1452, %v1381
    %v1454 = vsel %vm334, %v1453, %v1451
    %s1455 = scalar_lea.vmem [#allocation5], 160
    %v1456 = vld [vmem:[%s1455] sm:$0xff]
    %v1457 = vld [vmem:[%s1455 + $0x8] sm:$0xff]
    %v1458 = vld [vmem:[%s1455 + $0x10] sm:$0xff]
    %v1459 = vld [vmem:[%s1455 + $0x18] sm:$0xff]
    %s1460 = scalar_lea.vmem [#allocation2], 128
    %v1461 = vld [vmem:[%s1460] sm:$0xff]
    %v1462 = vld [vmem:[%s1460 + $0x8] sm:$0xff]
    %v1463 = vld [vmem:[%s1460 + $0x10] sm:$0xff]
    %v1464 = vld [vmem:[%s1460 + $0x18] sm:$0xff]
    %1466 = vrot.lane.b32.xlu0 %v1454, 64
    %v1467 = vpop.permute.xlu0 %1466
    %v1468 = vsel %vm121, %v1467, 0
    %1470 = vmatpush.msra.mxu0 0.0
    %1471 = vmatpush.msra.mxu0 0.0
    %1472 = vmatpush.msra.mxu0 0.0
    %1473 = vmatpush.msra.mxu0 0.0
    %1474 = vmatpush.msra.mxu0 0.0
    %1475 = vmatpush.msra.mxu0 0.0
    %1476 = vmatpush.msra.mxu0 0.0
    %1477 = vmatpush.msra.mxu0 0.0
    %1478 = vmatpush.msra.mxu0 0.0
    %1479 = vmatpush.msra.mxu0 0.0
    %1480 = vmatpush.msra.mxu0 0.0
    %1481 = vmatpush.msra.mxu0 0.0
    %1482 = vmatpush.msra.mxu0 %v1464
    %1483 = vmatpush.msra.mxu0 %v1463
    %1484 = vmatpush.msra.mxu0 %v1462
    %1485 = vmatpush.msra.mxu0 %v1461
    %1486 = vmatmul.f32.gmra.mxu0 %v1468
    %v1487 = vpop.f32.mrf.mxu0
    %v1488 = vadd.f32 0.0, %v1487
    %1489 = vdwg.mxu0
    %v1490 = vxor.u32 %v1488, 2147483648
    %v1491 = vmul.f32 %v1490, 1.442695
    %v1492 = vpow.pop %v1491
    %v1493 = vadd.f32 %v1492, 1.0
    %v1494 = vrcp.pop %v1493
    %v1495 = vmul.f32 %v1493, %v1494
    %v1496 = vsub.f32 1.0, %v1495
    %v1497 = vmul.f32 %v1494, %v1496
    %v1498 = vadd.f32 %v1494, %v1497
    %vm1499 = vweird.f32 %v1493
    %vm1500 = vweird.f32 %v1494
    %vm1501 = vmor %vm1499, %vm1500
    %v1502 = vsel %vm1501, %v1494, %v1498
    %v1503 = vand.u32 2147483647, %v1493
    %vm1504 = vcmp.eq.f32.partialorder %v1503, 8.507059e+37
    %v1505 = vand.u32 %v1493, 2147483648
    %v1506 = vor.u32 1.1754944e-38, %v1505
    %v1507 = vsel %vm1504, %v1506, %v1502
    %v1508 = vmul.f32 1.0, %v1507
    %v1509 = vtanh.pop %v1488
    %1511 = vrot.lane.b32.xlu0 %v1509, 32
    %v1512 = vpop.permute.xlu0 %1511
    %v1514 = vmul.f32 %v1508, %v1512
    %v1515 = vtanh.pop %v1514
    %1517 = vrot.lane.b32.xlu0 %v1515, 64
    %v1518 = vpop.permute.xlu0 %1517
    %v1520 = vmul.f32 %v1508, %v1518
    %1522 = vrot.lane.b32.xlu0 %v1520, 64
    %v1523 = vpop.permute.xlu0 %1522
    %v1524 = vsel %vm121, %v1523, 0
    %1526 = vmatpush.msra.mxu0 0.0
    %1527 = vmatpush.msra.mxu0 0.0
    %1528 = vmatpush.msra.mxu0 0.0
    %1529 = vmatpush.msra.mxu0 0.0
    %1530 = vmatpush.msra.mxu0 0.0
    %1531 = vmatpush.msra.mxu0 0.0
    %1532 = vmatpush.msra.mxu0 0.0
    %1533 = vmatpush.msra.mxu0 0.0
    %1534 = vmatpush.msra.mxu0 0.0
    %1535 = vmatpush.msra.mxu0 0.0
    %1536 = vmatpush.msra.mxu0 0.0
    %1537 = vmatpush.msra.mxu0 0.0
    %1538 = vmatpush.msra.mxu0 %v1459
    %1539 = vmatpush.msra.mxu0 %v1458
    %1540 = vmatpush.msra.mxu0 %v1457
    %1541 = vmatpush.msra.mxu0 %v1456
    %1542 = vmatmul.f32.gmra.mxu0 %v1524
    %v1543 = vpop.f32.mrf.mxu0
    %v1544 = vadd.f32 0.0, %v1543
    %1545 = vdwg.mxu0
    %v1547 = vrot.slane %v1544, 6
    %v1549 = vadd.f32 %v1488, %v1547
    %v1550 = vxor.u32 %v1549, 2147483648
    %v1551 = vmul.f32 %v1550, 1.442695
    %v1552 = vpow.pop %v1551
    %v1553 = vadd.f32 %v1552, 1.0
    %v1554 = vrcp.pop %v1553
    %v1555 = vmul.f32 %v1553, %v1554
    %v1556 = vsub.f32 1.0, %v1555
    %v1557 = vmul.f32 %v1554, %v1556
    %v1558 = vadd.f32 %v1554, %v1557
    %vm1559 = vweird.f32 %v1553
    %vm1560 = vweird.f32 %v1554
    %vm1561 = vmor %vm1559, %vm1560
    %v1562 = vsel %vm1561, %v1554, %v1558
    %v1563 = vand.u32 2147483647, %v1553
    %vm1564 = vcmp.eq.f32.partialorder %v1563, 8.507059e+37
    %v1565 = vand.u32 %v1553, 2147483648
    %v1566 = vor.u32 1.1754944e-38, %v1565
    %v1567 = vsel %vm1564, %v1566, %v1562
    %v1568 = vmul.f32 1.0, %v1567
    %v1569 = vtanh.pop %v1549
    %v1571 = vrot.slane %v1514, 6
    %1572 = vrot.lane.b32.xlu0 %v1571, 32
    %v1573 = vpop.permute.xlu0 %1572
    %v1575 = vmul.f32 %v1568, %v1573
    %1577 = vrot.lane.b32.xlu0 %v1569, 32
    %v1578 = vpop.permute.xlu0 %1577
    %v1580 = vmul.f32 %v1568, %v1578
    %1582 = vrot.lane.b32.xlu0 %v1580, 32
    %v1583 = vpop.permute.xlu0 %1582
    %v1585 = vadd.f32 %v1575, %v1583
    %v1586 = vtanh.pop %v1585
    %1588 = vrot.lane.b32.xlu0 %v1586, 32
    %v1589 = vpop.permute.xlu0 %1588
    %v1591 = vmul.f32 %v1568, %v1589
    %v1593 = vrot.slane %v1591, 2
    %1594 = vrot.lane.b32.xlu0 %v1593, 64
    %v1595 = vpop.permute.xlu0 %1594
    %v1596 = vsel %vm121, %v1595, 0
    %1598 = vmatpush.msra.mxu0 0.0
    %1599 = vmatpush.msra.mxu0 0.0
    %1600 = vmatpush.msra.mxu0 0.0
    %1601 = vmatpush.msra.mxu0 0.0
    %1602 = vmatpush.msra.mxu0 0.0
    %1603 = vmatpush.msra.mxu0 0.0
    %1604 = vmatpush.msra.mxu0 0.0
    %1605 = vmatpush.msra.mxu0 0.0
    %1606 = vmatpush.msra.mxu0 0.0
    %1607 = vmatpush.msra.mxu0 0.0
    %1608 = vmatpush.msra.mxu0 0.0
    %1609 = vmatpush.msra.mxu0 0.0
    %1610 = vmatpush.msra.mxu0 %v1459
    %1611 = vmatpush.msra.mxu0 %v1458
    %1612 = vmatpush.msra.mxu0 %v1457
    %1613 = vmatpush.msra.mxu0 %v1456
    %1614 = vmatmul.f32.gmra.mxu0 %v1596
    %v1615 = vpop.f32.mrf.mxu0
    %v1616 = vadd.f32 0.0, %v1615
    %1617 = vdwg.mxu0
    %v1619 = vrot.slane %v1616, 4
    %v1621 = vadd.f32 %v1488, %v1619
    %v1622 = vxor.u32 %v1621, 2147483648
    %v1623 = vmul.f32 %v1622, 1.442695
    %v1624 = vpow.pop %v1623
    %v1625 = vadd.f32 %v1624, 1.0
    %v1626 = vrcp.pop %v1625
    %v1627 = vmul.f32 %v1625, %v1626
    %v1628 = vsub.f32 1.0, %v1627
    %v1629 = vmul.f32 %v1626, %v1628
    %v1630 = vadd.f32 %v1626, %v1629
    %vm1631 = vweird.f32 %v1625
    %vm1632 = vweird.f32 %v1626
    %vm1633 = vmor %vm1631, %vm1632
    %v1634 = vsel %vm1633, %v1626, %v1630
    %v1635 = vand.u32 2147483647, %v1625
    %vm1636 = vcmp.eq.f32.partialorder %v1635, 8.507059e+37
    %v1637 = vand.u32 %v1625, 2147483648
    %v1638 = vor.u32 1.1754944e-38, %v1637
    %v1639 = vsel %vm1636, %v1638, %v1634
    %v1640 = vmul.f32 1.0, %v1639
    %v1641 = vtanh.pop %v1621
    %v1643 = vrot.slane %v1585, 6
    %v1645 = vmul.f32 %v1640, %v1643
    %1647 = vrot.lane.b32.xlu0 %v1641, 32
    %v1648 = vpop.permute.xlu0 %1647
    %v1650 = vmul.f32 %v1640, %v1648
    %1652 = vrot.lane.b32.xlu0 %v1650, 32
    %v1653 = vpop.permute.xlu0 %1652
    %v1655 = vadd.f32 %v1645, %v1653
    %v1656 = vtanh.pop %v1655
    %1658 = vrot.lane.b32.xlu0 %v1656, 32
    %v1659 = vpop.permute.xlu0 %1658
    %v1661 = vmul.f32 %v1640, %v1659
    %v1663 = vrot.slane %v1661, 4
    %1664 = vrot.lane.b32.xlu0 %v1663, 64
    %v1665 = vpop.permute.xlu0 %1664
    %v1666 = vsel %vm121, %v1665, 0
    %1668 = vmatpush.msra.mxu0 0.0
    %1669 = vmatpush.msra.mxu0 0.0
    %1670 = vmatpush.msra.mxu0 0.0
    %1671 = vmatpush.msra.mxu0 0.0
    %1672 = vmatpush.msra.mxu0 0.0
    %1673 = vmatpush.msra.mxu0 0.0
    %1674 = vmatpush.msra.mxu0 0.0
    %1675 = vmatpush.msra.mxu0 0.0
    %1676 = vmatpush.msra.mxu0 0.0
    %1677 = vmatpush.msra.mxu0 0.0
    %1678 = vmatpush.msra.mxu0 0.0
    %1679 = vmatpush.msra.mxu0 0.0
    %1680 = vmatpush.msra.mxu0 %v1459
    %1681 = vmatpush.msra.mxu0 %v1458
    %1682 = vmatpush.msra.mxu0 %v1457
    %1683 = vmatpush.msra.mxu0 %v1456
    %1684 = vmatmul.f32.gmra.mxu0 %v1666
    %v1685 = vpop.f32.mrf.mxu0
    %v1686 = vadd.f32 0.0, %v1685
    %1687 = vdwg.mxu0
    %v1689 = vrot.slane %v1686, 2
    %v1691 = vadd.f32 %v1488, %v1689
    %v1692 = vxor.u32 %v1691, 2147483648
    %v1693 = vmul.f32 %v1692, 1.442695
    %v1694 = vpow.pop %v1693
    %v1695 = vadd.f32 %v1694, 1.0
    %v1696 = vrcp.pop %v1695
    %v1697 = vmul.f32 %v1695, %v1696
    %v1698 = vsub.f32 1.0, %v1697
    %v1699 = vmul.f32 %v1696, %v1698
    %v1700 = vadd.f32 %v1696, %v1699
    %vm1701 = vweird.f32 %v1695
    %vm1702 = vweird.f32 %v1696
    %vm1703 = vmor %vm1701, %vm1702
    %v1704 = vsel %vm1703, %v1696, %v1700
    %v1705 = vand.u32 2147483647, %v1695
    %vm1706 = vcmp.eq.f32.partialorder %v1705, 8.507059e+37
    %v1707 = vand.u32 %v1695, 2147483648
    %v1708 = vor.u32 1.1754944e-38, %v1707
    %v1709 = vsel %vm1706, %v1708, %v1704
    %v1710 = vmul.f32 1.0, %v1709
    %v1711 = vtanh.pop %v1691
    %v1713 = vrot.slane %v1655, 6
    %v1715 = vmul.f32 %v1710, %v1713
    %1717 = vrot.lane.b32.xlu0 %v1711, 32
    %v1718 = vpop.permute.xlu0 %1717
    %v1720 = vmul.f32 %v1710, %v1718
    %1722 = vrot.lane.b32.xlu0 %v1720, 32
    %v1723 = vpop.permute.xlu0 %1722
    %v1725 = vadd.f32 %v1715, %v1723
    %v1726 = vtanh.pop %v1725
    %1728 = vrot.lane.b32.xlu0 %v1726, 32
    %v1729 = vpop.permute.xlu0 %1728
    %v1731 = vmul.f32 %v1710, %v1729
    %v1732 = vsel %vm330, %v1520, %v1591
    %v1733 = vsel %vm332, %v1732, %v1661
    %v1734 = vsel %vm334, %v1733, %v1731
    %s1735 = scalar_lea.vmem [#allocation5], 192
    %v1736 = vld [vmem:[%s1735] sm:$0xff]
    %v1737 = vld [vmem:[%s1735 + $0x8] sm:$0xff]
    %v1738 = vld [vmem:[%s1735 + $0x10] sm:$0xff]
    %v1739 = vld [vmem:[%s1735 + $0x18] sm:$0xff]
    %s1740 = scalar_lea.vmem [#allocation2], 160
    %v1741 = vld [vmem:[%s1740] sm:$0xff]
    %v1742 = vld [vmem:[%s1740 + $0x8] sm:$0xff]
    %v1743 = vld [vmem:[%s1740 + $0x10] sm:$0xff]
    %v1744 = vld [vmem:[%s1740 + $0x18] sm:$0xff]
    %1746 = vrot.lane.b32.xlu0 %v1734, 64
    %v1747 = vpop.permute.xlu0 %1746
    %v1748 = vsel %vm121, %v1747, 0
    %1750 = vmatpush.msra.mxu0 0.0
    %1751 = vmatpush.msra.mxu0 0.0
    %1752 = vmatpush.msra.mxu0 0.0
    %1753 = vmatpush.msra.mxu0 0.0
    %1754 = vmatpush.msra.mxu0 0.0
    %1755 = vmatpush.msra.mxu0 0.0
    %1756 = vmatpush.msra.mxu0 0.0
    %1757 = vmatpush.msra.mxu0 0.0
    %1758 = vmatpush.msra.mxu0 0.0
    %1759 = vmatpush.msra.mxu0 0.0
    %1760 = vmatpush.msra.mxu0 0.0
    %1761 = vmatpush.msra.mxu0 0.0
    %1762 = vmatpush.msra.mxu0 %v1744
    %1763 = vmatpush.msra.mxu0 %v1743
    %1764 = vmatpush.msra.mxu0 %v1742
    %1765 = vmatpush.msra.mxu0 %v1741
    %1766 = vmatmul.f32.gmra.mxu0 %v1748
    %v1767 = vpop.f32.mrf.mxu0
    %v1768 = vadd.f32 0.0, %v1767
    %1769 = vdwg.mxu0
    %v1770 = vxor.u32 %v1768, 2147483648
    %v1771 = vmul.f32 %v1770, 1.442695
    %v1772 = vpow.pop %v1771
    %v1773 = vadd.f32 %v1772, 1.0
    %v1774 = vrcp.pop %v1773
    %v1775 = vmul.f32 %v1773, %v1774
    %v1776 = vsub.f32 1.0, %v1775
    %v1777 = vmul.f32 %v1774, %v1776
    %v1778 = vadd.f32 %v1774, %v1777
    %vm1779 = vweird.f32 %v1773
    %vm1780 = vweird.f32 %v1774
    %vm1781 = vmor %vm1779, %vm1780
    %v1782 = vsel %vm1781, %v1774, %v1778
    %v1783 = vand.u32 2147483647, %v1773
    %vm1784 = vcmp.eq.f32.partialorder %v1783, 8.507059e+37
    %v1785 = vand.u32 %v1773, 2147483648
    %v1786 = vor.u32 1.1754944e-38, %v1785
    %v1787 = vsel %vm1784, %v1786, %v1782
    %v1788 = vmul.f32 1.0, %v1787
    %v1789 = vtanh.pop %v1768
    %1791 = vrot.lane.b32.xlu0 %v1789, 32
    %v1792 = vpop.permute.xlu0 %1791
    %v1794 = vmul.f32 %v1788, %v1792
    %v1795 = vtanh.pop %v1794
    %1797 = vrot.lane.b32.xlu0 %v1795, 64
    %v1798 = vpop.permute.xlu0 %1797
    %v1800 = vmul.f32 %v1788, %v1798
    %1802 = vrot.lane.b32.xlu0 %v1800, 64
    %v1803 = vpop.permute.xlu0 %1802
    %v1804 = vsel %vm121, %v1803, 0
    %1806 = vmatpush.msra.mxu0 0.0
    %1807 = vmatpush.msra.mxu0 0.0
    %1808 = vmatpush.msra.mxu0 0.0
    %1809 = vmatpush.msra.mxu0 0.0
    %1810 = vmatpush.msra.mxu0 0.0
    %1811 = vmatpush.msra.mxu0 0.0
    %1812 = vmatpush.msra.mxu0 0.0
    %1813 = vmatpush.msra.mxu0 0.0
    %1814 = vmatpush.msra.mxu0 0.0
    %1815 = vmatpush.msra.mxu0 0.0
    %1816 = vmatpush.msra.mxu0 0.0
    %1817 = vmatpush.msra.mxu0 0.0
    %1818 = vmatpush.msra.mxu0 %v1739
    %1819 = vmatpush.msra.mxu0 %v1738
    %1820 = vmatpush.msra.mxu0 %v1737
    %1821 = vmatpush.msra.mxu0 %v1736
    %1822 = vmatmul.f32.gmra.mxu0 %v1804
    %v1823 = vpop.f32.mrf.mxu0
    %v1824 = vadd.f32 0.0, %v1823
    %1825 = vdwg.mxu0
    %v1827 = vrot.slane %v1824, 6
    %v1829 = vadd.f32 %v1768, %v1827
    %v1830 = vxor.u32 %v1829, 2147483648
    %v1831 = vmul.f32 %v1830, 1.442695
    %v1832 = vpow.pop %v1831
    %v1833 = vadd.f32 %v1832, 1.0
    %v1834 = vrcp.pop %v1833
    %v1835 = vmul.f32 %v1833, %v1834
    %v1836 = vsub.f32 1.0, %v1835
    %v1837 = vmul.f32 %v1834, %v1836
    %v1838 = vadd.f32 %v1834, %v1837
    %vm1839 = vweird.f32 %v1833
    %vm1840 = vweird.f32 %v1834
    %vm1841 = vmor %vm1839, %vm1840
    %v1842 = vsel %vm1841, %v1834, %v1838
    %v1843 = vand.u32 2147483647, %v1833
    %vm1844 = vcmp.eq.f32.partialorder %v1843, 8.507059e+37
    %v1845 = vand.u32 %v1833, 2147483648
    %v1846 = vor.u32 1.1754944e-38, %v1845
    %v1847 = vsel %vm1844, %v1846, %v1842
    %v1848 = vmul.f32 1.0, %v1847
    %v1849 = vtanh.pop %v1829
    %v1851 = vrot.slane %v1794, 6
    %1852 = vrot.lane.b32.xlu0 %v1851, 32
    %v1853 = vpop.permute.xlu0 %1852
    %v1855 = vmul.f32 %v1848, %v1853
    %1857 = vrot.lane.b32.xlu0 %v1849, 32
    %v1858 = vpop.permute.xlu0 %1857
    %v1860 = vmul.f32 %v1848, %v1858
    %1862 = vrot.lane.b32.xlu0 %v1860, 32
    %v1863 = vpop.permute.xlu0 %1862
    %v1865 = vadd.f32 %v1855, %v1863
    %v1866 = vtanh.pop %v1865
    %1868 = vrot.lane.b32.xlu0 %v1866, 32
    %v1869 = vpop.permute.xlu0 %1868
    %v1871 = vmul.f32 %v1848, %v1869
    %v1873 = vrot.slane %v1871, 2
    %1874 = vrot.lane.b32.xlu0 %v1873, 64
    %v1875 = vpop.permute.xlu0 %1874
    %v1876 = vsel %vm121, %v1875, 0
    %1878 = vmatpush.msra.mxu0 0.0
    %1879 = vmatpush.msra.mxu0 0.0
    %1880 = vmatpush.msra.mxu0 0.0
    %1881 = vmatpush.msra.mxu0 0.0
    %1882 = vmatpush.msra.mxu0 0.0
    %1883 = vmatpush.msra.mxu0 0.0
    %1884 = vmatpush.msra.mxu0 0.0
    %1885 = vmatpush.msra.mxu0 0.0
    %1886 = vmatpush.msra.mxu0 0.0
    %1887 = vmatpush.msra.mxu0 0.0
    %1888 = vmatpush.msra.mxu0 0.0
    %1889 = vmatpush.msra.mxu0 0.0
    %1890 = vmatpush.msra.mxu0 %v1739
    %1891 = vmatpush.msra.mxu0 %v1738
    %1892 = vmatpush.msra.mxu0 %v1737
    %1893 = vmatpush.msra.mxu0 %v1736
    %1894 = vmatmul.f32.gmra.mxu0 %v1876
    %v1895 = vpop.f32.mrf.mxu0
    %v1896 = vadd.f32 0.0, %v1895
    %1897 = vdwg.mxu0
    %v1899 = vrot.slane %v1896, 4
    %v1901 = vadd.f32 %v1768, %v1899
    %v1902 = vxor.u32 %v1901, 2147483648
    %v1903 = vmul.f32 %v1902, 1.442695
    %v1904 = vpow.pop %v1903
    %v1905 = vadd.f32 %v1904, 1.0
    %v1906 = vrcp.pop %v1905
    %v1907 = vmul.f32 %v1905, %v1906
    %v1908 = vsub.f32 1.0, %v1907
    %v1909 = vmul.f32 %v1906, %v1908
    %v1910 = vadd.f32 %v1906, %v1909
    %vm1911 = vweird.f32 %v1905
    %vm1912 = vweird.f32 %v1906
    %vm1913 = vmor %vm1911, %vm1912
    %v1914 = vsel %vm1913, %v1906, %v1910
    %v1915 = vand.u32 2147483647, %v1905
    %vm1916 = vcmp.eq.f32.partialorder %v1915, 8.507059e+37
    %v1917 = vand.u32 %v1905, 2147483648
    %v1918 = vor.u32 1.1754944e-38, %v1917
    %v1919 = vsel %vm1916, %v1918, %v1914
    %v1920 = vmul.f32 1.0, %v1919
    %v1921 = vtanh.pop %v1901
    %v1923 = vrot.slane %v1865, 6
    %v1925 = vmul.f32 %v1920, %v1923
    %1927 = vrot.lane.b32.xlu0 %v1921, 32
    %v1928 = vpop.permute.xlu0 %1927
    %v1930 = vmul.f32 %v1920, %v1928
    %1932 = vrot.lane.b32.xlu0 %v1930, 32
    %v1933 = vpop.permute.xlu0 %1932
    %v1935 = vadd.f32 %v1925, %v1933
    %v1936 = vtanh.pop %v1935
    %1938 = vrot.lane.b32.xlu0 %v1936, 32
    %v1939 = vpop.permute.xlu0 %1938
    %v1941 = vmul.f32 %v1920, %v1939
    %v1943 = vrot.slane %v1941, 4
    %1944 = vrot.lane.b32.xlu0 %v1943, 64
    %v1945 = vpop.permute.xlu0 %1944
    %v1946 = vsel %vm121, %v1945, 0
    %1948 = vmatpush.msra.mxu0 0.0
    %1949 = vmatpush.msra.mxu0 0.0
    %1950 = vmatpush.msra.mxu0 0.0
    %1951 = vmatpush.msra.mxu0 0.0
    %1952 = vmatpush.msra.mxu0 0.0
    %1953 = vmatpush.msra.mxu0 0.0
    %1954 = vmatpush.msra.mxu0 0.0
    %1955 = vmatpush.msra.mxu0 0.0
    %1956 = vmatpush.msra.mxu0 0.0
    %1957 = vmatpush.msra.mxu0 0.0
    %1958 = vmatpush.msra.mxu0 0.0
    %1959 = vmatpush.msra.mxu0 0.0
    %1960 = vmatpush.msra.mxu0 %v1739
    %1961 = vmatpush.msra.mxu0 %v1738
    %1962 = vmatpush.msra.mxu0 %v1737
    %1963 = vmatpush.msra.mxu0 %v1736
    %1964 = vmatmul.f32.gmra.mxu0 %v1946
    %v1965 = vpop.f32.mrf.mxu0
    %v1966 = vadd.f32 0.0, %v1965
    %1967 = vdwg.mxu0
    %v1969 = vrot.slane %v1966, 2
    %v1971 = vadd.f32 %v1768, %v1969
    %v1972 = vxor.u32 %v1971, 2147483648
    %v1973 = vmul.f32 %v1972, 1.442695
    %v1974 = vpow.pop %v1973
    %v1975 = vadd.f32 %v1974, 1.0
    %v1976 = vrcp.pop %v1975
    %v1977 = vmul.f32 %v1975, %v1976
    %v1978 = vsub.f32 1.0, %v1977
    %v1979 = vmul.f32 %v1976, %v1978
    %v1980 = vadd.f32 %v1976, %v1979
    %vm1981 = vweird.f32 %v1975
    %vm1982 = vweird.f32 %v1976
    %vm1983 = vmor %vm1981, %vm1982
    %v1984 = vsel %vm1983, %v1976, %v1980
    %v1985 = vand.u32 2147483647, %v1975
    %vm1986 = vcmp.eq.f32.partialorder %v1985, 8.507059e+37
    %v1987 = vand.u32 %v1975, 2147483648
    %v1988 = vor.u32 1.1754944e-38, %v1987
    %v1989 = vsel %vm1986, %v1988, %v1984
    %v1990 = vmul.f32 1.0, %v1989
    %v1991 = vtanh.pop %v1971
    %v1993 = vrot.slane %v1935, 6
    %v1995 = vmul.f32 %v1990, %v1993
    %1997 = vrot.lane.b32.xlu0 %v1991, 32
    %v1998 = vpop.permute.xlu0 %1997
    %v2000 = vmul.f32 %v1990, %v1998
    %2002 = vrot.lane.b32.xlu0 %v2000, 32
    %v2003 = vpop.permute.xlu0 %2002
    %v2005 = vadd.f32 %v1995, %v2003
    %v2006 = vtanh.pop %v2005
    %2008 = vrot.lane.b32.xlu0 %v2006, 32
    %v2009 = vpop.permute.xlu0 %2008
    %v2011 = vmul.f32 %v1990, %v2009
    %v2012 = vsel %vm330, %v1800, %v1871
    %v2013 = vsel %vm332, %v2012, %v1941
    %v2014 = vsel %vm334, %v2013, %v2011
    %s2015 = scalar_lea.vmem [#allocation5], 224
    %v2016 = vld [vmem:[%s2015] sm:$0xff]
    %v2017 = vld [vmem:[%s2015 + $0x8] sm:$0xff]
    %v2018 = vld [vmem:[%s2015 + $0x10] sm:$0xff]
    %v2019 = vld [vmem:[%s2015 + $0x18] sm:$0xff]
    %s2020 = scalar_lea.vmem [#allocation2], 192
    %v2021 = vld [vmem:[%s2020] sm:$0xff]
    %v2022 = vld [vmem:[%s2020 + $0x8] sm:$0xff]
    %v2023 = vld [vmem:[%s2020 + $0x10] sm:$0xff]
    %v2024 = vld [vmem:[%s2020 + $0x18] sm:$0xff]
    %2026 = vrot.lane.b32.xlu0 %v2014, 64
    %v2027 = vpop.permute.xlu0 %2026
    %v2028 = vsel %vm121, %v2027, 0
    %2030 = vmatpush.msra.mxu0 0.0
    %2031 = vmatpush.msra.mxu0 0.0
    %2032 = vmatpush.msra.mxu0 0.0
    %2033 = vmatpush.msra.mxu0 0.0
    %2034 = vmatpush.msra.mxu0 0.0
    %2035 = vmatpush.msra.mxu0 0.0
    %2036 = vmatpush.msra.mxu0 0.0
    %2037 = vmatpush.msra.mxu0 0.0
    %2038 = vmatpush.msra.mxu0 0.0
    %2039 = vmatpush.msra.mxu0 0.0
    %2040 = vmatpush.msra.mxu0 0.0
    %2041 = vmatpush.msra.mxu0 0.0
    %2042 = vmatpush.msra.mxu0 %v2024
    %2043 = vmatpush.msra.mxu0 %v2023
    %2044 = vmatpush.msra.mxu0 %v2022
    %2045 = vmatpush.msra.mxu0 %v2021
    %2046 = vmatmul.f32.gmra.mxu0 %v2028
    %v2047 = vpop.f32.mrf.mxu0
    %v2048 = vadd.f32 0.0, %v2047
    %2049 = vdwg.mxu0
    %v2050 = vxor.u32 %v2048, 2147483648
    %v2051 = vmul.f32 %v2050, 1.442695
    %v2052 = vpow.pop %v2051
    %v2053 = vadd.f32 %v2052, 1.0
    %v2054 = vrcp.pop %v2053
    %v2055 = vmul.f32 %v2053, %v2054
    %v2056 = vsub.f32 1.0, %v2055
    %v2057 = vmul.f32 %v2054, %v2056
    %v2058 = vadd.f32 %v2054, %v2057
    %vm2059 = vweird.f32 %v2053
    %vm2060 = vweird.f32 %v2054
    %vm2061 = vmor %vm2059, %vm2060
    %v2062 = vsel %vm2061, %v2054, %v2058
    %v2063 = vand.u32 2147483647, %v2053
    %vm2064 = vcmp.eq.f32.partialorder %v2063, 8.507059e+37
    %v2065 = vand.u32 %v2053, 2147483648
    %v2066 = vor.u32 1.1754944e-38, %v2065
    %v2067 = vsel %vm2064, %v2066, %v2062
    %v2068 = vmul.f32 1.0, %v2067
    %v2069 = vtanh.pop %v2048
    %2071 = vrot.lane.b32.xlu0 %v2069, 32
    %v2072 = vpop.permute.xlu0 %2071
    %v2074 = vmul.f32 %v2068, %v2072
    %v2075 = vtanh.pop %v2074
    %2077 = vrot.lane.b32.xlu0 %v2075, 64
    %v2078 = vpop.permute.xlu0 %2077
    %v2080 = vmul.f32 %v2068, %v2078
    %2082 = vrot.lane.b32.xlu0 %v2080, 64
    %v2083 = vpop.permute.xlu0 %2082
    %v2084 = vsel %vm121, %v2083, 0
    %2086 = vmatpush.msra.mxu0 0.0
    %2087 = vmatpush.msra.mxu0 0.0
    %2088 = vmatpush.msra.mxu0 0.0
    %2089 = vmatpush.msra.mxu0 0.0
    %2090 = vmatpush.msra.mxu0 0.0
    %2091 = vmatpush.msra.mxu0 0.0
    %2092 = vmatpush.msra.mxu0 0.0
    %2093 = vmatpush.msra.mxu0 0.0
    %2094 = vmatpush.msra.mxu0 0.0
    %2095 = vmatpush.msra.mxu0 0.0
    %2096 = vmatpush.msra.mxu0 0.0
    %2097 = vmatpush.msra.mxu0 0.0
    %2098 = vmatpush.msra.mxu0 %v2019
    %2099 = vmatpush.msra.mxu0 %v2018
    %2100 = vmatpush.msra.mxu0 %v2017
    %2101 = vmatpush.msra.mxu0 %v2016
    %2102 = vmatmul.f32.gmra.mxu0 %v2084
    %v2103 = vpop.f32.mrf.mxu0
    %v2104 = vadd.f32 0.0, %v2103
    %2105 = vdwg.mxu0
    %v2107 = vrot.slane %v2104, 6
    %v2109 = vadd.f32 %v2048, %v2107
    %v2110 = vxor.u32 %v2109, 2147483648
    %v2111 = vmul.f32 %v2110, 1.442695
    %v2112 = vpow.pop %v2111
    %v2113 = vadd.f32 %v2112, 1.0
    %v2114 = vrcp.pop %v2113
    %v2115 = vmul.f32 %v2113, %v2114
    %v2116 = vsub.f32 1.0, %v2115
    %v2117 = vmul.f32 %v2114, %v2116
    %v2118 = vadd.f32 %v2114, %v2117
    %vm2119 = vweird.f32 %v2113
    %vm2120 = vweird.f32 %v2114
    %vm2121 = vmor %vm2119, %vm2120
    %v2122 = vsel %vm2121, %v2114, %v2118
    %v2123 = vand.u32 2147483647, %v2113
    %vm2124 = vcmp.eq.f32.partialorder %v2123, 8.507059e+37
    %v2125 = vand.u32 %v2113, 2147483648
    %v2126 = vor.u32 1.1754944e-38, %v2125
    %v2127 = vsel %vm2124, %v2126, %v2122
    %v2128 = vmul.f32 1.0, %v2127
    %v2129 = vtanh.pop %v2109
    %v2131 = vrot.slane %v2074, 6
    %2132 = vrot.lane.b32.xlu0 %v2131, 32
    %v2133 = vpop.permute.xlu0 %2132
    %v2135 = vmul.f32 %v2128, %v2133
    %2137 = vrot.lane.b32.xlu0 %v2129, 32
    %v2138 = vpop.permute.xlu0 %2137
    %v2140 = vmul.f32 %v2128, %v2138
    %2142 = vrot.lane.b32.xlu0 %v2140, 32
    %v2143 = vpop.permute.xlu0 %2142
    %v2145 = vadd.f32 %v2135, %v2143
    %v2146 = vtanh.pop %v2145
    %2148 = vrot.lane.b32.xlu0 %v2146, 32
    %v2149 = vpop.permute.xlu0 %2148
    %v2151 = vmul.f32 %v2128, %v2149
    %v2153 = vrot.slane %v2151, 2
    %2154 = vrot.lane.b32.xlu0 %v2153, 64
    %v2155 = vpop.permute.xlu0 %2154
    %v2156 = vsel %vm121, %v2155, 0
    %2158 = vmatpush.msra.mxu0 0.0
    %2159 = vmatpush.msra.mxu0 0.0
    %2160 = vmatpush.msra.mxu0 0.0
    %2161 = vmatpush.msra.mxu0 0.0
    %2162 = vmatpush.msra.mxu0 0.0
    %2163 = vmatpush.msra.mxu0 0.0
    %2164 = vmatpush.msra.mxu0 0.0
    %2165 = vmatpush.msra.mxu0 0.0
    %2166 = vmatpush.msra.mxu0 0.0
    %2167 = vmatpush.msra.mxu0 0.0
    %2168 = vmatpush.msra.mxu0 0.0
    %2169 = vmatpush.msra.mxu0 0.0
    %2170 = vmatpush.msra.mxu0 %v2019
    %2171 = vmatpush.msra.mxu0 %v2018
    %2172 = vmatpush.msra.mxu0 %v2017
    %2173 = vmatpush.msra.mxu0 %v2016
    %2174 = vmatmul.f32.gmra.mxu0 %v2156
    %v2175 = vpop.f32.mrf.mxu0
    %v2176 = vadd.f32 0.0, %v2175
    %2177 = vdwg.mxu0
    %v2179 = vrot.slane %v2176, 4
    %v2181 = vadd.f32 %v2048, %v2179
    %v2182 = vxor.u32 %v2181, 2147483648
    %v2183 = vmul.f32 %v2182, 1.442695
    %v2184 = vpow.pop %v2183
    %v2185 = vadd.f32 %v2184, 1.0
    %v2186 = vrcp.pop %v2185
    %v2187 = vmul.f32 %v2185, %v2186
    %v2188 = vsub.f32 1.0, %v2187
    %v2189 = vmul.f32 %v2186, %v2188
    %v2190 = vadd.f32 %v2186, %v2189
    %vm2191 = vweird.f32 %v2185
    %vm2192 = vweird.f32 %v2186
    %vm2193 = vmor %vm2191, %vm2192
    %v2194 = vsel %vm2193, %v2186, %v2190
    %v2195 = vand.u32 2147483647, %v2185
    %vm2196 = vcmp.eq.f32.partialorder %v2195, 8.507059e+37
    %v2197 = vand.u32 %v2185, 2147483648
    %v2198 = vor.u32 1.1754944e-38, %v2197
    %v2199 = vsel %vm2196, %v2198, %v2194
    %v2200 = vmul.f32 1.0, %v2199
    %v2201 = vtanh.pop %v2181
    %v2203 = vrot.slane %v2145, 6
    %v2205 = vmul.f32 %v2200, %v2203
    %2207 = vrot.lane.b32.xlu0 %v2201, 32
    %v2208 = vpop.permute.xlu0 %2207
    %v2210 = vmul.f32 %v2200, %v2208
    %2212 = vrot.lane.b32.xlu0 %v2210, 32
    %v2213 = vpop.permute.xlu0 %2212
    %v2215 = vadd.f32 %v2205, %v2213
    %v2216 = vtanh.pop %v2215
    %2218 = vrot.lane.b32.xlu0 %v2216, 32
    %v2219 = vpop.permute.xlu0 %2218
    %v2221 = vmul.f32 %v2200, %v2219
    %v2223 = vrot.slane %v2221, 4
    %2224 = vrot.lane.b32.xlu0 %v2223, 64
    %v2225 = vpop.permute.xlu0 %2224
    %v2226 = vsel %vm121, %v2225, 0
    %2228 = vmatpush.msra.mxu0 0.0
    %2229 = vmatpush.msra.mxu0 0.0
    %2230 = vmatpush.msra.mxu0 0.0
    %2231 = vmatpush.msra.mxu0 0.0
    %2232 = vmatpush.msra.mxu0 0.0
    %2233 = vmatpush.msra.mxu0 0.0
    %2234 = vmatpush.msra.mxu0 0.0
    %2235 = vmatpush.msra.mxu0 0.0
    %2236 = vmatpush.msra.mxu0 0.0
    %2237 = vmatpush.msra.mxu0 0.0
    %2238 = vmatpush.msra.mxu0 0.0
    %2239 = vmatpush.msra.mxu0 0.0
    %2240 = vmatpush.msra.mxu0 %v2019
    %2241 = vmatpush.msra.mxu0 %v2018
    %2242 = vmatpush.msra.mxu0 %v2017
    %2243 = vmatpush.msra.mxu0 %v2016
    %2244 = vmatmul.f32.gmra.mxu0 %v2226
    %v2245 = vpop.f32.mrf.mxu0
    %v2246 = vadd.f32 0.0, %v2245
    %2247 = vdwg.mxu0
    %v2249 = vrot.slane %v2246, 2
    %v2251 = vadd.f32 %v2048, %v2249
    %v2252 = vxor.u32 %v2251, 2147483648
    %v2253 = vmul.f32 %v2252, 1.442695
    %v2254 = vpow.pop %v2253
    %v2255 = vadd.f32 %v2254, 1.0
    %v2256 = vrcp.pop %v2255
    %v2257 = vmul.f32 %v2255, %v2256
    %v2258 = vsub.f32 1.0, %v2257
    %v2259 = vmul.f32 %v2256, %v2258
    %v2260 = vadd.f32 %v2256, %v2259
    %vm2261 = vweird.f32 %v2255
    %vm2262 = vweird.f32 %v2256
    %vm2263 = vmor %vm2261, %vm2262
    %v2264 = vsel %vm2263, %v2256, %v2260
    %v2265 = vand.u32 2147483647, %v2255
    %vm2266 = vcmp.eq.f32.partialorder %v2265, 8.507059e+37
    %v2267 = vand.u32 %v2255, 2147483648
    %v2268 = vor.u32 1.1754944e-38, %v2267
    %v2269 = vsel %vm2266, %v2268, %v2264
    %v2270 = vmul.f32 1.0, %v2269
    %v2271 = vtanh.pop %v2251
    %v2273 = vrot.slane %v2215, 6
    %v2275 = vmul.f32 %v2270, %v2273
    %2277 = vrot.lane.b32.xlu0 %v2271, 32
    %v2278 = vpop.permute.xlu0 %2277
    %v2280 = vmul.f32 %v2270, %v2278
    %2282 = vrot.lane.b32.xlu0 %v2280, 32
    %v2283 = vpop.permute.xlu0 %2282
    %v2285 = vadd.f32 %v2275, %v2283
    %v2286 = vtanh.pop %v2285
    %2288 = vrot.lane.b32.xlu0 %v2286, 32
    %v2289 = vpop.permute.xlu0 %2288
    %v2291 = vmul.f32 %v2270, %v2289
    %v2293 = vrot.slane %v329, 6
    %v2296 = vrot.slane %v611, 4
    %v2299 = vrot.slane %v891, 2
    %v2302 = vrot.slane %v1451, 6
    %v2305 = vrot.slane %v1731, 4
    %v2308 = vrot.slane %v2011, 2
    %v2310 = vsel %vm330, %v2293, %v2296
    %v2311 = vsel %vm332, %v2310, %v2299
    %v2312 = vsel %vm334, %v2311, %v1171
    %v2313 = vsel %vm330, %v2302, %v2305
    %v2314 = vsel %vm332, %v2313, %v2308
    %v2315 = vsel %vm334, %v2314, %v2291
    %2318 = vrot.lane.b32.xlu0 %v2312, 64
    %v2319 = vpop.permute.xlu0 %2318
    %2320 = vrot.lane.b32.xlu0 %v2315, 64
    %v2321 = vpop.permute.xlu0 %2320
    %v2324 = vsel %vm121, %v2319, 0.0
    %v2325 = vsel %vm121, %v2321, 0.0
    %v2326 = vadd.f32 %v2324, %v2325
    %2327 = vadd.xlane.f32.xlu0 %v2326
    %v2328 = vpop.xlane.xlu0 %2327
    %v2329 = vrot.slane %v2328, 4
    %v2330 = vadd.f32 %v2328, %v2329
    %v2331 = vrot.slane %v2330, 2
    %v2332 = vadd.f32 %v2330, %v2331
    %v2333 = vrot.slane %v2332, 1
    %v2334 = vadd.f32 %v2332, %v2333
    %s2335 = vtos %v2334
    %v2336 = vrcp.pop 512.0
    %v2337 = vmul.f32 512.0, %v2336
    %v2338 = vsub.f32 1.0, %v2337
    %v2339 = vmul.f32 %v2336, %v2338
    %v2340 = vadd.f32 %v2336, %v2339
    %vm2341 = vweird.f32 %v2336
    %v2342 = vsel %vm2341, %v2336, %v2340
    %s2343 = vtos %v2342
    %s2344 = smul.f32 %s2335, %s2343
    %v2345 = vstv %s2344
    %v2346 = vsub.f32 %v2312, %v2345
    %v2347 = vsub.f32 %v2315, %v2345
    %v2348 = vmul.f32 %v2346, %v2346
    %v2349 = vmul.f32 %v2347, %v2347
    %2352 = vrot.lane.b32.xlu0 %v2348, 64
    %v2353 = vpop.permute.xlu0 %2352
    %2354 = vrot.lane.b32.xlu0 %v2349, 64
    %v2355 = vpop.permute.xlu0 %2354
    %v2358 = vsel %vm121, %v2353, 0.0
    %v2359 = vsel %vm121, %v2355, 0.0
    %v2360 = vadd.f32 %v2358, %v2359
    %2361 = vadd.xlane.f32.xlu0 %v2360
    %v2362 = vpop.xlane.xlu0 %2361
    %v2363 = vrot.slane %v2362, 4
    %v2364 = vadd.f32 %v2362, %v2363
    %v2365 = vrot.slane %v2364, 2
    %v2366 = vadd.f32 %v2364, %v2365
    %v2367 = vrot.slane %v2366, 1
    %v2368 = vadd.f32 %v2366, %v2367
    %s2369 = vtos %v2368
    %v2370 = vrcp.pop 511.0
    %v2371 = vmul.f32 511.0, %v2370
    %v2372 = vsub.f32 1.0, %v2371
    %v2373 = vmul.f32 %v2370, %v2372
    %v2374 = vadd.f32 %v2370, %v2373
    %vm2375 = vweird.f32 %v2370
    %v2376 = vsel %vm2375, %v2370, %v2374
    %s2377 = vtos %v2376
    %s2378 = smul.f32 %s2369, %s2377
    %v2379 = vstv %s2378
    %v2380 = vrsqrt.pop %v2379
    %v2381 = vmul.f32 %v2380, %v2379
    %v2382 = vmul.f32 %v2381, %v2380
    %v2383 = vmul.f32 0.5, %v2382
    %v2384 = vsub.f32 1.5, %v2383
    %v2385 = vmul.f32 %v2380, %v2384
    %vm2386 = vweird.f32 %v2379
    %vm2387 = vweird.f32 %v2380
    %vm2388 = vmor %vm2386, %vm2387
    %v2389 = vsel %vm2388, %v2380, %v2385
    %s2390 = vtos %v2389
    %v2391 = vsub.f32 %v2291, %v2345
    %v2392 = vstv %s2390
    %v2393 = vmul.f32 %v2391, %v2392
    %v2394 = vld [vmem:[%s4] sm:$0xff]
    %v2395 = vld [vmem:[%s4 + $0x8] sm:$0xff]
    %v2396 = vld [vmem:[%s4 + $0x10] sm:$0xff]
    %v2397 = vld [vmem:[%s4 + $0x18] sm:$0xff]
    %v2399 = vrot.slane %v2393, 6
    %2400 = vrot.lane.b32.xlu0 %v2399, 64
    %v2401 = vpop.permute.xlu0 %2400
    %v2402 = vsel %vm121, %v2401, 0
    %2404 = vmatpush.msra.mxu0 0.0
    %2405 = vmatpush.msra.mxu0 0.0
    %2406 = vmatpush.msra.mxu0 0.0
    %2407 = vmatpush.msra.mxu0 0.0
    %2408 = vmatpush.msra.mxu0 0.0
    %2409 = vmatpush.msra.mxu0 0.0
    %2410 = vmatpush.msra.mxu0 0.0
    %2411 = vmatpush.msra.mxu0 0.0
    %2412 = vmatpush.msra.mxu0 0.0
    %2413 = vmatpush.msra.mxu0 0.0
    %2414 = vmatpush.msra.mxu0 0.0
    %2415 = vmatpush.msra.mxu0 0.0
    %2416 = vmatpush.msra.mxu0 %v2397
    %2417 = vmatpush.msra.mxu0 %v2396
    %2418 = vmatpush.msra.mxu0 %v2395
    %2419 = vmatpush.msra.mxu0 %v2394
    %2420 = vmatmul.f32.gmra.mxu0 %v2402
    %v2421 = vpop.f32.mrf.mxu0
    %v2422 = vadd.f32 0.0, %v2421
    %2423 = vdwg.mxu0
    %v2424 = vxor.u32 %v2422, 2147483648
    %v2425 = vmul.f32 %v2424, 1.442695
    %v2426 = vpow.pop %v2425
    %v2427 = vadd.f32 %v2426, 1.0
    %v2428 = vrcp.pop %v2427
    %v2429 = vmul.f32 %v2427, %v2428
    %v2430 = vsub.f32 1.0, %v2429
    %v2431 = vmul.f32 %v2428, %v2430
    %v2432 = vadd.f32 %v2428, %v2431
    %vm2433 = vweird.f32 %v2427
    %vm2434 = vweird.f32 %v2428
    %vm2435 = vmor %vm2433, %vm2434
    %v2436 = vsel %vm2435, %v2428, %v2432
    %v2437 = vand.u32 2147483647, %v2427
    %vm2438 = vcmp.eq.f32.partialorder %v2437, 8.507059e+37
    %v2439 = vand.u32 %v2427, 2147483648
    %v2440 = vor.u32 1.1754944e-38, %v2439
    %v2441 = vsel %vm2438, %v2440, %v2436
    %v2442 = vmul.f32 1.0, %v2441
    %v2443 = vmul.f32 %v2422, %v2442
    %v2444 = vld [vmem:[%s5] sm:$0xff]
    %v2445 = vld [vmem:[%s5 + $0x8] sm:$0xff]
    %v2446 = vld [vmem:[%s5 + $0x10] sm:$0xff]
    %v2447 = vld [vmem:[%s5 + $0x18] sm:$0xff]
    %v2448 = vld [vmem:[%s5 + $0x20] sm:$0xff]
    %v2449 = vld [vmem:[%s5 + $0x28] sm:$0xff]
    %v2450 = vld [vmem:[%s5 + $0x30] sm:$0xff]
    %v2451 = vld [vmem:[%s5 + $0x38] sm:$0xff]
    %vm2452 = vcmask 523264
    %v2454 = vsel %vm2452, %v2443, 0
    %2456 = vmatpush.msra.mxu0 0.0
    %2457 = vmatpush.msra.mxu0 0.0
    %2458 = vmatpush.msra.mxu0 0.0
    %2459 = vmatpush.msra.mxu0 0.0
    %2460 = vmatpush.msra.mxu0 0.0
    %2461 = vmatpush.msra.mxu0 0.0
    %2462 = vmatpush.msra.mxu0 0.0
    %2463 = vmatpush.msra.mxu0 0.0
    %2464 = vmatpush.msra.mxu0 %v2451
    %2465 = vmatpush.msra.mxu0 %v2450
    %2466 = vmatpush.msra.mxu0 %v2449
    %2467 = vmatpush.msra.mxu0 %v2448
    %2468 = vmatpush.msra.mxu0 %v2447
    %2469 = vmatpush.msra.mxu0 %v2446
    %2470 = vmatpush.msra.mxu0 %v2445
    %2471 = vmatpush.msra.mxu0 %v2444
    %2472 = vmatmul.f32.gmra.mxu0 %v2454
    %v2473 = vpop.f32.mrf.mxu0
    %v2474 = vadd.f32 0.0, %v2473
    %2475 = vdwg.mxu0
    %vm2476 = vcmask 123904
    %2477 = vst.msk [vmem:[#allocation7] sm:$0x3] %vm2476, %v2474
    // Predicated region
    $region34: #{tpu_custom_call.1} parent=1 // pred_check
      _
    $region35: #{tpu_custom_call.1} parent=1 // pred_check_branch
      %2479 = sbr.rel (0) target = $region37
    $region36: #{tpu_custom_call.1} parent=1 // pred_region
      %2481 = vsyncadd [#allocation4], 0
      %s2483 = sshll.u32 [#allocation7], 4
      %s2484 = int_to_ptr.vmem [resolvable:$true] %s2483
      %s2485 = sshll.u32 %s6, 4
      %s2486 = int_to_ptr.hbm [resolvable:$true] %s2485
      %2488 = dma.vmem_to_hbm [thread:$0]  %s2484, 32, %s2486, [#allocation4]
    $region37: #{tpu_custom_call.1} parent=1 // pred_fallthru
      _
    // Predicated region
    $region38: #{tpu_custom_call.1} parent=1 // pred_check
      _
    $region39: #{tpu_custom_call.1} parent=1 // pred_check_branch
      %2490 = sbr.rel (0) target = $region41
    $region40: #{tpu_custom_call.1} parent=1 // pred_region
      %2492 = dma.done [#allocation4], 32
    $region41: #{tpu_custom_call.1} parent=1 // pred_fallthru
      _
    %2493 = vsyncpa [#allocation3], 1
    %2494 = vsyncpa [#allocation6], 1
    %2495 = vsyncpa [#allocation4], 1

</llo_original>
